<compile_context>
chip_gen: v6e
topology: v6e:2x2x1
jax: 0.10.0
libtpu: 0.0.40
codegen_flags: <defaults>
</compile_context>

<pallas_src>
import numpy as np
import jax
import jax.numpy as jnp
from jax import lax
from jax.experimental import pallas as pl
from jax.experimental.pallas import tpu as pltpu


_TB = 8  # images per grid step; multiple of 8 so all row math is sublane-aligned


# ----------------------------- fused Pallas kernel --------------------------

def _lenet_fused_kernel(x_ref, b1m_ref, b1b_ref, b2m_ref, b2b_ref,
                        w1d_ref, b1d_ref, w2d_ref, b2d_ref, w3d_ref, b3d_ref,
                        out_ref):
    f32 = jnp.float32
    TB = out_ref.shape[0]                       # batch tile (multiple of 8)
    x2 = x_ref[0]                               # (28*TB, 28), row = r*TB + t

    # ---- conv1 (1->5, 5x5, valid) + bias + ReLU -----------------------------
    # Per-kh banded block column layout (128 lanes):
    #   col      co*12 + wp -> output column ow = 2*wp      (even half)
    #   col 64 + co*12 + wp -> output column ow = 2*wp + 1  (odd  half)
    acc1 = jnp.dot(x2[0:24 * TB, :], b1m_ref[0], preferred_element_type=f32)
    for kh in range(1, 5):
        acc1 = acc1 + jnp.dot(x2[kh * TB: kh * TB + 24 * TB, :],
                              b1m_ref[kh], preferred_element_type=f32)
    acc1 = jnp.maximum(acc1 + b1b_ref[...], 0.0)            # (24*TB, 128)
    # acc1[oh*TB + t, half*64 + co*12 + wp] = relu(conv1)[t, co, oh, 2*wp+half]

    # ---- pool1: vertical row-pair max, then even/odd half-lane max ----------
    a3 = acc1.reshape(12, 2 * TB, 128)
    v1 = jnp.maximum(a3[:, 0:TB, :], a3[:, TB:2 * TB, :]).reshape(12 * TB, 128)
    h1 = jnp.maximum(v1[:, 0:64], v1[:, 64:128])            # (12*TB, 64)
    # h1[r*TB + t, ci*12 + w] = pool1[t, ci, r, w]

    # ---- conv2 (5->10, 5x5, valid) + bias + ReLU ----------------------------
    acc2 = jnp.dot(h1[0:8 * TB, :], b2m_ref[0], preferred_element_type=f32)
    for kh in range(1, 5):
        acc2 = acc2 + jnp.dot(h1[kh * TB: kh * TB + 8 * TB, :],
                              b2m_ref[kh], preferred_element_type=f32)
    acc2 = jnp.maximum(acc2 + b2b_ref[...], 0.0)            # (8*TB, 128)
    # acc2[oh*TB + t, half*64 + co*4 + wp] = relu(conv2)[t, co, oh, 2*wp+half]

    # ---- pool2 --------------------------------------------------------------
    a3 = acc2.reshape(4, 2 * TB, 128)
    v2 = jnp.maximum(a3[:, 0:TB, :], a3[:, TB:2 * TB, :]).reshape(4 * TB, 128)
    h2 = jnp.maximum(v2[:, 0:64], v2[:, 64:128])            # (4*TB, 64)
    # h2[h*TB + t, co*4 + w] = pool2[t, co, h, w]

    # ---- dense1 -> relu -> dense2 -> relu -> dense3 -------------------------
    y = b1d_ref[...] + jnp.dot(h2[0:TB, :], w1d_ref[0],
                               preferred_element_type=f32)
    for h in range(1, 4):
        y = y + jnp.dot(h2[h * TB:(h + 1) * TB, :], w1d_ref[h],
                        preferred_element_type=f32)
    y = jnp.maximum(y, 0.0)                                 # (TB, 64)
    y = jnp.maximum(jnp.dot(y, w2d_ref[...], preferred_element_type=f32)
                    + b2d_ref[...], 0.0)                    # (TB, 32)
    y = jnp.dot(y, w3d_ref[...], preferred_element_type=f32) + b3d_ref[...]
    out_ref[...] = y                                        # (TB, 10)


# --------------------- one-time weight / constant preparation ---------------

def _banded_kh_matrices(w, in_width, n_rows, in_col_of):
    """Conv weight (co, ci, kh, kw) -> per-kh banded matrices (kh, n_rows, 128).

    With the input laid out as X[row, in_col_of(ci, j)] = input[ci, row, j],
      (X @ B[kh])[row, half*64 + co*wp_n + wp]
         = sum_{ci,kw} input[ci, row, (2*wp+half) + kw] * w[co, ci, kh, kw]
    i.e. even output columns land in lanes [0,64), odd ones in [64,128),
    so 2x1 horizontal max-pool is a single half-lane max.  Exact construction
    (scatter of weights, no matmul), unused lanes/rows are zero.
    """
    w = np.asarray(w, np.float32)
    co_n, ci_n, kh_n, kw_n = w.shape
    wout = in_width - kw_n + 1
    assert wout % 2 == 0
    wp_n = wout // 2
    assert co_n * wp_n <= 64
    mats = np.zeros((kh_n, n_rows, 128), np.float32)
    for kh in range(kh_n):
        for half in range(2):
            for co in range(co_n):
                for wp in range(wp_n):
                    ow = 2 * wp + half
                    col = half * 64 + co * wp_n + wp
                    for ci in range(ci_n):
                        for kw in range(kw_n):
                            mats[kh, in_col_of(ci, ow + kw), col] = w[co, ci, kh, kw]
    return jnp.asarray(mats)


def _bias_row128(b, wp_n):
    b = np.asarray(b, np.float32)
    row = np.zeros((1, 128), np.float32)
    for half in range(2):
        for co in range(b.shape[0]):
            row[0, half * 64 + co * wp_n: half * 64 + (co + 1) * wp_n] = b[co]
    return jnp.asarray(row)


def _dense1_regroup(w1, C=10, H=4, W=4, out_dim=64):
    """dense1 weight (C*H*W, out) -> (H, 64, out) matching h2's (co*4+w) lanes."""
    w1 = np.asarray(w1, np.float32)
    out = np.zeros((H, 64, out_dim), np.float32)
    for c in range(C):
        for h in range(H):
            for w_ in range(W):
                out[h, c * W + w_, :] = w1[c * H * W + h * W + w_, :]
    return jnp.asarray(out)


def prepare_params(params):
    """Hoisted, one-time preprocessing of all weights/constants."""
    return {
        "b1m": _banded_kh_matrices(params["conv1_w"], in_width=28, n_rows=28,
                                   in_col_of=lambda ci, j: j),       # (5, 28, 128)
        "b1b": _bias_row128(params["conv1_b"], 12),                   # (1, 128)
        "b2m": _banded_kh_matrices(params["conv2_w"], in_width=12, n_rows=64,
                                   in_col_of=lambda ci, j: ci * 12 + j),  # (5, 64, 128)
        "b2b": _bias_row128(params["conv2_b"], 4),                    # (1, 128)
        "w1d": _dense1_regroup(params["dense1_w"]),                   # (4, 64, 64)
        "b1d": jnp.asarray(params["dense1_b"], jnp.float32).reshape(1, 64),
        "w2d": jnp.asarray(params["dense2_w"], jnp.float32),          # (64, 32)
        "b2d": jnp.asarray(params["dense2_b"], jnp.float32).reshape(1, 32),
        "w3d": jnp.asarray(params["dense3_w"], jnp.float32),          # (32, 10)
        "b3d": jnp.asarray(params["dense3_b"], jnp.float32).reshape(1, 10),
    }


# ------------------------------- forward ------------------------------------

_CONST_KEYS = ("b1m", "b1b", "b2m", "b2b",
               "w1d", "b1d", "w2d", "b2d", "w3d", "b3d")


def _const_spec(arr):
    n = arr.ndim
    return pl.BlockSpec(arr.shape, lambda b, _n=n: (0,) * _n)


@jax.jit
def forward(x, prepped):
    B = x.shape[0]
    TB = _TB
    Bp = ((B + TB - 1) // TB) * TB
    x3 = x.reshape(B, 28, 28)
    if Bp != B:
        x3 = jnp.pad(x3, ((0, Bp - B), (0, 0), (0, 0)))
    # Batch-interleaved rows: x_in[g, r*TB + t, j] = x[g*TB + t, r, j]
    x_in = (x3.reshape(Bp // TB, TB, 28, 28)
              .transpose(0, 2, 1, 3)
              .reshape(Bp // TB, 28 * TB, 28))
    consts = tuple(prepped[k] for k in _CONST_KEYS)

    out = pl.pallas_call(
        _lenet_fused_kernel,
        out_shape=jax.ShapeDtypeStruct((Bp, 10), jnp.float32),
        grid=(Bp // TB,),
        in_specs=[pl.BlockSpec((1, 28 * TB, 28), lambda b: (b, 0, 0))]
                 + [_const_spec(a) for a in consts],
        out_specs=pl.BlockSpec((TB, 10), lambda b: (b, 0)),
        compiler_params=pltpu.CompilerParams(
            dimension_semantics=("parallel",)),
    )(x_in, *consts)
    return out[:B]


# ------------------------------ params / reference --------------------------

def init_params(key):
    ks = jax.random.split(key, 10)
    scale = 0.1
    return {
        # PyTorch OIHW conv weights
        "conv1_w": scale * jax.random.normal(ks[0], (5, 1, 5, 5), jnp.float32),
        "conv1_b": scale * jax.random.normal(ks[1], (5,), jnp.float32),
        "conv2_w": scale * jax.random.normal(ks[2], (10, 5, 5, 5), jnp.float32),
        "conv2_b": scale * jax.random.normal(ks[3], (10,), jnp.float32),
        # dense weights stored as (in, out)
        "dense1_w": scale * jax.random.normal(ks[4], (160, 64), jnp.float32),
        "dense1_b": scale * jax.random.normal(ks[5], (64,), jnp.float32),
        "dense2_w": scale * jax.random.normal(ks[6], (64, 32), jnp.float32),
        "dense2_b": scale * jax.random.normal(ks[7], (32,), jnp.float32),
        "dense3_w": scale * jax.random.normal(ks[8], (32, 10), jnp.float32),
        "dense3_b": scale * jax.random.normal(ks[9], (10,), jnp.float32),
    }


def reference_forward(x, params):
    """Pure-JAX reference mirroring the PyTorch module (for verification)."""
    def conv(x, w, b):
        y = lax.conv_general_dilated(x, w, window_strides=(1, 1),
                                     padding="VALID",
                                     dimension_numbers=("NCHW", "OIHW", "NCHW"))
        return y + b.reshape(1, -1, 1, 1)

    def pool(x):
        return lax.reduce_window(x, -jnp.inf, lax.max,
                                 (1, 1, 2, 2), (1, 1, 2, 2), "VALID")

    h = pool(jax.nn.relu(conv(x, params["conv1_w"], params["conv1_b"])))
    h = pool(jax.nn.relu(conv(h, params["conv2_w"], params["conv2_b"])))
    h = h.reshape(h.shape[0], -1)
    h = jax.nn.relu(h @ params["dense1_w"] + params["dense1_b"])
    h = jax.nn.relu(h @ params["dense2_w"] + params["dense2_b"])
    return h @ params["dense3_w"] + params["dense3_b"]


if __name__ == "__main__":
    key = jax.random.PRNGKey(0)
    kx, kp = jax.random.split(key)
    B = 16                                   # 2 batch tiles -> grid of 2 steps
    x = jax.random.normal(kx, (B, 1, 28, 28), jnp.float32)   # MNIST-like input
    params = init_params(kp)
    prepped = prepare_params(params)         # one-time weight prep (off hot path)

    out = jax.block_until_ready(forward(x, prepped))
    assert out.shape == (B, 10), out.shape

    ref = reference_forward(x, params)
    err = float(jnp.max(jnp.abs(out - ref)))
    assert jnp.allclose(out, ref, rtol=1e-3, atol=1e-3), err

    print("KERNEL_OK")
</pallas_src>

<mosaic_0001>
module attributes {stable_mosaic.version = 11 : i64} {
  func.func @_lenet_fused_kernel(%arg0: i32, %arg1: memref<1x224x28xf32, #tpu.memory_space<vmem>>, %arg2: memref<5x28x128xf32, #tpu.memory_space<vmem>>, %arg3: memref<1x128xf32, #tpu.memory_space<vmem>>, %arg4: memref<5x64x128xf32, #tpu.memory_space<vmem>>, %arg5: memref<1x128xf32, #tpu.memory_space<vmem>>, %arg6: memref<4x64x64xf32, #tpu.memory_space<vmem>>, %arg7: memref<1x64xf32, #tpu.memory_space<vmem>>, %arg8: memref<64x32xf32, #tpu.memory_space<vmem>>, %arg9: memref<1x32xf32, #tpu.memory_space<vmem>>, %arg10: memref<32x10xf32, #tpu.memory_space<vmem>>, %arg11: memref<1x10xf32, #tpu.memory_space<vmem>>, %arg12: memref<8x10xf32, #tpu.memory_space<vmem>>) attributes {dimension_semantics = [#tpu.dimension_semantics<parallel>], iteration_bounds = array<i64: 2>, scalar_prefetch = 0 : i64, scratch_operands = 0 : i64, tpu.core_type = #tpu.core_type<tc>, window_params = [{transform_indices = @transform_0, window_bounds = array<i64: 1, 224, 28>}, {pipeline_mode = #tpu.pipeline_mode<synchronous>, transform_indices = @transform_1, window_bounds = array<i64: 5, 28, 128>}, {pipeline_mode = #tpu.pipeline_mode<synchronous>, transform_indices = @transform_2, window_bounds = array<i64: 1, 128>}, {pipeline_mode = #tpu.pipeline_mode<synchronous>, transform_indices = @transform_3, window_bounds = array<i64: 5, 64, 128>}, {pipeline_mode = #tpu.pipeline_mode<synchronous>, transform_indices = @transform_4, window_bounds = array<i64: 1, 128>}, {pipeline_mode = #tpu.pipeline_mode<synchronous>, transform_indices = @transform_5, window_bounds = array<i64: 4, 64, 64>}, {pipeline_mode = #tpu.pipeline_mode<synchronous>, transform_indices = @transform_6, window_bounds = array<i64: 1, 64>}, {pipeline_mode = #tpu.pipeline_mode<synchronous>, transform_indices = @transform_7, window_bounds = array<i64: 64, 32>}, {pipeline_mode = #tpu.pipeline_mode<synchronous>, transform_indices = @transform_8, window_bounds = array<i64: 1, 32>}, {pipeline_mode = #tpu.pipeline_mode<synchronous>, transform_indices = @transform_9, window_bounds = array<i64: 32, 10>}, {pipeline_mode = #tpu.pipeline_mode<synchronous>, transform_indices = @transform_10, window_bounds = array<i64: 1, 10>}, {transform_indices = @transform_11, window_bounds = array<i64: 8, 10>}]} {
    %c0 = arith.constant 0 : index
    %c0_0 = arith.constant 0 : index
    %c0_1 = arith.constant 0 : index
    %0 = vector.load %arg1[%c0, %c0_0, %c0_1] : memref<1x224x28xf32, #tpu.memory_space<vmem>>, vector<1x224x28xf32>
    %1 = vector.shape_cast %0 : vector<1x224x28xf32> to vector<224x28xf32>
    %2 = vector.extract_strided_slice %1 {offsets = [0, 0], sizes = [192, 28], strides = [1, 1]} : vector<224x28xf32> to vector<192x28xf32>
    %c0_2 = arith.constant 0 : index
    %c0_3 = arith.constant 0 : index
    %c0_4 = arith.constant 0 : index
    %3 = vector.load %arg2[%c0_2, %c0_3, %c0_4] : memref<5x28x128xf32, #tpu.memory_space<vmem>>, vector<1x28x128xf32>
    %4 = vector.shape_cast %3 : vector<1x28x128xf32> to vector<28x128xf32>
    %cst = arith.constant dense<0.000000e+00> : vector<192x128xf32>
    %5 = tpu.matmul %2, %4, %cst {dimension_numbers = #tpu.dot_dimension_numbers<[1], [0], [0], [1], [0, 0, 1, 1], [], []>} : vector<192x28xf32>, vector<28x128xf32>, vector<192x128xf32> -> vector<192x128xf32>
    %6 = vector.extract_strided_slice %1 {offsets = [8, 0], sizes = [192, 28], strides = [1, 1]} : vector<224x28xf32> to vector<192x28xf32>
    %c1 = arith.constant 1 : index
    %c0_5 = arith.constant 0 : index
    %c0_6 = arith.constant 0 : index
    %7 = vector.load %arg2[%c1, %c0_5, %c0_6] : memref<5x28x128xf32, #tpu.memory_space<vmem>>, vector<1x28x128xf32>
    %8 = vector.shape_cast %7 : vector<1x28x128xf32> to vector<28x128xf32>
    %cst_7 = arith.constant dense<0.000000e+00> : vector<192x128xf32>
    %9 = tpu.matmul %6, %8, %cst_7 {dimension_numbers = #tpu.dot_dimension_numbers<[1], [0], [0], [1], [0, 0, 1, 1], [], []>} : vector<192x28xf32>, vector<28x128xf32>, vector<192x128xf32> -> vector<192x128xf32>
    %10 = arith.addf %5, %9 : vector<192x128xf32>
    %11 = vector.extract_strided_slice %1 {offsets = [16, 0], sizes = [192, 28], strides = [1, 1]} : vector<224x28xf32> to vector<192x28xf32>
    %c2 = arith.constant 2 : index
    %c0_8 = arith.constant 0 : index
    %c0_9 = arith.constant 0 : index
    %12 = vector.load %arg2[%c2, %c0_8, %c0_9] : memref<5x28x128xf32, #tpu.memory_space<vmem>>, vector<1x28x128xf32>
    %13 = vector.shape_cast %12 : vector<1x28x128xf32> to vector<28x128xf32>
    %cst_10 = arith.constant dense<0.000000e+00> : vector<192x128xf32>
    %14 = tpu.matmul %11, %13, %cst_10 {dimension_numbers = #tpu.dot_dimension_numbers<[1], [0], [0], [1], [0, 0, 1, 1], [], []>} : vector<192x28xf32>, vector<28x128xf32>, vector<192x128xf32> -> vector<192x128xf32>
    %15 = arith.addf %10, %14 : vector<192x128xf32>
    %16 = vector.extract_strided_slice %1 {offsets = [24, 0], sizes = [192, 28], strides = [1, 1]} : vector<224x28xf32> to vector<192x28xf32>
    %c3 = arith.constant 3 : index
    %c0_11 = arith.constant 0 : index
    %c0_12 = arith.constant 0 : index
    %17 = vector.load %arg2[%c3, %c0_11, %c0_12] : memref<5x28x128xf32, #tpu.memory_space<vmem>>, vector<1x28x128xf32>
    %18 = vector.shape_cast %17 : vector<1x28x128xf32> to vector<28x128xf32>
    %cst_13 = arith.constant dense<0.000000e+00> : vector<192x128xf32>
    %19 = tpu.matmul %16, %18, %cst_13 {dimension_numbers = #tpu.dot_dimension_numbers<[1], [0], [0], [1], [0, 0, 1, 1], [], []>} : vector<192x28xf32>, vector<28x128xf32>, vector<192x128xf32> -> vector<192x128xf32>
    %20 = arith.addf %15, %19 : vector<192x128xf32>
    %21 = vector.extract_strided_slice %1 {offsets = [32, 0], sizes = [192, 28], strides = [1, 1]} : vector<224x28xf32> to vector<192x28xf32>
    %c4 = arith.constant 4 : index
    %c0_14 = arith.constant 0 : index
    %c0_15 = arith.constant 0 : index
    %22 = vector.load %arg2[%c4, %c0_14, %c0_15] : memref<5x28x128xf32, #tpu.memory_space<vmem>>, vector<1x28x128xf32>
    %23 = vector.shape_cast %22 : vector<1x28x128xf32> to vector<28x128xf32>
    %cst_16 = arith.constant dense<0.000000e+00> : vector<192x128xf32>
    %24 = tpu.matmul %21, %23, %cst_16 {dimension_numbers = #tpu.dot_dimension_numbers<[1], [0], [0], [1], [0, 0, 1, 1], [], []>} : vector<192x28xf32>, vector<28x128xf32>, vector<192x128xf32> -> vector<192x128xf32>
    %25 = arith.addf %20, %24 : vector<192x128xf32>
    %c0_17 = arith.constant 0 : index
    %c0_18 = arith.constant 0 : index
    %26 = vector.load %arg3[%c0_17, %c0_18] : memref<1x128xf32, #tpu.memory_space<vmem>>, vector<1x128xf32>
    %27 = vector.broadcast %26 : vector<1x128xf32> to vector<192x128xf32>
    %28 = arith.addf %25, %27 : vector<192x128xf32>
    %cst_19 = arith.constant 0.000000e+00 : f32
    %29 = vector.broadcast %cst_19 : f32 to vector<192x128xf32>
    %30 = arith.maximumf %28, %29 : vector<192x128xf32>
    %31 = vector.shape_cast %30 : vector<192x128xf32> to vector<12x16x128xf32>
    %32 = vector.extract_strided_slice %31 {offsets = [0, 0, 0], sizes = [12, 8, 128], strides = [1, 1, 1]} : vector<12x16x128xf32> to vector<12x8x128xf32>
    %33 = vector.extract_strided_slice %31 {offsets = [0, 8, 0], sizes = [12, 8, 128], strides = [1, 1, 1]} : vector<12x16x128xf32> to vector<12x8x128xf32>
    %34 = arith.maximumf %32, %33 : vector<12x8x128xf32>
    %35 = vector.shape_cast %34 : vector<12x8x128xf32> to vector<96x128xf32>
    %36 = vector.extract_strided_slice %35 {offsets = [0, 0], sizes = [96, 64], strides = [1, 1]} : vector<96x128xf32> to vector<96x64xf32>
    %37 = vector.extract_strided_slice %35 {offsets = [0, 64], sizes = [96, 64], strides = [1, 1]} : vector<96x128xf32> to vector<96x64xf32>
    %38 = arith.maximumf %36, %37 : vector<96x64xf32>
    %39 = vector.extract_strided_slice %38 {offsets = [0, 0], sizes = [64, 64], strides = [1, 1]} : vector<96x64xf32> to vector<64x64xf32>
    %c0_20 = arith.constant 0 : index
    %c0_21 = arith.constant 0 : index
    %c0_22 = arith.constant 0 : index
    %40 = vector.load %arg4[%c0_20, %c0_21, %c0_22] : memref<5x64x128xf32, #tpu.memory_space<vmem>>, vector<1x64x128xf32>
    %41 = vector.shape_cast %40 : vector<1x64x128xf32> to vector<64x128xf32>
    %cst_23 = arith.constant dense<0.000000e+00> : vector<64x128xf32>
    %42 = tpu.matmul %39, %41, %cst_23 {dimension_numbers = #tpu.dot_dimension_numbers<[1], [0], [0], [1], [0, 0, 1, 1], [], []>} : vector<64x64xf32>, vector<64x128xf32>, vector<64x128xf32> -> vector<64x128xf32>
    %43 = vector.extract_strided_slice %38 {offsets = [8, 0], sizes = [64, 64], strides = [1, 1]} : vector<96x64xf32> to vector<64x64xf32>
    %c1_24 = arith.constant 1 : index
    %c0_25 = arith.constant 0 : index
    %c0_26 = arith.constant 0 : index
    %44 = vector.load %arg4[%c1_24, %c0_25, %c0_26] : memref<5x64x128xf32, #tpu.memory_space<vmem>>, vector<1x64x128xf32>
    %45 = vector.shape_cast %44 : vector<1x64x128xf32> to vector<64x128xf32>
    %cst_27 = arith.constant dense<0.000000e+00> : vector<64x128xf32>
    %46 = tpu.matmul %43, %45, %cst_27 {dimension_numbers = #tpu.dot_dimension_numbers<[1], [0], [0], [1], [0, 0, 1, 1], [], []>} : vector<64x64xf32>, vector<64x128xf32>, vector<64x128xf32> -> vector<64x128xf32>
    %47 = arith.addf %42, %46 : vector<64x128xf32>
    %48 = vector.extract_strided_slice %38 {offsets = [16, 0], sizes = [64, 64], strides = [1, 1]} : vector<96x64xf32> to vector<64x64xf32>
    %c2_28 = arith.constant 2 : index
    %c0_29 = arith.constant 0 : index
    %c0_30 = arith.constant 0 : index
    %49 = vector.load %arg4[%c2_28, %c0_29, %c0_30] : memref<5x64x128xf32, #tpu.memory_space<vmem>>, vector<1x64x128xf32>
    %50 = vector.shape_cast %49 : vector<1x64x128xf32> to vector<64x128xf32>
    %cst_31 = arith.constant dense<0.000000e+00> : vector<64x128xf32>
    %51 = tpu.matmul %48, %50, %cst_31 {dimension_numbers = #tpu.dot_dimension_numbers<[1], [0], [0], [1], [0, 0, 1, 1], [], []>} : vector<64x64xf32>, vector<64x128xf32>, vector<64x128xf32> -> vector<64x128xf32>
    %52 = arith.addf %47, %51 : vector<64x128xf32>
    %53 = vector.extract_strided_slice %38 {offsets = [24, 0], sizes = [64, 64], strides = [1, 1]} : vector<96x64xf32> to vector<64x64xf32>
    %c3_32 = arith.constant 3 : index
    %c0_33 = arith.constant 0 : index
    %c0_34 = arith.constant 0 : index
    %54 = vector.load %arg4[%c3_32, %c0_33, %c0_34] : memref<5x64x128xf32, #tpu.memory_space<vmem>>, vector<1x64x128xf32>
    %55 = vector.shape_cast %54 : vector<1x64x128xf32> to vector<64x128xf32>
    %cst_35 = arith.constant dense<0.000000e+00> : vector<64x128xf32>
    %56 = tpu.matmul %53, %55, %cst_35 {dimension_numbers = #tpu.dot_dimension_numbers<[1], [0], [0], [1], [0, 0, 1, 1], [], []>} : vector<64x64xf32>, vector<64x128xf32>, vector<64x128xf32> -> vector<64x128xf32>
    %57 = arith.addf %52, %56 : vector<64x128xf32>
    %58 = vector.extract_strided_slice %38 {offsets = [32, 0], sizes = [64, 64], strides = [1, 1]} : vector<96x64xf32> to vector<64x64xf32>
    %c4_36 = arith.constant 4 : index
    %c0_37 = arith.constant 0 : index
    %c0_38 = arith.constant 0 : index
    %59 = vector.load %arg4[%c4_36, %c0_37, %c0_38] : memref<5x64x128xf32, #tpu.memory_space<vmem>>, vector<1x64x128xf32>
    %60 = vector.shape_cast %59 : vector<1x64x128xf32> to vector<64x128xf32>
    %cst_39 = arith.constant dense<0.000000e+00> : vector<64x128xf32>
    %61 = tpu.matmul %58, %60, %cst_39 {dimension_numbers = #tpu.dot_dimension_numbers<[1], [0], [0], [1], [0, 0, 1, 1], [], []>} : vector<64x64xf32>, vector<64x128xf32>, vector<64x128xf32> -> vector<64x128xf32>
    %62 = arith.addf %57, %61 : vector<64x128xf32>
    %c0_40 = arith.constant 0 : index
    %c0_41 = arith.constant 0 : index
    %63 = vector.load %arg5[%c0_40, %c0_41] : memref<1x128xf32, #tpu.memory_space<vmem>>, vector<1x128xf32>
    %64 = vector.broadcast %63 : vector<1x128xf32> to vector<64x128xf32>
    %65 = arith.addf %62, %64 : vector<64x128xf32>
    %cst_42 = arith.constant 0.000000e+00 : f32
    %66 = vector.broadcast %cst_42 : f32 to vector<64x128xf32>
    %67 = arith.maximumf %65, %66 : vector<64x128xf32>
    %68 = vector.shape_cast %67 : vector<64x128xf32> to vector<4x16x128xf32>
    %69 = vector.extract_strided_slice %68 {offsets = [0, 0, 0], sizes = [4, 8, 128], strides = [1, 1, 1]} : vector<4x16x128xf32> to vector<4x8x128xf32>
    %70 = vector.extract_strided_slice %68 {offsets = [0, 8, 0], sizes = [4, 8, 128], strides = [1, 1, 1]} : vector<4x16x128xf32> to vector<4x8x128xf32>
    %71 = arith.maximumf %69, %70 : vector<4x8x128xf32>
    %72 = vector.shape_cast %71 : vector<4x8x128xf32> to vector<32x128xf32>
    %73 = vector.extract_strided_slice %72 {offsets = [0, 0], sizes = [32, 64], strides = [1, 1]} : vector<32x128xf32> to vector<32x64xf32>
    %74 = vector.extract_strided_slice %72 {offsets = [0, 64], sizes = [32, 64], strides = [1, 1]} : vector<32x128xf32> to vector<32x64xf32>
    %75 = arith.maximumf %73, %74 : vector<32x64xf32>
    %c0_43 = arith.constant 0 : index
    %c0_44 = arith.constant 0 : index
    %76 = vector.load %arg7[%c0_43, %c0_44] : memref<1x64xf32, #tpu.memory_space<vmem>>, vector<1x64xf32>
    %77 = vector.extract_strided_slice %75 {offsets = [0, 0], sizes = [8, 64], strides = [1, 1]} : vector<32x64xf32> to vector<8x64xf32>
    %c0_45 = arith.constant 0 : index
    %c0_46 = arith.constant 0 : index
    %c0_47 = arith.constant 0 : index
    %78 = vector.load %arg6[%c0_45, %c0_46, %c0_47] : memref<4x64x64xf32, #tpu.memory_space<vmem>>, vector<1x64x64xf32>
    %79 = vector.shape_cast %78 : vector<1x64x64xf32> to vector<64x64xf32>
    %cst_48 = arith.constant dense<0.000000e+00> : vector<8x64xf32>
    %80 = tpu.matmul %77, %79, %cst_48 {dimension_numbers = #tpu.dot_dimension_numbers<[1], [0], [0], [1], [0, 0, 1, 1], [], []>} : vector<8x64xf32>, vector<64x64xf32>, vector<8x64xf32> -> vector<8x64xf32>
    %81 = vector.broadcast %76 : vector<1x64xf32> to vector<8x64xf32>
    %82 = arith.addf %81, %80 : vector<8x64xf32>
    %83 = vector.extract_strided_slice %75 {offsets = [8, 0], sizes = [8, 64], strides = [1, 1]} : vector<32x64xf32> to vector<8x64xf32>
    %c1_49 = arith.constant 1 : index
    %c0_50 = arith.constant 0 : index
    %c0_51 = arith.constant 0 : index
    %84 = vector.load %arg6[%c1_49, %c0_50, %c0_51] : memref<4x64x64xf32, #tpu.memory_space<vmem>>, vector<1x64x64xf32>
    %85 = vector.shape_cast %84 : vector<1x64x64xf32> to vector<64x64xf32>
    %cst_52 = arith.constant dense<0.000000e+00> : vector<8x64xf32>
    %86 = tpu.matmul %83, %85, %cst_52 {dimension_numbers = #tpu.dot_dimension_numbers<[1], [0], [0], [1], [0, 0, 1, 1], [], []>} : vector<8x64xf32>, vector<64x64xf32>, vector<8x64xf32> -> vector<8x64xf32>
    %87 = arith.addf %82, %86 : vector<8x64xf32>
    %88 = vector.extract_strided_slice %75 {offsets = [16, 0], sizes = [8, 64], strides = [1, 1]} : vector<32x64xf32> to vector<8x64xf32>
    %c2_53 = arith.constant 2 : index
    %c0_54 = arith.constant 0 : index
    %c0_55 = arith.constant 0 : index
    %89 = vector.load %arg6[%c2_53, %c0_54, %c0_55] : memref<4x64x64xf32, #tpu.memory_space<vmem>>, vector<1x64x64xf32>
    %90 = vector.shape_cast %89 : vector<1x64x64xf32> to vector<64x64xf32>
    %cst_56 = arith.constant dense<0.000000e+00> : vector<8x64xf32>
    %91 = tpu.matmul %88, %90, %cst_56 {dimension_numbers = #tpu.dot_dimension_numbers<[1], [0], [0], [1], [0, 0, 1, 1], [], []>} : vector<8x64xf32>, vector<64x64xf32>, vector<8x64xf32> -> vector<8x64xf32>
    %92 = arith.addf %87, %91 : vector<8x64xf32>
    %93 = vector.extract_strided_slice %75 {offsets = [24, 0], sizes = [8, 64], strides = [1, 1]} : vector<32x64xf32> to vector<8x64xf32>
    %c3_57 = arith.constant 3 : index
    %c0_58 = arith.constant 0 : index
    %c0_59 = arith.constant 0 : index
    %94 = vector.load %arg6[%c3_57, %c0_58, %c0_59] : memref<4x64x64xf32, #tpu.memory_space<vmem>>, vector<1x64x64xf32>
    %95 = vector.shape_cast %94 : vector<1x64x64xf32> to vector<64x64xf32>
    %cst_60 = arith.constant dense<0.000000e+00> : vector<8x64xf32>
    %96 = tpu.matmul %93, %95, %cst_60 {dimension_numbers = #tpu.dot_dimension_numbers<[1], [0], [0], [1], [0, 0, 1, 1], [], []>} : vector<8x64xf32>, vector<64x64xf32>, vector<8x64xf32> -> vector<8x64xf32>
    %97 = arith.addf %92, %96 : vector<8x64xf32>
    %cst_61 = arith.constant 0.000000e+00 : f32
    %98 = vector.broadcast %cst_61 : f32 to vector<8x64xf32>
    %99 = arith.maximumf %97, %98 : vector<8x64xf32>
    %c0_62 = arith.constant 0 : index
    %c0_63 = arith.constant 0 : index
    %100 = vector.load %arg8[%c0_62, %c0_63] : memref<64x32xf32, #tpu.memory_space<vmem>>, vector<64x32xf32>
    %cst_64 = arith.constant dense<0.000000e+00> : vector<8x32xf32>
    %101 = tpu.matmul %99, %100, %cst_64 {dimension_numbers = #tpu.dot_dimension_numbers<[1], [0], [0], [1], [0, 0, 1, 1], [], []>} : vector<8x64xf32>, vector<64x32xf32>, vector<8x32xf32> -> vector<8x32xf32>
    %c0_65 = arith.constant 0 : index
    %c0_66 = arith.constant 0 : index
    %102 = vector.load %arg9[%c0_65, %c0_66] : memref<1x32xf32, #tpu.memory_space<vmem>>, vector<1x32xf32>
    %103 = vector.broadcast %102 : vector<1x32xf32> to vector<8x32xf32>
    %104 = arith.addf %101, %103 : vector<8x32xf32>
    %cst_67 = arith.constant 0.000000e+00 : f32
    %105 = vector.broadcast %cst_67 : f32 to vector<8x32xf32>
    %106 = arith.maximumf %104, %105 : vector<8x32xf32>
    %c0_68 = arith.constant 0 : index
    %c0_69 = arith.constant 0 : index
    %107 = vector.load %arg10[%c0_68, %c0_69] : memref<32x10xf32, #tpu.memory_space<vmem>>, vector<32x10xf32>
    %cst_70 = arith.constant dense<0.000000e+00> : vector<8x10xf32>
    %108 = tpu.matmul %106, %107, %cst_70 {dimension_numbers = #tpu.dot_dimension_numbers<[1], [0], [0], [1], [0, 0, 1, 1], [], []>} : vector<8x32xf32>, vector<32x10xf32>, vector<8x10xf32> -> vector<8x10xf32>
    %c0_71 = arith.constant 0 : index
    %c0_72 = arith.constant 0 : index
    %109 = vector.load %arg11[%c0_71, %c0_72] : memref<1x10xf32, #tpu.memory_space<vmem>>, vector<1x10xf32>
    %110 = vector.broadcast %109 : vector<1x10xf32> to vector<8x10xf32>
    %111 = arith.addf %108, %110 : vector<8x10xf32>
    %c0_73 = arith.constant 0 : index
    %c0_74 = arith.constant 0 : index
    %112 = vector.load %arg12[%c0_73, %c0_74] : memref<8x10xf32, #tpu.memory_space<vmem>>, vector<8x10xf32>
    tpu.vector_store %arg12[%c0_73, %c0_74], %111 {strides = array<i32>} : memref<8x10xf32, #tpu.memory_space<vmem>>, vector<8x10xf32>,
    return
  }
  func.func @transform_0(%arg0: i32) -> (i32, i32, i32) {
    %c0_i32 = arith.constant 0 : i32
    %c0_i32_0 = arith.constant 0 : i32
    %c0_i32_1 = arith.constant 0 : i32
    return %arg0, %c0_i32, %c0_i32_0 : i32, i32, i32
  }
  func.func @transform_1(%arg0: i32) -> (i32, i32, i32) {
    %c0_i32 = arith.constant 0 : i32
    %c0_i32_0 = arith.constant 0 : i32
    %c0_i32_1 = arith.constant 0 : i32
    %c0_i32_2 = arith.constant 0 : i32
    return %c0_i32, %c0_i32_0, %c0_i32_1 : i32, i32, i32
  }
  func.func @transform_2(%arg0: i32) -> (i32, i32) {
    %c0_i32 = arith.constant 0 : i32
    %c0_i32_0 = arith.constant 0 : i32
    %c0_i32_1 = arith.constant 0 : i32
    return %c0_i32, %c0_i32_0 : i32, i32
  }
  func.func @transform_3(%arg0: i32) -> (i32, i32, i32) {
    %c0_i32 = arith.constant 0 : i32
    %c0_i32_0 = arith.constant 0 : i32
    %c0_i32_1 = arith.constant 0 : i32
    %c0_i32_2 = arith.constant 0 : i32
    return %c0_i32, %c0_i32_0, %c0_i32_1 : i32, i32, i32
  }
  func.func @transform_4(%arg0: i32) -> (i32, i32) {
    %c0_i32 = arith.constant 0 : i32
    %c0_i32_0 = arith.constant 0 : i32
    %c0_i32_1 = arith.constant 0 : i32
    return %c0_i32, %c0_i32_0 : i32, i32
  }
  func.func @transform_5(%arg0: i32) -> (i32, i32, i32) {
    %c0_i32 = arith.constant 0 : i32
    %c0_i32_0 = arith.constant 0 : i32
    %c0_i32_1 = arith.constant 0 : i32
    %c0_i32_2 = arith.constant 0 : i32
    return %c0_i32, %c0_i32_0, %c0_i32_1 : i32, i32, i32
  }
  func.func @transform_6(%arg0: i32) -> (i32, i32) {
    %c0_i32 = arith.constant 0 : i32
    %c0_i32_0 = arith.constant 0 : i32
    %c0_i32_1 = arith.constant 0 : i32
    return %c0_i32, %c0_i32_0 : i32, i32
  }
  func.func @transform_7(%arg0: i32) -> (i32, i32) {
    %c0_i32 = arith.constant 0 : i32
    %c0_i32_0 = arith.constant 0 : i32
    %c0_i32_1 = arith.constant 0 : i32
    return %c0_i32, %c0_i32_0 : i32, i32
  }
  func.func @transform_8(%arg0: i32) -> (i32, i32) {
    %c0_i32 = arith.constant 0 : i32
    %c0_i32_0 = arith.constant 0 : i32
    %c0_i32_1 = arith.constant 0 : i32
    return %c0_i32, %c0_i32_0 : i32, i32
  }
  func.func @transform_9(%arg0: i32) -> (i32, i32) {
    %c0_i32 = arith.constant 0 : i32
    %c0_i32_0 = arith.constant 0 : i32
    %c0_i32_1 = arith.constant 0 : i32
    return %c0_i32, %c0_i32_0 : i32, i32
  }
  func.func @transform_10(%arg0: i32) -> (i32, i32) {
    %c0_i32 = arith.constant 0 : i32
    %c0_i32_0 = arith.constant 0 : i32
    %c0_i32_1 = arith.constant 0 : i32
    return %c0_i32, %c0_i32_0 : i32, i32
  }
  func.func @transform_11(%arg0: i32) -> (i32, i32) {
    %c0_i32 = arith.constant 0 : i32
    %c0_i32_0 = arith.constant 0 : i32
    return %arg0, %c0_i32 : i32, i32
  }
}

</mosaic_0001>

<llo_original>
// kernel: forward.1
$region0: #{forward.1}
  #allocation0 [shape = 'u32[]', space=smem, size = 0x4, offset = 0x4, fixed_abs, tag = 'smem constant byte address 0x4 - core index']
  #allocation1 [shape = 'u32[144,128]{1,0:T(1,128)}', space=vmem, size = 0x12000, scoped, tag = 'internal scratch']
  %s0 = inlined_call_operand.vmem [shape: f32[2,224,28], index: 0, kind: input, shape index: {}]
  %s1 = inlined_call_operand.vmem [shape: f32[5,28,128], index: 1, kind: input, shape index: {}]
  %s2 = inlined_call_operand.vmem [shape: f32[1,128], index: 2, kind: input, shape index: {}]
  %s3 = inlined_call_operand.vmem [shape: f32[5,64,128], index: 3, kind: input, shape index: {}]
  %s4 = inlined_call_operand.vmem [shape: f32[1,128], index: 4, kind: input, shape index: {}]
  %s5 = inlined_call_operand.vmem [shape: f32[4,64,64], index: 5, kind: input, shape index: {}]
  %s6 = inlined_call_operand.vmem [shape: f32[1,64], index: 6, kind: input, shape index: {}]
  %s7 = inlined_call_operand.vmem [shape: f32[64,32], index: 7, kind: input, shape index: {}]
  %s8 = inlined_call_operand.vmem [shape: f32[1,32], index: 8, kind: input, shape index: {}]
  %s9 = inlined_call_operand.vmem [shape: f32[32,10], index: 9, kind: input, shape index: {}]
  %s10 = inlined_call_operand.vmem [shape: f32[1,10], index: 10, kind: input, shape index: {}]
  %s11 = inlined_call_operand.hbm [shape: f32[16,10], index: 11, kind: output, shape index: {}]
  %s12 = sld [smem:[#allocation0]]
  $region77: #{forward.1} parent=0
    _
  %s14 = ssub.s32 1, %s12
  %s15 = scalar_select 0, %s14, %s12
  $region1: #{forward.1} parent=0
    #allocation2 [shape = 'u8[8192]{0}', space=vmem, size = 0x2000, scoped, tag = 'output window, operand 0']
    #allocation3 [shape = 's32[2]{0}', space=sflag, size = 0x8, scoped, tag = 'scoped memory for forward.1']
    %16 = vsyncpa [#allocation3], 0
    %s17 = scalar_lea.sflag [#allocation3], 1
    %18 = vsyncpa %s17, 0
    loop: start=0, step=1, limit=4
    $region2: #{forward.1} parent=1 // loop_pre_header
      _
    $region3: #{forward.1} parent=1 // loop_header
      %s20 = sphi 0, %s24
      %p21 = scmp.ge.s32.totalorder %s20, 4
      %s30 = sphi 0, %s32
      %s33 = sphi 0, %s30
      %s34 = sphi 0, %s33
      %s50 = sphi 0, %s34
      %s54 = sphi 0, %s54
      %s56 = sphi 0, %s54
      %s57 = sphi 0, %s56
      %s71 = sphi 0, %s57
      %s75 = sphi 0, %s75
      %s77 = sphi 0, %s75
      %s78 = sphi 0, %s77
      %s92 = sphi 0, %s78
      %s96 = sphi 0, %s96
      %s98 = sphi 0, %s96
      %s99 = sphi 0, %s98
      %s113 = sphi 0, %s99
      %s117 = sphi 0, %s117
      %s119 = sphi 0, %s117
      %s120 = sphi 0, %s119
      %s134 = sphi 0, %s120
      %s138 = sphi 0, %s138
      %s140 = sphi 0, %s138
      %s141 = sphi 0, %s140
      %s155 = sphi 0, %s141
      %s159 = sphi 0, %s159
      %s161 = sphi 0, %s159
      %s162 = sphi 0, %s161
      %s176 = sphi 0, %s162
      %s180 = sphi 0, %s180
      %s182 = sphi 0, %s180
      %s183 = sphi 0, %s182
      %s197 = sphi 0, %s183
      %s201 = sphi 0, %s201
      %s203 = sphi 0, %s201
      %s204 = sphi 0, %s203
      %s218 = sphi 0, %s204
      %s222 = sphi 0, %s222
      %s224 = sphi 0, %s222
      %s225 = sphi 0, %s224
      %s239 = sphi 0, %s225
      %s243 = sphi 0, %s243
      %s245 = sphi 0, %s243
      %s246 = sphi 0, %s245
      %s260 = sphi 0, %s246
      %s266 = sphi 0, %s268
      %s269 = sphi 0, %s266
      %s270 = sphi 0, %s269
      %s286 = sphi 0, %s270
    $region4: #{forward.1} parent=1 // loop_header_branch
      %23 = sbr.rel (%p21) target = $region8
    $region5: #{forward.1} parent=1 // loop_body
      %s25 = ssub.s32 %s20, 1
      %s26 = ssub.s32 %s20, 2
      %s27 = sadd.s32 %s20, 1
      %s28 = ssub.s32 %s20, %s27
      %p29 = scmp.eq.s32.totalorder %s28, 0
      %s31 = sadd.s32 %s30, 1
      %s32 = scalar_select %p29, %s30, %s31
      %p35 = pneg %p29
      %p36 = scmp.eq.s32.totalorder %s20, 1
      %p37 = por %p35, %p36
      %p38 = scmp.ne.s32.totalorder %s30, %s33
      %p39 = scmp.eq.s32.totalorder %s20, 0
      %p40 = por %p38, %p39
      %p41 = scmp.ne.s32.totalorder %s30, %s33
      %p42 = scmp.eq.s32.totalorder %s25, 1
      %p43 = por %p41, %p42
      %p44 = scmp.ne.s32.totalorder %s33, %s34
      %p45 = scmp.eq.s32.totalorder %s25, 0
      %p46 = por %p44, %p45
      %p47 = scmp.ne.s32.totalorder %s33, %s34
      %p48 = scmp.eq.s32.totalorder %s26, 1
      %p49 = por %p47, %p48
      %p51 = scmp.ne.s32.totalorder %s34, %s50
      %p52 = scmp.eq.s32.totalorder %s26, 0
      %p53 = por %p51, %p52
      %s55 = sadd.s32 %s54, 1
      %p58 = scmp.eq.s32.totalorder %s20, 1
      %p59 = scmp.ne.s32.totalorder %s54, %s56
      %p60 = scmp.eq.s32.totalorder %s20, 0
      %p61 = por %p59, %p60
      %p62 = scmp.ne.s32.totalorder %s54, %s56
      %p63 = scmp.eq.s32.totalorder %s25, 1
      %p64 = por %p62, %p63
      %p65 = scmp.ne.s32.totalorder %s56, %s57
      %p66 = scmp.eq.s32.totalorder %s25, 0
      %p67 = por %p65, %p66
      %p68 = scmp.ne.s32.totalorder %s56, %s57
      %p69 = scmp.eq.s32.totalorder %s26, 1
      %p70 = por %p68, %p69
      %p72 = scmp.ne.s32.totalorder %s57, %s71
      %p73 = scmp.eq.s32.totalorder %s26, 0
      %p74 = por %p72, %p73
      %s76 = sadd.s32 %s75, 1
      %p79 = scmp.eq.s32.totalorder %s20, 1
      %p80 = scmp.ne.s32.totalorder %s75, %s77
      %p81 = scmp.eq.s32.totalorder %s20, 0
      %p82 = por %p80, %p81
      %p83 = scmp.ne.s32.totalorder %s75, %s77
      %p84 = scmp.eq.s32.totalorder %s25, 1
      %p85 = por %p83, %p84
      %p86 = scmp.ne.s32.totalorder %s77, %s78
      %p87 = scmp.eq.s32.totalorder %s25, 0
      %p88 = por %p86, %p87
      %p89 = scmp.ne.s32.totalorder %s77, %s78
      %p90 = scmp.eq.s32.totalorder %s26, 1
      %p91 = por %p89, %p90
      %p93 = scmp.ne.s32.totalorder %s78, %s92
      %p94 = scmp.eq.s32.totalorder %s26, 0
      %p95 = por %p93, %p94
      %s97 = sadd.s32 %s96, 1
      %p100 = scmp.eq.s32.totalorder %s20, 1
      %p101 = scmp.ne.s32.totalorder %s96, %s98
      %p102 = scmp.eq.s32.totalorder %s20, 0
      %p103 = por %p101, %p102
      %p104 = scmp.ne.s32.totalorder %s96, %s98
      %p105 = scmp.eq.s32.totalorder %s25, 1
      %p106 = por %p104, %p105
      %p107 = scmp.ne.s32.totalorder %s98, %s99
      %p108 = scmp.eq.s32.totalorder %s25, 0
      %p109 = por %p107, %p108
      %p110 = scmp.ne.s32.totalorder %s98, %s99
      %p111 = scmp.eq.s32.totalorder %s26, 1
      %p112 = por %p110, %p111
      %p114 = scmp.ne.s32.totalorder %s99, %s113
      %p115 = scmp.eq.s32.totalorder %s26, 0
      %p116 = por %p114, %p115
      %s118 = sadd.s32 %s117, 1
      %p121 = scmp.eq.s32.totalorder %s20, 1
      %p122 = scmp.ne.s32.totalorder %s117, %s119
      %p123 = scmp.eq.s32.totalorder %s20, 0
      %p124 = por %p122, %p123
      %p125 = scmp.ne.s32.totalorder %s117, %s119
      %p126 = scmp.eq.s32.totalorder %s25, 1
      %p127 = por %p125, %p126
      %p128 = scmp.ne.s32.totalorder %s119, %s120
      %p129 = scmp.eq.s32.totalorder %s25, 0
      %p130 = por %p128, %p129
      %p131 = scmp.ne.s32.totalorder %s119, %s120
      %p132 = scmp.eq.s32.totalorder %s26, 1
      %p133 = por %p131, %p132
      %p135 = scmp.ne.s32.totalorder %s120, %s134
      %p136 = scmp.eq.s32.totalorder %s26, 0
      %p137 = por %p135, %p136
      %s139 = sadd.s32 %s138, 1
      %p142 = scmp.eq.s32.totalorder %s20, 1
      %p143 = scmp.ne.s32.totalorder %s138, %s140
      %p144 = scmp.eq.s32.totalorder %s20, 0
      %p145 = por %p143, %p144
      %p146 = scmp.ne.s32.totalorder %s138, %s140
      %p147 = scmp.eq.s32.totalorder %s25, 1
      %p148 = por %p146, %p147
      %p149 = scmp.ne.s32.totalorder %s140, %s141
      %p150 = scmp.eq.s32.totalorder %s25, 0
      %p151 = por %p149, %p150
      %p152 = scmp.ne.s32.totalorder %s140, %s141
      %p153 = scmp.eq.s32.totalorder %s26, 1
      %p154 = por %p152, %p153
      %p156 = scmp.ne.s32.totalorder %s141, %s155
      %p157 = scmp.eq.s32.totalorder %s26, 0
      %p158 = por %p156, %p157
      %s160 = sadd.s32 %s159, 1
      %p163 = scmp.eq.s32.totalorder %s20, 1
      %p164 = scmp.ne.s32.totalorder %s159, %s161
      %p165 = scmp.eq.s32.totalorder %s20, 0
      %p166 = por %p164, %p165
      %p167 = scmp.ne.s32.totalorder %s159, %s161
      %p168 = scmp.eq.s32.totalorder %s25, 1
      %p169 = por %p167, %p168
      %p170 = scmp.ne.s32.totalorder %s161, %s162
      %p171 = scmp.eq.s32.totalorder %s25, 0
      %p172 = por %p170, %p171
      %p173 = scmp.ne.s32.totalorder %s161, %s162
      %p174 = scmp.eq.s32.totalorder %s26, 1
      %p175 = por %p173, %p174
      %p177 = scmp.ne.s32.totalorder %s162, %s176
      %p178 = scmp.eq.s32.totalorder %s26, 0
      %p179 = por %p177, %p178
      %s181 = sadd.s32 %s180, 1
      %p184 = scmp.eq.s32.totalorder %s20, 1
      %p185 = scmp.ne.s32.totalorder %s180, %s182
      %p186 = scmp.eq.s32.totalorder %s20, 0
      %p187 = por %p185, %p186
      %p188 = scmp.ne.s32.totalorder %s180, %s182
      %p189 = scmp.eq.s32.totalorder %s25, 1
      %p190 = por %p188, %p189
      %p191 = scmp.ne.s32.totalorder %s182, %s183
      %p192 = scmp.eq.s32.totalorder %s25, 0
      %p193 = por %p191, %p192
      %p194 = scmp.ne.s32.totalorder %s182, %s183
      %p195 = scmp.eq.s32.totalorder %s26, 1
      %p196 = por %p194, %p195
      %p198 = scmp.ne.s32.totalorder %s183, %s197
      %p199 = scmp.eq.s32.totalorder %s26, 0
      %p200 = por %p198, %p199
      %s202 = sadd.s32 %s201, 1
      %p205 = scmp.eq.s32.totalorder %s20, 1
      %p206 = scmp.ne.s32.totalorder %s201, %s203
      %p207 = scmp.eq.s32.totalorder %s20, 0
      %p208 = por %p206, %p207
      %p209 = scmp.ne.s32.totalorder %s201, %s203
      %p210 = scmp.eq.s32.totalorder %s25, 1
      %p211 = por %p209, %p210
      %p212 = scmp.ne.s32.totalorder %s203, %s204
      %p213 = scmp.eq.s32.totalorder %s25, 0
      %p214 = por %p212, %p213
      %p215 = scmp.ne.s32.totalorder %s203, %s204
      %p216 = scmp.eq.s32.totalorder %s26, 1
      %p217 = por %p215, %p216
      %p219 = scmp.ne.s32.totalorder %s204, %s218
      %p220 = scmp.eq.s32.totalorder %s26, 0
      %p221 = por %p219, %p220
      %s223 = sadd.s32 %s222, 1
      %p226 = scmp.eq.s32.totalorder %s20, 1
      %p227 = scmp.ne.s32.totalorder %s222, %s224
      %p228 = scmp.eq.s32.totalorder %s20, 0
      %p229 = por %p227, %p228
      %p230 = scmp.ne.s32.totalorder %s222, %s224
      %p231 = scmp.eq.s32.totalorder %s25, 1
      %p232 = por %p230, %p231
      %p233 = scmp.ne.s32.totalorder %s224, %s225
      %p234 = scmp.eq.s32.totalorder %s25, 0
      %p235 = por %p233, %p234
      %p236 = scmp.ne.s32.totalorder %s224, %s225
      %p237 = scmp.eq.s32.totalorder %s26, 1
      %p238 = por %p236, %p237
      %p240 = scmp.ne.s32.totalorder %s225, %s239
      %p241 = scmp.eq.s32.totalorder %s26, 0
      %p242 = por %p240, %p241
      %s244 = sadd.s32 %s243, 1
      %p247 = scmp.eq.s32.totalorder %s20, 1
      %p248 = scmp.ne.s32.totalorder %s243, %s245
      %p249 = scmp.eq.s32.totalorder %s20, 0
      %p250 = por %p248, %p249
      %p251 = scmp.ne.s32.totalorder %s243, %s245
      %p252 = scmp.eq.s32.totalorder %s25, 1
      %p253 = por %p251, %p252
      %p254 = scmp.ne.s32.totalorder %s245, %s246
      %p255 = scmp.eq.s32.totalorder %s25, 0
      %p256 = por %p254, %p255
      %p257 = scmp.ne.s32.totalorder %s245, %s246
      %p258 = scmp.eq.s32.totalorder %s26, 1
      %p259 = por %p257, %p258
      %p261 = scmp.ne.s32.totalorder %s246, %s260
      %p262 = scmp.eq.s32.totalorder %s26, 0
      %p263 = por %p261, %p262
      %s264 = ssub.s32 %s20, %s27
      %p265 = scmp.eq.s32.totalorder %s264, 0
      %s267 = sadd.s32 %s266, 1
      %s268 = scalar_select %p265, %s266, %s267
      %p271 = pneg %p265
      %p272 = scmp.eq.s32.totalorder %s20, 1
      %p273 = por %p271, %p272
      %p274 = scmp.ne.s32.totalorder %s266, %s269
      %p275 = scmp.eq.s32.totalorder %s20, 0
      %p276 = por %p274, %p275
      %p277 = scmp.ne.s32.totalorder %s266, %s269
      %p278 = scmp.eq.s32.totalorder %s25, 1
      %p279 = por %p277, %p278
      %p280 = scmp.ne.s32.totalorder %s269, %s270
      %p281 = scmp.eq.s32.totalorder %s25, 0
      %p282 = por %p280, %p281
      %p283 = scmp.ne.s32.totalorder %s269, %s270
      %p284 = scmp.eq.s32.totalorder %s26, 1
      %p285 = por %p283, %p284
      %p287 = scmp.ne.s32.totalorder %s270, %s286
      %p288 = scmp.eq.s32.totalorder %s26, 0
      %p289 = por %p287, %p288
      %p290 = scmp.le.s32.totalorder 1, %s20
      %p291 = scmp.lt.s32.totalorder %s20, 3
      %p292 = pnand %p290, %p291
      %p293 = pneg %p292
      // Predicated region
      $region9: #{forward.1} parent=5 // pred_check
        _
      $region10: #{forward.1} parent=5 // pred_check_branch
        %295 = sbr.rel (%p292) target = $region12
      $region11: #{forward.1} parent=5 // pred_region
        %s296 = ssub.s32 %s20, 1
        // Predicated region
        $region13: #{forward.1} parent=11 // pred_check
          %p297 = pneg %p67
        $region14: #{forward.1} parent=11 // pred_check_branch
          %299 = sbr.rel (%p297) target = $region16
        $region15: #{forward.1} parent=11 // pred_region
          _
        $region16: #{forward.1} parent=11 // pred_fallthru
          _
        // Predicated region
        $region17: #{forward.1} parent=11 // pred_check
          %p300 = pneg %p88
        $region18: #{forward.1} parent=11 // pred_check_branch
          %302 = sbr.rel (%p300) target = $region20
        $region19: #{forward.1} parent=11 // pred_region
          _
        $region20: #{forward.1} parent=11 // pred_fallthru
          _
        // Predicated region
        $region21: #{forward.1} parent=11 // pred_check
          %p303 = pneg %p109
        $region22: #{forward.1} parent=11 // pred_check_branch
          %305 = sbr.rel (%p303) target = $region24
        $region23: #{forward.1} parent=11 // pred_region
          _
        $region24: #{forward.1} parent=11 // pred_fallthru
          _
        // Predicated region
        $region25: #{forward.1} parent=11 // pred_check
          %p306 = pneg %p130
        $region26: #{forward.1} parent=11 // pred_check_branch
          %308 = sbr.rel (%p306) target = $region28
        $region27: #{forward.1} parent=11 // pred_region
          _
        $region28: #{forward.1} parent=11 // pred_fallthru
          _
        // Predicated region
        $region29: #{forward.1} parent=11 // pred_check
          %p309 = pneg %p151
        $region30: #{forward.1} parent=11 // pred_check_branch
          %311 = sbr.rel (%p309) target = $region32
        $region31: #{forward.1} parent=11 // pred_region
          _
        $region32: #{forward.1} parent=11 // pred_fallthru
          _
        // Predicated region
        $region33: #{forward.1} parent=11 // pred_check
          %p312 = pneg %p172
        $region34: #{forward.1} parent=11 // pred_check_branch
          %314 = sbr.rel (%p312) target = $region36
        $region35: #{forward.1} parent=11 // pred_region
          _
        $region36: #{forward.1} parent=11 // pred_fallthru
          _
        // Predicated region
        $region37: #{forward.1} parent=11 // pred_check
          %p315 = pneg %p193
        $region38: #{forward.1} parent=11 // pred_check_branch
          %317 = sbr.rel (%p315) target = $region40
        $region39: #{forward.1} parent=11 // pred_region
          _
        $region40: #{forward.1} parent=11 // pred_fallthru
          _
        // Predicated region
        $region41: #{forward.1} parent=11 // pred_check
          %p318 = pneg %p214
        $region42: #{forward.1} parent=11 // pred_check_branch
          %320 = sbr.rel (%p318) target = $region44
        $region43: #{forward.1} parent=11 // pred_region
          _
        $region44: #{forward.1} parent=11 // pred_fallthru
          _
        // Predicated region
        $region45: #{forward.1} parent=11 // pred_check
          %p321 = pneg %p235
        $region46: #{forward.1} parent=11 // pred_check_branch
          %323 = sbr.rel (%p321) target = $region48
        $region47: #{forward.1} parent=11 // pred_region
          _
        $region48: #{forward.1} parent=11 // pred_fallthru
          _
        // Predicated region
        $region49: #{forward.1} parent=11 // pred_check
          %p324 = pneg %p256
        $region50: #{forward.1} parent=11 // pred_check_branch
          %326 = sbr.rel (%p324) target = $region52
        $region51: #{forward.1} parent=11 // pred_region
          _
        $region52: #{forward.1} parent=11 // pred_fallthru
          _
      $region12: #{forward.1} parent=5 // pred_fallthru
        _
      %p327 = scmp.lt.s32.totalorder %s20, 2
      // Predicated region
      $region53: #{forward.1} parent=5 // pred_check
        %p328 = pneg %p327
      $region54: #{forward.1} parent=5 // pred_check_branch
        %330 = sbr.rel (%p328) target = $region56
      $region55: #{forward.1} parent=5 // pred_region
        // Predicated region
        $region57: #{forward.1} parent=55 // pred_check
          %p331 = pneg %p40
        $region58: #{forward.1} parent=55 // pred_check_branch
          %333 = sbr.rel (%p331) target = $region60
        $region59: #{forward.1} parent=55 // pred_region
          %p334 = scmp.lt.s32.totalorder %s20, 1
          %s335 = scalar_select %p334, %s20, 1
          %s336 = smul.addr %s335, 28
          %s337 = smul.addr %s336, 8
          %s338 = scalar_lea.vmem %s0, %s337
        $region60: #{forward.1} parent=55 // pred_fallthru
          _
      $region56: #{forward.1} parent=5 // pred_fallthru
        _
      %p339 = scmp.le.s32.totalorder 1, %s20
      %p340 = scmp.lt.s32.totalorder %s20, 3
      %p341 = pnand %p339, %p340
      %p342 = pneg %p341
      // Predicated region
      $region61: #{forward.1} parent=5 // pred_check
        _
      $region62: #{forward.1} parent=5 // pred_check_branch
        %344 = sbr.rel (%p341) target = $region64
      $region63: #{forward.1} parent=5 // pred_region
        %s345 = ssub.s32 %s20, 1
        %p346 = scmp.lt.s32.totalorder %s25, 1
        %s347 = scalar_select %p346, %s25, 1
        %s348 = smul.addr %s347, 28
        %s349 = smul.addr %s348, 8
        %s350 = scalar_lea.vmem %s0, %s349
        %p351 = pneg %p46
        %p352 = pneg %p43
        %p353 = pneg %p67
        %p354 = pneg %p64
        %p355 = pneg %p88
        %p356 = pneg %p85
        %p357 = pneg %p109
        %p358 = pneg %p106
        %p359 = pneg %p130
        %p360 = pneg %p127
        %p361 = pneg %p151
        %p362 = pneg %p148
        %p363 = pneg %p172
        %p364 = pneg %p169
        %p365 = pneg %p193
        %p366 = pneg %p190
        %p367 = pneg %p214
        %p368 = pneg %p211
        %p369 = pneg %p235
        %p370 = pneg %p232
        %p371 = pneg %p256
        %p372 = pneg %p253
        %p373 = pneg %p282
        %p374 = pneg %p279
        %s375 = sand.u32 %s269, 1
        %s376 = scalar_lea.sflag [#allocation3], %s375
        %s377 = sand.u32 %s269, 1
        %s378 = smul.addr %s377, 8
        %s379 = scalar_lea.vmem [#allocation2], %s378
        %p380 = scmp.lt.s32.totalorder %s25, 1
        %s381 = scalar_select %p380, %s25, 1
        %s382 = smul.addr %s381, 28
        %s383 = smul.addr %s382, 8
        %s384 = scalar_lea.vmem %s0, %s383
        %v385 = vld [vmem:[%s384] sm:$0xff]
        %v386 = vld [vmem:[%s384 + $0x8] sm:$0xff]
        %v387 = vld [vmem:[%s384 + $0x10] sm:$0xff]
        %v388 = vld [vmem:[%s384 + $0x18] sm:$0xff]
        %v389 = vld [vmem:[%s384 + $0x20] sm:$0xff]
        %v390 = vld [vmem:[%s384 + $0x28] sm:$0xff]
        %v391 = vld [vmem:[%s384 + $0x30] sm:$0xff]
        %v392 = vld [vmem:[%s384 + $0x38] sm:$0xff]
        %v393 = vld [vmem:[%s384 + $0x40] sm:$0xff]
        %v394 = vld [vmem:[%s384 + $0x48] sm:$0xff]
        %v395 = vld [vmem:[%s384 + $0x50] sm:$0xff]
        %v396 = vld [vmem:[%s384 + $0x58] sm:$0xff]
        %v397 = vld [vmem:[%s384 + $0x60] sm:$0xff]
        %v398 = vld [vmem:[%s384 + $0x68] sm:$0xff]
        %v399 = vld [vmem:[%s384 + $0x70] sm:$0xff]
        %v400 = vld [vmem:[%s384 + $0x78] sm:$0xff]
        %v401 = vld [vmem:[%s384 + $0x80] sm:$0xff]
        %v402 = vld [vmem:[%s384 + $0x88] sm:$0xff]
        %v403 = vld [vmem:[%s384 + $0x90] sm:$0xff]
        %v404 = vld [vmem:[%s384 + $0x98] sm:$0xff]
        %v405 = vld [vmem:[%s384 + $0xa0] sm:$0xff]
        %v406 = vld [vmem:[%s384 + $0xa8] sm:$0xff]
        %v407 = vld [vmem:[%s384 + $0xb0] sm:$0xff]
        %v408 = vld [vmem:[%s384 + $0xb8] sm:$0xff]
        %v409 = vld [vmem:[%s384 + $0xc0] sm:$0xff]
        %v410 = vld [vmem:[%s384 + $0xc8] sm:$0xff]
        %v411 = vld [vmem:[%s384 + $0xd0] sm:$0xff]
        %v412 = vld [vmem:[%s384 + $0xd8] sm:$0xff]
        %v413 = vld [vmem:[%s1] sm:$0xff]
        %v414 = vld [vmem:[%s1 + $0x8] sm:$0xff]
        %v415 = vld [vmem:[%s1 + $0x10] sm:$0xff]
        %v416 = vld [vmem:[%s1 + $0x18] sm:$0xf]
        %s417 = scalar_lea.vmem %s1, 32
        %v418 = vld [vmem:[%s417] sm:$0xff]
        %v419 = vld [vmem:[%s417 + $0x8] sm:$0xff]
        %v420 = vld [vmem:[%s417 + $0x10] sm:$0xff]
        %v421 = vld [vmem:[%s417 + $0x18] sm:$0xf]
        %vm422 = vcmask 228352
        %v424 = vsel %vm422, %v386, 0
        %v427 = vsel %vm422, %v387, 0
        %v430 = vsel %vm422, %v388, 0
        %v433 = vsel %vm422, %v389, 0
        %v436 = vsel %vm422, %v390, 0
        %v439 = vsel %vm422, %v391, 0
        %v442 = vsel %vm422, %v392, 0
        %v445 = vsel %vm422, %v393, 0
        %v448 = vsel %vm422, %v394, 0
        %v451 = vsel %vm422, %v395, 0
        %v454 = vsel %vm422, %v396, 0
        %v457 = vsel %vm422, %v397, 0
        %v460 = vsel %vm422, %v398, 0
        %v463 = vsel %vm422, %v399, 0
        %v466 = vsel %vm422, %v400, 0
        %v469 = vsel %vm422, %v401, 0
        %v472 = vsel %vm422, %v402, 0
        %v475 = vsel %vm422, %v403, 0
        %v478 = vsel %vm422, %v404, 0
        %v481 = vsel %vm422, %v405, 0
        %v484 = vsel %vm422, %v406, 0
        %v487 = vsel %vm422, %v407, 0
        %v490 = vsel %vm422, %v408, 0
        %v493 = vsel %vm422, %v409, 0
        %vm495 = vcmask 1043456
        %v497 = vsel %vm495, %v421, 0
        %499 = vmatprep.subr.mxu0 0.0
        %500 = vmatpush1.msra.mxu0 0.0
        %501 = vmatprep.subr.mxu0 0.0
        %502 = vmatpush1.msra.mxu0 0.0
        %503 = vmatprep.subr.mxu0 0.0
        %504 = vmatpush1.msra.mxu0 0.0
        %505 = vmatprep.subr.mxu0 0.0
        %506 = vmatpush1.msra.mxu0 0.0
        %507 = vmatprep.subr.mxu0 0.0
        %508 = vmatpush1.msra.mxu0 0.0
        %509 = vmatprep.subr.mxu0 0.0
        %510 = vmatpush1.msra.mxu0 0.0
        %511 = vmatprep.subr.mxu0 0.0
        %512 = vmatpush1.msra.mxu0 0.0
        %513 = vmatprep.subr.mxu0 0.0
        %514 = vmatpush1.msra.mxu0 0.0
        %515 = vmatprep.subr.mxu0 0.0
        %516 = vmatpush1.msra.mxu0 0.0
        %517 = vmatprep.subr.mxu0 0.0
        %518 = vmatpush1.msra.mxu0 0.0
        %519 = vmatprep.subr.mxu0 0.0
        %520 = vmatpush1.msra.mxu0 0.0
        %521 = vmatprep.subr.mxu0 0.0
        %522 = vmatpush1.msra.mxu0 0.0
        %523 = vmatprep.subr.mxu0 0.0
        %524 = vmatpush1.msra.mxu0 %v497
        %525 = vmatprep.subr.mxu0 0.0
        %526 = vmatpush1.msra.mxu0 %v420
        %527 = vmatprep.subr.mxu0 0.0
        %528 = vmatpush1.msra.mxu0 %v419
        %529 = vmatprep.subr.mxu0 0.0
        %530 = vmatpush1.msra.mxu0 %v418
        %531 = vmatprep.subr.mxu0 0.0
        %532 = vmatpush2.msra.mxu0 0.0
        %533 = vmatprep.subr.mxu0 0.0
        %534 = vmatpush2.msra.mxu0 0.0
        %535 = vmatprep.subr.mxu0 0.0
        %536 = vmatpush2.msra.mxu0 0.0
        %537 = vmatprep.subr.mxu0 0.0
        %538 = vmatpush2.msra.mxu0 0.0
        %539 = vmatprep.subr.mxu0 0.0
        %540 = vmatpush2.msra.mxu0 0.0
        %541 = vmatprep.subr.mxu0 0.0
        %542 = vmatpush2.msra.mxu0 0.0
        %543 = vmatprep.subr.mxu0 0.0
        %544 = vmatpush2.msra.mxu0 0.0
        %545 = vmatprep.subr.mxu0 0.0
        %546 = vmatpush2.msra.mxu0 0.0
        %547 = vmatprep.subr.mxu0 0.0
        %548 = vmatpush2.msra.mxu0 0.0
        %549 = vmatprep.subr.mxu0 0.0
        %550 = vmatpush2.msra.mxu0 0.0
        %551 = vmatprep.subr.mxu0 0.0
        %552 = vmatpush2.msra.mxu0 0.0
        %553 = vmatprep.subr.mxu0 0.0
        %554 = vmatpush2.msra.mxu0 0.0
        %555 = vmatprep.subr.mxu0 0.0
        %556 = vmatpush2.msra.mxu0 0.0
        %557 = vmatprep.subr.mxu0 0.0
        %558 = vmatpush2.msra.mxu0 0.0
        %559 = vmatprep.subr.mxu0 0.0
        %560 = vmatpush2.msra.mxu0 0.0
        %561 = vmatprep.subr.mxu0 0.0
        %562 = vmatpush2.msra.mxu0 0.0
        %563 = vmatprep.mubr.f32.mxu0 0.0
        %564 = vmatmul.mubr.f32.gmra.mxu0 %v424
        %v565 = vpop.f32.mrf.mxu0
        %v566 = vadd.f32 0.0, %v565
        %v567 = vpop.f32.mrf.mxu0
        %568 = vmatprep.mubr.f32.mxu0 0.0
        %569 = vmatmul.mubr.f32.gmra.mxu0 %v427
        %v570 = vpop.f32.mrf.mxu0
        %v571 = vadd.f32 0.0, %v570
        %v572 = vpop.f32.mrf.mxu0
        %573 = vmatprep.mubr.f32.mxu0 0.0
        %574 = vmatmul.mubr.f32.gmra.mxu0 %v430
        %v575 = vpop.f32.mrf.mxu0
        %v576 = vadd.f32 0.0, %v575
        %v577 = vpop.f32.mrf.mxu0
        %578 = vmatprep.mubr.f32.mxu0 0.0
        %579 = vmatmul.mubr.f32.gmra.mxu0 %v433
        %v580 = vpop.f32.mrf.mxu0
        %v581 = vadd.f32 0.0, %v580
        %v582 = vpop.f32.mrf.mxu0
        %583 = vmatprep.mubr.f32.mxu0 0.0
        %584 = vmatmul.mubr.f32.gmra.mxu0 %v436
        %v585 = vpop.f32.mrf.mxu0
        %v586 = vadd.f32 0.0, %v585
        %v587 = vpop.f32.mrf.mxu0
        %588 = vmatprep.mubr.f32.mxu0 0.0
        %589 = vmatmul.mubr.f32.gmra.mxu0 %v439
        %v590 = vpop.f32.mrf.mxu0
        %v591 = vadd.f32 0.0, %v590
        %v592 = vpop.f32.mrf.mxu0
        %593 = vmatprep.mubr.f32.mxu0 0.0
        %594 = vmatmul.mubr.f32.gmra.mxu0 %v442
        %v595 = vpop.f32.mrf.mxu0
        %v596 = vadd.f32 0.0, %v595
        %v597 = vpop.f32.mrf.mxu0
        %598 = vmatprep.mubr.f32.mxu0 0.0
        %599 = vmatmul.mubr.f32.gmra.mxu0 %v445
        %v600 = vpop.f32.mrf.mxu0
        %v601 = vadd.f32 0.0, %v600
        %v602 = vpop.f32.mrf.mxu0
        %603 = vmatprep.mubr.f32.mxu0 0.0
        %604 = vmatmul.mubr.f32.gmra.mxu0 %v448
        %v605 = vpop.f32.mrf.mxu0
        %v606 = vadd.f32 0.0, %v605
        %v607 = vpop.f32.mrf.mxu0
        %608 = vmatprep.mubr.f32.mxu0 0.0
        %609 = vmatmul.mubr.f32.gmra.mxu0 %v451
        %v610 = vpop.f32.mrf.mxu0
        %v611 = vadd.f32 0.0, %v610
        %v612 = vpop.f32.mrf.mxu0
        %613 = vmatprep.mubr.f32.mxu0 0.0
        %614 = vmatmul.mubr.f32.gmra.mxu0 %v454
        %v615 = vpop.f32.mrf.mxu0
        %v616 = vadd.f32 0.0, %v615
        %v617 = vpop.f32.mrf.mxu0
        %618 = vmatprep.mubr.f32.mxu0 0.0
        %619 = vmatmul.mubr.f32.gmra.mxu0 %v457
        %v620 = vpop.f32.mrf.mxu0
        %v621 = vadd.f32 0.0, %v620
        %v622 = vpop.f32.mrf.mxu0
        %623 = vmatprep.mubr.f32.mxu0 0.0
        %624 = vmatmul.mubr.f32.gmra.mxu0 %v460
        %v625 = vpop.f32.mrf.mxu0
        %v626 = vadd.f32 0.0, %v625
        %v627 = vpop.f32.mrf.mxu0
        %628 = vmatprep.mubr.f32.mxu0 0.0
        %629 = vmatmul.mubr.f32.gmra.mxu0 %v463
        %v630 = vpop.f32.mrf.mxu0
        %v631 = vadd.f32 0.0, %v630
        %v632 = vpop.f32.mrf.mxu0
        %633 = vmatprep.mubr.f32.mxu0 0.0
        %634 = vmatmul.mubr.f32.gmra.mxu0 %v466
        %v635 = vpop.f32.mrf.mxu0
        %v636 = vadd.f32 0.0, %v635
        %v637 = vpop.f32.mrf.mxu0
        %638 = vmatprep.mubr.f32.mxu0 0.0
        %639 = vmatmul.mubr.f32.gmra.mxu0 %v469
        %v640 = vpop.f32.mrf.mxu0
        %v641 = vadd.f32 0.0, %v640
        %v642 = vpop.f32.mrf.mxu0
        %643 = vmatprep.mubr.f32.mxu0 0.0
        %644 = vmatmul.mubr.f32.gmra.mxu0 %v472
        %v645 = vpop.f32.mrf.mxu0
        %v646 = vadd.f32 0.0, %v645
        %v647 = vpop.f32.mrf.mxu0
        %648 = vmatprep.mubr.f32.mxu0 0.0
        %649 = vmatmul.mubr.f32.gmra.mxu0 %v475
        %v650 = vpop.f32.mrf.mxu0
        %v651 = vadd.f32 0.0, %v650
        %v652 = vpop.f32.mrf.mxu0
        %653 = vmatprep.mubr.f32.mxu0 0.0
        %654 = vmatmul.mubr.f32.gmra.mxu0 %v478
        %v655 = vpop.f32.mrf.mxu0
        %v656 = vadd.f32 0.0, %v655
        %v657 = vpop.f32.mrf.mxu0
        %658 = vmatprep.mubr.f32.mxu0 0.0
        %659 = vmatmul.mubr.f32.gmra.mxu0 %v481
        %v660 = vpop.f32.mrf.mxu0
        %v661 = vadd.f32 0.0, %v660
        %v662 = vpop.f32.mrf.mxu0
        %663 = vmatprep.mubr.f32.mxu0 0.0
        %664 = vmatmul.mubr.f32.gmra.mxu0 %v484
        %v665 = vpop.f32.mrf.mxu0
        %v666 = vadd.f32 0.0, %v665
        %v667 = vpop.f32.mrf.mxu0
        %668 = vmatprep.mubr.f32.mxu0 0.0
        %669 = vmatmul.mubr.f32.gmra.mxu0 %v487
        %v670 = vpop.f32.mrf.mxu0
        %v671 = vadd.f32 0.0, %v670
        %v672 = vpop.f32.mrf.mxu0
        %673 = vmatprep.mubr.f32.mxu0 0.0
        %674 = vmatmul.mubr.f32.gmra.mxu0 %v490
        %v675 = vpop.f32.mrf.mxu0
        %v676 = vadd.f32 0.0, %v675
        %v677 = vpop.f32.mrf.mxu0
        %678 = vmatprep.mubr.f32.mxu0 0.0
        %679 = vmatmul.mubr.f32.gmra.mxu0 %v493
        %v680 = vpop.f32.mrf.mxu0
        %v681 = vadd.f32 0.0, %v680
        %v682 = vpop.f32.mrf.mxu0
        %683 = vdwg.mxu0
        %v685 = vsel %vm422, %v385, 0
        %v688 = vsel %vm495, %v416, 0
        %690 = vmatprep.subr.mxu0 0.0
        %691 = vmatpush1.msra.mxu0 0.0
        %692 = vmatprep.subr.mxu0 0.0
        %693 = vmatpush1.msra.mxu0 0.0
        %694 = vmatprep.subr.mxu0 0.0
        %695 = vmatpush1.msra.mxu0 0.0
        %696 = vmatprep.subr.mxu0 0.0
        %697 = vmatpush1.msra.mxu0 0.0
        %698 = vmatprep.subr.mxu0 0.0
        %699 = vmatpush1.msra.mxu0 0.0
        %700 = vmatprep.subr.mxu0 0.0
        %701 = vmatpush1.msra.mxu0 0.0
        %702 = vmatprep.subr.mxu0 0.0
        %703 = vmatpush1.msra.mxu0 0.0
        %704 = vmatprep.subr.mxu0 0.0
        %705 = vmatpush1.msra.mxu0 0.0
        %706 = vmatprep.subr.mxu0 0.0
        %707 = vmatpush1.msra.mxu0 0.0
        %708 = vmatprep.subr.mxu0 0.0
        %709 = vmatpush1.msra.mxu0 0.0
        %710 = vmatprep.subr.mxu0 0.0
        %711 = vmatpush1.msra.mxu0 0.0
        %712 = vmatprep.subr.mxu0 0.0
        %713 = vmatpush1.msra.mxu0 0.0
        %714 = vmatprep.subr.mxu0 0.0
        %715 = vmatpush1.msra.mxu0 %v688
        %716 = vmatprep.subr.mxu0 0.0
        %717 = vmatpush1.msra.mxu0 %v415
        %718 = vmatprep.subr.mxu0 0.0
        %719 = vmatpush1.msra.mxu0 %v414
        %720 = vmatprep.subr.mxu0 0.0
        %721 = vmatpush1.msra.mxu0 %v413
        %722 = vmatprep.subr.mxu0 0.0
        %723 = vmatpush2.msra.mxu0 0.0
        %724 = vmatprep.subr.mxu0 0.0
        %725 = vmatpush2.msra.mxu0 0.0
        %726 = vmatprep.subr.mxu0 0.0
        %727 = vmatpush2.msra.mxu0 0.0
        %728 = vmatprep.subr.mxu0 0.0
        %729 = vmatpush2.msra.mxu0 0.0
        %730 = vmatprep.subr.mxu0 0.0
        %731 = vmatpush2.msra.mxu0 0.0
        %732 = vmatprep.subr.mxu0 0.0
        %733 = vmatpush2.msra.mxu0 0.0
        %734 = vmatprep.subr.mxu0 0.0
        %735 = vmatpush2.msra.mxu0 0.0
        %736 = vmatprep.subr.mxu0 0.0
        %737 = vmatpush2.msra.mxu0 0.0
        %738 = vmatprep.subr.mxu0 0.0
        %739 = vmatpush2.msra.mxu0 0.0
        %740 = vmatprep.subr.mxu0 0.0
        %741 = vmatpush2.msra.mxu0 0.0
        %742 = vmatprep.subr.mxu0 0.0
        %743 = vmatpush2.msra.mxu0 0.0
        %744 = vmatprep.subr.mxu0 0.0
        %745 = vmatpush2.msra.mxu0 0.0
        %746 = vmatprep.subr.mxu0 0.0
        %747 = vmatpush2.msra.mxu0 0.0
        %748 = vmatprep.subr.mxu0 0.0
        %749 = vmatpush2.msra.mxu0 0.0
        %750 = vmatprep.subr.mxu0 0.0
        %751 = vmatpush2.msra.mxu0 0.0
        %752 = vmatprep.subr.mxu0 0.0
        %753 = vmatpush2.msra.mxu0 0.0
        %754 = vmatprep.mubr.f32.mxu0 0.0
        %755 = vmatmul.mubr.f32.gmra.mxu0 %v685
        %v756 = vpop.f32.mrf.mxu0
        %v757 = vadd.f32 %v566, %v756
        %v758 = vpop.f32.mrf.mxu0
        %759 = vmatprep.mubr.f32.mxu0 0.0
        %760 = vmatmul.mubr.f32.gmra.mxu0 %v424
        %v761 = vpop.f32.mrf.mxu0
        %v762 = vadd.f32 %v571, %v761
        %v763 = vpop.f32.mrf.mxu0
        %764 = vmatprep.mubr.f32.mxu0 0.0
        %765 = vmatmul.mubr.f32.gmra.mxu0 %v427
        %v766 = vpop.f32.mrf.mxu0
        %v767 = vadd.f32 %v576, %v766
        %v768 = vpop.f32.mrf.mxu0
        %769 = vmatprep.mubr.f32.mxu0 0.0
        %770 = vmatmul.mubr.f32.gmra.mxu0 %v430
        %v771 = vpop.f32.mrf.mxu0
        %v772 = vadd.f32 %v581, %v771
        %v773 = vpop.f32.mrf.mxu0
        %774 = vmatprep.mubr.f32.mxu0 0.0
        %775 = vmatmul.mubr.f32.gmra.mxu0 %v433
        %v776 = vpop.f32.mrf.mxu0
        %v777 = vadd.f32 %v586, %v776
        %v778 = vpop.f32.mrf.mxu0
        %779 = vmatprep.mubr.f32.mxu0 0.0
        %780 = vmatmul.mubr.f32.gmra.mxu0 %v436
        %v781 = vpop.f32.mrf.mxu0
        %v782 = vadd.f32 %v591, %v781
        %v783 = vpop.f32.mrf.mxu0
        %784 = vmatprep.mubr.f32.mxu0 0.0
        %785 = vmatmul.mubr.f32.gmra.mxu0 %v439
        %v786 = vpop.f32.mrf.mxu0
        %v787 = vadd.f32 %v596, %v786
        %v788 = vpop.f32.mrf.mxu0
        %789 = vmatprep.mubr.f32.mxu0 0.0
        %790 = vmatmul.mubr.f32.gmra.mxu0 %v442
        %v791 = vpop.f32.mrf.mxu0
        %v792 = vadd.f32 %v601, %v791
        %v793 = vpop.f32.mrf.mxu0
        %794 = vmatprep.mubr.f32.mxu0 0.0
        %795 = vmatmul.mubr.f32.gmra.mxu0 %v445
        %v796 = vpop.f32.mrf.mxu0
        %v797 = vadd.f32 %v606, %v796
        %v798 = vpop.f32.mrf.mxu0
        %799 = vmatprep.mubr.f32.mxu0 0.0
        %800 = vmatmul.mubr.f32.gmra.mxu0 %v448
        %v801 = vpop.f32.mrf.mxu0
        %v802 = vadd.f32 %v611, %v801
        %v803 = vpop.f32.mrf.mxu0
        %804 = vmatprep.mubr.f32.mxu0 0.0
        %805 = vmatmul.mubr.f32.gmra.mxu0 %v451
        %v806 = vpop.f32.mrf.mxu0
        %v807 = vadd.f32 %v616, %v806
        %v808 = vpop.f32.mrf.mxu0
        %809 = vmatprep.mubr.f32.mxu0 0.0
        %810 = vmatmul.mubr.f32.gmra.mxu0 %v454
        %v811 = vpop.f32.mrf.mxu0
        %v812 = vadd.f32 %v621, %v811
        %v813 = vpop.f32.mrf.mxu0
        %814 = vmatprep.mubr.f32.mxu0 0.0
        %815 = vmatmul.mubr.f32.gmra.mxu0 %v457
        %v816 = vpop.f32.mrf.mxu0
        %v817 = vadd.f32 %v626, %v816
        %v818 = vpop.f32.mrf.mxu0
        %819 = vmatprep.mubr.f32.mxu0 0.0
        %820 = vmatmul.mubr.f32.gmra.mxu0 %v460
        %v821 = vpop.f32.mrf.mxu0
        %v822 = vadd.f32 %v631, %v821
        %v823 = vpop.f32.mrf.mxu0
        %824 = vmatprep.mubr.f32.mxu0 0.0
        %825 = vmatmul.mubr.f32.gmra.mxu0 %v463
        %v826 = vpop.f32.mrf.mxu0
        %v827 = vadd.f32 %v636, %v826
        %v828 = vpop.f32.mrf.mxu0
        %829 = vmatprep.mubr.f32.mxu0 0.0
        %830 = vmatmul.mubr.f32.gmra.mxu0 %v466
        %v831 = vpop.f32.mrf.mxu0
        %v832 = vadd.f32 %v641, %v831
        %v833 = vpop.f32.mrf.mxu0
        %834 = vmatprep.mubr.f32.mxu0 0.0
        %835 = vmatmul.mubr.f32.gmra.mxu0 %v469
        %v836 = vpop.f32.mrf.mxu0
        %v837 = vadd.f32 %v646, %v836
        %v838 = vpop.f32.mrf.mxu0
        %839 = vmatprep.mubr.f32.mxu0 0.0
        %840 = vmatmul.mubr.f32.gmra.mxu0 %v472
        %v841 = vpop.f32.mrf.mxu0
        %v842 = vadd.f32 %v651, %v841
        %v843 = vpop.f32.mrf.mxu0
        %844 = vmatprep.mubr.f32.mxu0 0.0
        %845 = vmatmul.mubr.f32.gmra.mxu0 %v475
        %v846 = vpop.f32.mrf.mxu0
        %v847 = vadd.f32 %v656, %v846
        %v848 = vpop.f32.mrf.mxu0
        %849 = vmatprep.mubr.f32.mxu0 0.0
        %850 = vmatmul.mubr.f32.gmra.mxu0 %v478
        %v851 = vpop.f32.mrf.mxu0
        %v852 = vadd.f32 %v661, %v851
        %v853 = vpop.f32.mrf.mxu0
        %854 = vmatprep.mubr.f32.mxu0 0.0
        %855 = vmatmul.mubr.f32.gmra.mxu0 %v481
        %v856 = vpop.f32.mrf.mxu0
        %v857 = vadd.f32 %v666, %v856
        %v858 = vpop.f32.mrf.mxu0
        %859 = vmatprep.mubr.f32.mxu0 0.0
        %860 = vmatmul.mubr.f32.gmra.mxu0 %v484
        %v861 = vpop.f32.mrf.mxu0
        %v862 = vadd.f32 %v671, %v861
        %v863 = vpop.f32.mrf.mxu0
        %864 = vmatprep.mubr.f32.mxu0 0.0
        %865 = vmatmul.mubr.f32.gmra.mxu0 %v487
        %v866 = vpop.f32.mrf.mxu0
        %v867 = vadd.f32 %v676, %v866
        %v868 = vpop.f32.mrf.mxu0
        %869 = vmatprep.mubr.f32.mxu0 0.0
        %870 = vmatmul.mubr.f32.gmra.mxu0 %v490
        %v871 = vpop.f32.mrf.mxu0
        %v872 = vadd.f32 %v681, %v871
        %v873 = vpop.f32.mrf.mxu0
        %874 = vdwg.mxu0
        %s875 = scalar_lea.vmem %s1, 64
        %v876 = vld [vmem:[%s875] sm:$0xff]
        %v877 = vld [vmem:[%s875 + $0x8] sm:$0xff]
        %v878 = vld [vmem:[%s875 + $0x10] sm:$0xff]
        %v879 = vld [vmem:[%s875 + $0x18] sm:$0xf]
        %v881 = vsel %vm422, %v410, 0
        %v884 = vsel %vm495, %v879, 0
        %886 = vmatprep.subr.mxu0 0.0
        %887 = vmatpush1.msra.mxu0 0.0
        %888 = vmatprep.subr.mxu0 0.0
        %889 = vmatpush1.msra.mxu0 0.0
        %890 = vmatprep.subr.mxu0 0.0
        %891 = vmatpush1.msra.mxu0 0.0
        %892 = vmatprep.subr.mxu0 0.0
        %893 = vmatpush1.msra.mxu0 0.0
        %894 = vmatprep.subr.mxu0 0.0
        %895 = vmatpush1.msra.mxu0 0.0
        %896 = vmatprep.subr.mxu0 0.0
        %897 = vmatpush1.msra.mxu0 0.0
        %898 = vmatprep.subr.mxu0 0.0
        %899 = vmatpush1.msra.mxu0 0.0
        %900 = vmatprep.subr.mxu0 0.0
        %901 = vmatpush1.msra.mxu0 0.0
        %902 = vmatprep.subr.mxu0 0.0
        %903 = vmatpush1.msra.mxu0 0.0
        %904 = vmatprep.subr.mxu0 0.0
        %905 = vmatpush1.msra.mxu0 0.0
        %906 = vmatprep.subr.mxu0 0.0
        %907 = vmatpush1.msra.mxu0 0.0
        %908 = vmatprep.subr.mxu0 0.0
        %909 = vmatpush1.msra.mxu0 0.0
        %910 = vmatprep.subr.mxu0 0.0
        %911 = vmatpush1.msra.mxu0 %v884
        %912 = vmatprep.subr.mxu0 0.0
        %913 = vmatpush1.msra.mxu0 %v878
        %914 = vmatprep.subr.mxu0 0.0
        %915 = vmatpush1.msra.mxu0 %v877
        %916 = vmatprep.subr.mxu0 0.0
        %917 = vmatpush1.msra.mxu0 %v876
        %918 = vmatprep.subr.mxu0 0.0
        %919 = vmatpush2.msra.mxu0 0.0
        %920 = vmatprep.subr.mxu0 0.0
        %921 = vmatpush2.msra.mxu0 0.0
        %922 = vmatprep.subr.mxu0 0.0
        %923 = vmatpush2.msra.mxu0 0.0
        %924 = vmatprep.subr.mxu0 0.0
        %925 = vmatpush2.msra.mxu0 0.0
        %926 = vmatprep.subr.mxu0 0.0
        %927 = vmatpush2.msra.mxu0 0.0
        %928 = vmatprep.subr.mxu0 0.0
        %929 = vmatpush2.msra.mxu0 0.0
        %930 = vmatprep.subr.mxu0 0.0
        %931 = vmatpush2.msra.mxu0 0.0
        %932 = vmatprep.subr.mxu0 0.0
        %933 = vmatpush2.msra.mxu0 0.0
        %934 = vmatprep.subr.mxu0 0.0
        %935 = vmatpush2.msra.mxu0 0.0
        %936 = vmatprep.subr.mxu0 0.0
        %937 = vmatpush2.msra.mxu0 0.0
        %938 = vmatprep.subr.mxu0 0.0
        %939 = vmatpush2.msra.mxu0 0.0
        %940 = vmatprep.subr.mxu0 0.0
        %941 = vmatpush2.msra.mxu0 0.0
        %942 = vmatprep.subr.mxu0 0.0
        %943 = vmatpush2.msra.mxu0 0.0
        %944 = vmatprep.subr.mxu0 0.0
        %945 = vmatpush2.msra.mxu0 0.0
        %946 = vmatprep.subr.mxu0 0.0
        %947 = vmatpush2.msra.mxu0 0.0
        %948 = vmatprep.subr.mxu0 0.0
        %949 = vmatpush2.msra.mxu0 0.0
        %950 = vmatprep.mubr.f32.mxu0 0.0
        %951 = vmatmul.mubr.f32.gmra.mxu0 %v427
        %v952 = vpop.f32.mrf.mxu0
        %v953 = vadd.f32 0.0, %v952
        %v954 = vpop.f32.mrf.mxu0
        %955 = vmatprep.mubr.f32.mxu0 0.0
        %956 = vmatmul.mubr.f32.gmra.mxu0 %v430
        %v957 = vpop.f32.mrf.mxu0
        %v958 = vadd.f32 0.0, %v957
        %v959 = vpop.f32.mrf.mxu0
        %960 = vmatprep.mubr.f32.mxu0 0.0
        %961 = vmatmul.mubr.f32.gmra.mxu0 %v433
        %v962 = vpop.f32.mrf.mxu0
        %v963 = vadd.f32 0.0, %v962
        %v964 = vpop.f32.mrf.mxu0
        %965 = vmatprep.mubr.f32.mxu0 0.0
        %966 = vmatmul.mubr.f32.gmra.mxu0 %v436
        %v967 = vpop.f32.mrf.mxu0
        %v968 = vadd.f32 0.0, %v967
        %v969 = vpop.f32.mrf.mxu0
        %970 = vmatprep.mubr.f32.mxu0 0.0
        %971 = vmatmul.mubr.f32.gmra.mxu0 %v439
        %v972 = vpop.f32.mrf.mxu0
        %v973 = vadd.f32 0.0, %v972
        %v974 = vpop.f32.mrf.mxu0
        %975 = vmatprep.mubr.f32.mxu0 0.0
        %976 = vmatmul.mubr.f32.gmra.mxu0 %v442
        %v977 = vpop.f32.mrf.mxu0
        %v978 = vadd.f32 0.0, %v977
        %v979 = vpop.f32.mrf.mxu0
        %980 = vmatprep.mubr.f32.mxu0 0.0
        %981 = vmatmul.mubr.f32.gmra.mxu0 %v445
        %v982 = vpop.f32.mrf.mxu0
        %v983 = vadd.f32 0.0, %v982
        %v984 = vpop.f32.mrf.mxu0
        %985 = vmatprep.mubr.f32.mxu0 0.0
        %986 = vmatmul.mubr.f32.gmra.mxu0 %v448
        %v987 = vpop.f32.mrf.mxu0
        %v988 = vadd.f32 0.0, %v987
        %v989 = vpop.f32.mrf.mxu0
        %990 = vmatprep.mubr.f32.mxu0 0.0
        %991 = vmatmul.mubr.f32.gmra.mxu0 %v451
        %v992 = vpop.f32.mrf.mxu0
        %v993 = vadd.f32 0.0, %v992
        %v994 = vpop.f32.mrf.mxu0
        %995 = vmatprep.mubr.f32.mxu0 0.0
        %996 = vmatmul.mubr.f32.gmra.mxu0 %v454
        %v997 = vpop.f32.mrf.mxu0
        %v998 = vadd.f32 0.0, %v997
        %v999 = vpop.f32.mrf.mxu0
        %1000 = vmatprep.mubr.f32.mxu0 0.0
        %1001 = vmatmul.mubr.f32.gmra.mxu0 %v457
        %v1002 = vpop.f32.mrf.mxu0
        %v1003 = vadd.f32 0.0, %v1002
        %v1004 = vpop.f32.mrf.mxu0
        %1005 = vmatprep.mubr.f32.mxu0 0.0
        %1006 = vmatmul.mubr.f32.gmra.mxu0 %v460
        %v1007 = vpop.f32.mrf.mxu0
        %v1008 = vadd.f32 0.0, %v1007
        %v1009 = vpop.f32.mrf.mxu0
        %1010 = vmatprep.mubr.f32.mxu0 0.0
        %1011 = vmatmul.mubr.f32.gmra.mxu0 %v463
        %v1012 = vpop.f32.mrf.mxu0
        %v1013 = vadd.f32 0.0, %v1012
        %v1014 = vpop.f32.mrf.mxu0
        %1015 = vmatprep.mubr.f32.mxu0 0.0
        %1016 = vmatmul.mubr.f32.gmra.mxu0 %v466
        %v1017 = vpop.f32.mrf.mxu0
        %v1018 = vadd.f32 0.0, %v1017
        %v1019 = vpop.f32.mrf.mxu0
        %1020 = vmatprep.mubr.f32.mxu0 0.0
        %1021 = vmatmul.mubr.f32.gmra.mxu0 %v469
        %v1022 = vpop.f32.mrf.mxu0
        %v1023 = vadd.f32 0.0, %v1022
        %v1024 = vpop.f32.mrf.mxu0
        %1025 = vmatprep.mubr.f32.mxu0 0.0
        %1026 = vmatmul.mubr.f32.gmra.mxu0 %v472
        %v1027 = vpop.f32.mrf.mxu0
        %v1028 = vadd.f32 0.0, %v1027
        %v1029 = vpop.f32.mrf.mxu0
        %1030 = vmatprep.mubr.f32.mxu0 0.0
        %1031 = vmatmul.mubr.f32.gmra.mxu0 %v475
        %v1032 = vpop.f32.mrf.mxu0
        %v1033 = vadd.f32 0.0, %v1032
        %v1034 = vpop.f32.mrf.mxu0
        %1035 = vmatprep.mubr.f32.mxu0 0.0
        %1036 = vmatmul.mubr.f32.gmra.mxu0 %v478
        %v1037 = vpop.f32.mrf.mxu0
        %v1038 = vadd.f32 0.0, %v1037
        %v1039 = vpop.f32.mrf.mxu0
        %1040 = vmatprep.mubr.f32.mxu0 0.0
        %1041 = vmatmul.mubr.f32.gmra.mxu0 %v481
        %v1042 = vpop.f32.mrf.mxu0
        %v1043 = vadd.f32 0.0, %v1042
        %v1044 = vpop.f32.mrf.mxu0
        %1045 = vmatprep.mubr.f32.mxu0 0.0
        %1046 = vmatmul.mubr.f32.gmra.mxu0 %v484
        %v1047 = vpop.f32.mrf.mxu0
        %v1048 = vadd.f32 0.0, %v1047
        %v1049 = vpop.f32.mrf.mxu0
        %1050 = vmatprep.mubr.f32.mxu0 0.0
        %1051 = vmatmul.mubr.f32.gmra.mxu0 %v487
        %v1052 = vpop.f32.mrf.mxu0
        %v1053 = vadd.f32 0.0, %v1052
        %v1054 = vpop.f32.mrf.mxu0
        %1055 = vmatprep.mubr.f32.mxu0 0.0
        %1056 = vmatmul.mubr.f32.gmra.mxu0 %v490
        %v1057 = vpop.f32.mrf.mxu0
        %v1058 = vadd.f32 0.0, %v1057
        %v1059 = vpop.f32.mrf.mxu0
        %1060 = vmatprep.mubr.f32.mxu0 0.0
        %1061 = vmatmul.mubr.f32.gmra.mxu0 %v493
        %v1062 = vpop.f32.mrf.mxu0
        %v1063 = vadd.f32 0.0, %v1062
        %v1064 = vpop.f32.mrf.mxu0
        %1065 = vmatprep.mubr.f32.mxu0 0.0
        %1066 = vmatmul.mubr.f32.gmra.mxu0 %v881
        %v1067 = vpop.f32.mrf.mxu0
        %v1068 = vadd.f32 0.0, %v1067
        %v1069 = vpop.f32.mrf.mxu0
        %1070 = vdwg.mxu0
        %v1071 = vadd.f32 %v757, %v953
        %v1072 = vadd.f32 %v762, %v958
        %v1073 = vadd.f32 %v767, %v963
        %v1074 = vadd.f32 %v772, %v968
        %v1075 = vadd.f32 %v777, %v973
        %v1076 = vadd.f32 %v782, %v978
        %v1077 = vadd.f32 %v787, %v983
        %v1078 = vadd.f32 %v792, %v988
        %v1079 = vadd.f32 %v797, %v993
        %v1080 = vadd.f32 %v802, %v998
        %v1081 = vadd.f32 %v807, %v1003
        %v1082 = vadd.f32 %v812, %v1008
        %v1083 = vadd.f32 %v817, %v1013
        %v1084 = vadd.f32 %v822, %v1018
        %v1085 = vadd.f32 %v827, %v1023
        %v1086 = vadd.f32 %v832, %v1028
        %v1087 = vadd.f32 %v837, %v1033
        %v1088 = vadd.f32 %v842, %v1038
        %v1089 = vadd.f32 %v847, %v1043
        %v1090 = vadd.f32 %v852, %v1048
        %v1091 = vadd.f32 %v857, %v1053
        %v1092 = vadd.f32 %v862, %v1058
        %v1093 = vadd.f32 %v867, %v1063
        %v1094 = vadd.f32 %v872, %v1068
        %s1095 = scalar_lea.vmem %s1, 96
        %v1096 = vld [vmem:[%s1095] sm:$0xff]
        %v1097 = vld [vmem:[%s1095 + $0x8] sm:$0xff]
        %v1098 = vld [vmem:[%s1095 + $0x10] sm:$0xff]
        %v1099 = vld [vmem:[%s1095 + $0x18] sm:$0xf]
        %v1101 = vsel %vm422, %v411, 0
        %v1104 = vsel %vm495, %v1099, 0
        %1106 = vmatprep.subr.mxu0 0.0
        %1107 = vmatpush1.msra.mxu0 0.0
        %1108 = vmatprep.subr.mxu0 0.0
        %1109 = vmatpush1.msra.mxu0 0.0
        %1110 = vmatprep.subr.mxu0 0.0
        %1111 = vmatpush1.msra.mxu0 0.0
        %1112 = vmatprep.subr.mxu0 0.0
        %1113 = vmatpush1.msra.mxu0 0.0
        %1114 = vmatprep.subr.mxu0 0.0
        %1115 = vmatpush1.msra.mxu0 0.0
        %1116 = vmatprep.subr.mxu0 0.0
        %1117 = vmatpush1.msra.mxu0 0.0
        %1118 = vmatprep.subr.mxu0 0.0
        %1119 = vmatpush1.msra.mxu0 0.0
        %1120 = vmatprep.subr.mxu0 0.0
        %1121 = vmatpush1.msra.mxu0 0.0
        %1122 = vmatprep.subr.mxu0 0.0
        %1123 = vmatpush1.msra.mxu0 0.0
        %1124 = vmatprep.subr.mxu0 0.0
        %1125 = vmatpush1.msra.mxu0 0.0
        %1126 = vmatprep.subr.mxu0 0.0
        %1127 = vmatpush1.msra.mxu0 0.0
        %1128 = vmatprep.subr.mxu0 0.0
        %1129 = vmatpush1.msra.mxu0 0.0
        %1130 = vmatprep.subr.mxu0 0.0
        %1131 = vmatpush1.msra.mxu0 %v1104
        %1132 = vmatprep.subr.mxu0 0.0
        %1133 = vmatpush1.msra.mxu0 %v1098
        %1134 = vmatprep.subr.mxu0 0.0
        %1135 = vmatpush1.msra.mxu0 %v1097
        %1136 = vmatprep.subr.mxu0 0.0
        %1137 = vmatpush1.msra.mxu0 %v1096
        %1138 = vmatprep.subr.mxu0 0.0
        %1139 = vmatpush2.msra.mxu0 0.0
        %1140 = vmatprep.subr.mxu0 0.0
        %1141 = vmatpush2.msra.mxu0 0.0
        %1142 = vmatprep.subr.mxu0 0.0
        %1143 = vmatpush2.msra.mxu0 0.0
        %1144 = vmatprep.subr.mxu0 0.0
        %1145 = vmatpush2.msra.mxu0 0.0
        %1146 = vmatprep.subr.mxu0 0.0
        %1147 = vmatpush2.msra.mxu0 0.0
        %1148 = vmatprep.subr.mxu0 0.0
        %1149 = vmatpush2.msra.mxu0 0.0
        %1150 = vmatprep.subr.mxu0 0.0
        %1151 = vmatpush2.msra.mxu0 0.0
        %1152 = vmatprep.subr.mxu0 0.0
        %1153 = vmatpush2.msra.mxu0 0.0
        %1154 = vmatprep.subr.mxu0 0.0
        %1155 = vmatpush2.msra.mxu0 0.0
        %1156 = vmatprep.subr.mxu0 0.0
        %1157 = vmatpush2.msra.mxu0 0.0
        %1158 = vmatprep.subr.mxu0 0.0
        %1159 = vmatpush2.msra.mxu0 0.0
        %1160 = vmatprep.subr.mxu0 0.0
        %1161 = vmatpush2.msra.mxu0 0.0
        %1162 = vmatprep.subr.mxu0 0.0
        %1163 = vmatpush2.msra.mxu0 0.0
        %1164 = vmatprep.subr.mxu0 0.0
        %1165 = vmatpush2.msra.mxu0 0.0
        %1166 = vmatprep.subr.mxu0 0.0
        %1167 = vmatpush2.msra.mxu0 0.0
        %1168 = vmatprep.subr.mxu0 0.0
        %1169 = vmatpush2.msra.mxu0 0.0
        %1170 = vmatprep.mubr.f32.mxu0 0.0
        %1171 = vmatmul.mubr.f32.gmra.mxu0 %v430
        %v1172 = vpop.f32.mrf.mxu0
        %v1173 = vadd.f32 0.0, %v1172
        %v1174 = vpop.f32.mrf.mxu0
        %1175 = vmatprep.mubr.f32.mxu0 0.0
        %1176 = vmatmul.mubr.f32.gmra.mxu0 %v433
        %v1177 = vpop.f32.mrf.mxu0
        %v1178 = vadd.f32 0.0, %v1177
        %v1179 = vpop.f32.mrf.mxu0
        %1180 = vmatprep.mubr.f32.mxu0 0.0
        %1181 = vmatmul.mubr.f32.gmra.mxu0 %v436
        %v1182 = vpop.f32.mrf.mxu0
        %v1183 = vadd.f32 0.0, %v1182
        %v1184 = vpop.f32.mrf.mxu0
        %1185 = vmatprep.mubr.f32.mxu0 0.0
        %1186 = vmatmul.mubr.f32.gmra.mxu0 %v439
        %v1187 = vpop.f32.mrf.mxu0
        %v1188 = vadd.f32 0.0, %v1187
        %v1189 = vpop.f32.mrf.mxu0
        %1190 = vmatprep.mubr.f32.mxu0 0.0
        %1191 = vmatmul.mubr.f32.gmra.mxu0 %v442
        %v1192 = vpop.f32.mrf.mxu0
        %v1193 = vadd.f32 0.0, %v1192
        %v1194 = vpop.f32.mrf.mxu0
        %1195 = vmatprep.mubr.f32.mxu0 0.0
        %1196 = vmatmul.mubr.f32.gmra.mxu0 %v445
        %v1197 = vpop.f32.mrf.mxu0
        %v1198 = vadd.f32 0.0, %v1197
        %v1199 = vpop.f32.mrf.mxu0
        %1200 = vmatprep.mubr.f32.mxu0 0.0
        %1201 = vmatmul.mubr.f32.gmra.mxu0 %v448
        %v1202 = vpop.f32.mrf.mxu0
        %v1203 = vadd.f32 0.0, %v1202
        %v1204 = vpop.f32.mrf.mxu0
        %1205 = vmatprep.mubr.f32.mxu0 0.0
        %1206 = vmatmul.mubr.f32.gmra.mxu0 %v451
        %v1207 = vpop.f32.mrf.mxu0
        %v1208 = vadd.f32 0.0, %v1207
        %v1209 = vpop.f32.mrf.mxu0
        %1210 = vmatprep.mubr.f32.mxu0 0.0
        %1211 = vmatmul.mubr.f32.gmra.mxu0 %v454
        %v1212 = vpop.f32.mrf.mxu0
        %v1213 = vadd.f32 0.0, %v1212
        %v1214 = vpop.f32.mrf.mxu0
        %1215 = vmatprep.mubr.f32.mxu0 0.0
        %1216 = vmatmul.mubr.f32.gmra.mxu0 %v457
        %v1217 = vpop.f32.mrf.mxu0
        %v1218 = vadd.f32 0.0, %v1217
        %v1219 = vpop.f32.mrf.mxu0
        %1220 = vmatprep.mubr.f32.mxu0 0.0
        %1221 = vmatmul.mubr.f32.gmra.mxu0 %v460
        %v1222 = vpop.f32.mrf.mxu0
        %v1223 = vadd.f32 0.0, %v1222
        %v1224 = vpop.f32.mrf.mxu0
        %1225 = vmatprep.mubr.f32.mxu0 0.0
        %1226 = vmatmul.mubr.f32.gmra.mxu0 %v463
        %v1227 = vpop.f32.mrf.mxu0
        %v1228 = vadd.f32 0.0, %v1227
        %v1229 = vpop.f32.mrf.mxu0
        %1230 = vmatprep.mubr.f32.mxu0 0.0
        %1231 = vmatmul.mubr.f32.gmra.mxu0 %v466
        %v1232 = vpop.f32.mrf.mxu0
        %v1233 = vadd.f32 0.0, %v1232
        %v1234 = vpop.f32.mrf.mxu0
        %1235 = vmatprep.mubr.f32.mxu0 0.0
        %1236 = vmatmul.mubr.f32.gmra.mxu0 %v469
        %v1237 = vpop.f32.mrf.mxu0
        %v1238 = vadd.f32 0.0, %v1237
        %v1239 = vpop.f32.mrf.mxu0
        %1240 = vmatprep.mubr.f32.mxu0 0.0
        %1241 = vmatmul.mubr.f32.gmra.mxu0 %v472
        %v1242 = vpop.f32.mrf.mxu0
        %v1243 = vadd.f32 0.0, %v1242
        %v1244 = vpop.f32.mrf.mxu0
        %1245 = vmatprep.mubr.f32.mxu0 0.0
        %1246 = vmatmul.mubr.f32.gmra.mxu0 %v475
        %v1247 = vpop.f32.mrf.mxu0
        %v1248 = vadd.f32 0.0, %v1247
        %v1249 = vpop.f32.mrf.mxu0
        %1250 = vmatprep.mubr.f32.mxu0 0.0
        %1251 = vmatmul.mubr.f32.gmra.mxu0 %v478
        %v1252 = vpop.f32.mrf.mxu0
        %v1253 = vadd.f32 0.0, %v1252
        %v1254 = vpop.f32.mrf.mxu0
        %1255 = vmatprep.mubr.f32.mxu0 0.0
        %1256 = vmatmul.mubr.f32.gmra.mxu0 %v481
        %v1257 = vpop.f32.mrf.mxu0
        %v1258 = vadd.f32 0.0, %v1257
        %v1259 = vpop.f32.mrf.mxu0
        %1260 = vmatprep.mubr.f32.mxu0 0.0
        %1261 = vmatmul.mubr.f32.gmra.mxu0 %v484
        %v1262 = vpop.f32.mrf.mxu0
        %v1263 = vadd.f32 0.0, %v1262
        %v1264 = vpop.f32.mrf.mxu0
        %1265 = vmatprep.mubr.f32.mxu0 0.0
        %1266 = vmatmul.mubr.f32.gmra.mxu0 %v487
        %v1267 = vpop.f32.mrf.mxu0
        %v1268 = vadd.f32 0.0, %v1267
        %v1269 = vpop.f32.mrf.mxu0
        %1270 = vmatprep.mubr.f32.mxu0 0.0
        %1271 = vmatmul.mubr.f32.gmra.mxu0 %v490
        %v1272 = vpop.f32.mrf.mxu0
        %v1273 = vadd.f32 0.0, %v1272
        %v1274 = vpop.f32.mrf.mxu0
        %1275 = vmatprep.mubr.f32.mxu0 0.0
        %1276 = vmatmul.mubr.f32.gmra.mxu0 %v493
        %v1277 = vpop.f32.mrf.mxu0
        %v1278 = vadd.f32 0.0, %v1277
        %v1279 = vpop.f32.mrf.mxu0
        %1280 = vmatprep.mubr.f32.mxu0 0.0
        %1281 = vmatmul.mubr.f32.gmra.mxu0 %v881
        %v1282 = vpop.f32.mrf.mxu0
        %v1283 = vadd.f32 0.0, %v1282
        %v1284 = vpop.f32.mrf.mxu0
        %1285 = vmatprep.mubr.f32.mxu0 0.0
        %1286 = vmatmul.mubr.f32.gmra.mxu0 %v1101
        %v1287 = vpop.f32.mrf.mxu0
        %v1288 = vadd.f32 0.0, %v1287
        %v1289 = vpop.f32.mrf.mxu0
        %1290 = vdwg.mxu0
        %v1291 = vadd.f32 %v1071, %v1173
        %v1292 = vadd.f32 %v1072, %v1178
        %v1293 = vadd.f32 %v1073, %v1183
        %v1294 = vadd.f32 %v1074, %v1188
        %v1295 = vadd.f32 %v1075, %v1193
        %v1296 = vadd.f32 %v1076, %v1198
        %v1297 = vadd.f32 %v1077, %v1203
        %v1298 = vadd.f32 %v1078, %v1208
        %v1299 = vadd.f32 %v1079, %v1213
        %v1300 = vadd.f32 %v1080, %v1218
        %v1301 = vadd.f32 %v1081, %v1223
        %v1302 = vadd.f32 %v1082, %v1228
        %v1303 = vadd.f32 %v1083, %v1233
        %v1304 = vadd.f32 %v1084, %v1238
        %v1305 = vadd.f32 %v1085, %v1243
        %v1306 = vadd.f32 %v1086, %v1248
        %v1307 = vadd.f32 %v1087, %v1253
        %v1308 = vadd.f32 %v1088, %v1258
        %v1309 = vadd.f32 %v1089, %v1263
        %v1310 = vadd.f32 %v1090, %v1268
        %v1311 = vadd.f32 %v1091, %v1273
        %v1312 = vadd.f32 %v1092, %v1278
        %v1313 = vadd.f32 %v1093, %v1283
        %v1314 = vadd.f32 %v1094, %v1288
        %s1315 = scalar_lea.vmem %s1, 128
        %v1316 = vld [vmem:[%s1315] sm:$0xff]
        %v1317 = vld [vmem:[%s1315 + $0x8] sm:$0xff]
        %v1318 = vld [vmem:[%s1315 + $0x10] sm:$0xff]
        %v1319 = vld [vmem:[%s1315 + $0x18] sm:$0xf]
        %v1321 = vsel %vm422, %v412, 0
        %v1324 = vsel %vm495, %v1319, 0
        %1326 = vmatprep.subr.mxu0 0.0
        %1327 = vmatpush1.msra.mxu0 0.0
        %1328 = vmatprep.subr.mxu0 0.0
        %1329 = vmatpush1.msra.mxu0 0.0
        %1330 = vmatprep.subr.mxu0 0.0
        %1331 = vmatpush1.msra.mxu0 0.0
        %1332 = vmatprep.subr.mxu0 0.0
        %1333 = vmatpush1.msra.mxu0 0.0
        %1334 = vmatprep.subr.mxu0 0.0
        %1335 = vmatpush1.msra.mxu0 0.0
        %1336 = vmatprep.subr.mxu0 0.0
        %1337 = vmatpush1.msra.mxu0 0.0
        %1338 = vmatprep.subr.mxu0 0.0
        %1339 = vmatpush1.msra.mxu0 0.0
        %1340 = vmatprep.subr.mxu0 0.0
        %1341 = vmatpush1.msra.mxu0 0.0
        %1342 = vmatprep.subr.mxu0 0.0
        %1343 = vmatpush1.msra.mxu0 0.0
        %1344 = vmatprep.subr.mxu0 0.0
        %1345 = vmatpush1.msra.mxu0 0.0
        %1346 = vmatprep.subr.mxu0 0.0
        %1347 = vmatpush1.msra.mxu0 0.0
        %1348 = vmatprep.subr.mxu0 0.0
        %1349 = vmatpush1.msra.mxu0 0.0
        %1350 = vmatprep.subr.mxu0 0.0
        %1351 = vmatpush1.msra.mxu0 %v1324
        %1352 = vmatprep.subr.mxu0 0.0
        %1353 = vmatpush1.msra.mxu0 %v1318
        %1354 = vmatprep.subr.mxu0 0.0
        %1355 = vmatpush1.msra.mxu0 %v1317
        %1356 = vmatprep.subr.mxu0 0.0
        %1357 = vmatpush1.msra.mxu0 %v1316
        %1358 = vmatprep.subr.mxu0 0.0
        %1359 = vmatpush2.msra.mxu0 0.0
        %1360 = vmatprep.subr.mxu0 0.0
        %1361 = vmatpush2.msra.mxu0 0.0
        %1362 = vmatprep.subr.mxu0 0.0
        %1363 = vmatpush2.msra.mxu0 0.0
        %1364 = vmatprep.subr.mxu0 0.0
        %1365 = vmatpush2.msra.mxu0 0.0
        %1366 = vmatprep.subr.mxu0 0.0
        %1367 = vmatpush2.msra.mxu0 0.0
        %1368 = vmatprep.subr.mxu0 0.0
        %1369 = vmatpush2.msra.mxu0 0.0
        %1370 = vmatprep.subr.mxu0 0.0
        %1371 = vmatpush2.msra.mxu0 0.0
        %1372 = vmatprep.subr.mxu0 0.0
        %1373 = vmatpush2.msra.mxu0 0.0
        %1374 = vmatprep.subr.mxu0 0.0
        %1375 = vmatpush2.msra.mxu0 0.0
        %1376 = vmatprep.subr.mxu0 0.0
        %1377 = vmatpush2.msra.mxu0 0.0
        %1378 = vmatprep.subr.mxu0 0.0
        %1379 = vmatpush2.msra.mxu0 0.0
        %1380 = vmatprep.subr.mxu0 0.0
        %1381 = vmatpush2.msra.mxu0 0.0
        %1382 = vmatprep.subr.mxu0 0.0
        %1383 = vmatpush2.msra.mxu0 0.0
        %1384 = vmatprep.subr.mxu0 0.0
        %1385 = vmatpush2.msra.mxu0 0.0
        %1386 = vmatprep.subr.mxu0 0.0
        %1387 = vmatpush2.msra.mxu0 0.0
        %1388 = vmatprep.subr.mxu0 0.0
        %1389 = vmatpush2.msra.mxu0 0.0
        %1390 = vmatprep.mubr.f32.mxu0 0.0
        %1391 = vmatmul.mubr.f32.gmra.mxu0 %v433
        %v1392 = vpop.f32.mrf.mxu0
        %v1393 = vadd.f32 0.0, %v1392
        %v1394 = vpop.f32.mrf.mxu0
        %1395 = vmatprep.mubr.f32.mxu0 0.0
        %1396 = vmatmul.mubr.f32.gmra.mxu0 %v436
        %v1397 = vpop.f32.mrf.mxu0
        %v1398 = vadd.f32 0.0, %v1397
        %v1399 = vpop.f32.mrf.mxu0
        %1400 = vmatprep.mubr.f32.mxu0 0.0
        %1401 = vmatmul.mubr.f32.gmra.mxu0 %v439
        %v1402 = vpop.f32.mrf.mxu0
        %v1403 = vadd.f32 0.0, %v1402
        %v1404 = vpop.f32.mrf.mxu0
        %1405 = vmatprep.mubr.f32.mxu0 0.0
        %1406 = vmatmul.mubr.f32.gmra.mxu0 %v442
        %v1407 = vpop.f32.mrf.mxu0
        %v1408 = vadd.f32 0.0, %v1407
        %v1409 = vpop.f32.mrf.mxu0
        %1410 = vmatprep.mubr.f32.mxu0 0.0
        %1411 = vmatmul.mubr.f32.gmra.mxu0 %v445
        %v1412 = vpop.f32.mrf.mxu0
        %v1413 = vadd.f32 0.0, %v1412
        %v1414 = vpop.f32.mrf.mxu0
        %1415 = vmatprep.mubr.f32.mxu0 0.0
        %1416 = vmatmul.mubr.f32.gmra.mxu0 %v448
        %v1417 = vpop.f32.mrf.mxu0
        %v1418 = vadd.f32 0.0, %v1417
        %v1419 = vpop.f32.mrf.mxu0
        %1420 = vmatprep.mubr.f32.mxu0 0.0
        %1421 = vmatmul.mubr.f32.gmra.mxu0 %v451
        %v1422 = vpop.f32.mrf.mxu0
        %v1423 = vadd.f32 0.0, %v1422
        %v1424 = vpop.f32.mrf.mxu0
        %1425 = vmatprep.mubr.f32.mxu0 0.0
        %1426 = vmatmul.mubr.f32.gmra.mxu0 %v454
        %v1427 = vpop.f32.mrf.mxu0
        %v1428 = vadd.f32 0.0, %v1427
        %v1429 = vpop.f32.mrf.mxu0
        %1430 = vmatprep.mubr.f32.mxu0 0.0
        %1431 = vmatmul.mubr.f32.gmra.mxu0 %v457
        %v1432 = vpop.f32.mrf.mxu0
        %v1433 = vadd.f32 0.0, %v1432
        %v1434 = vpop.f32.mrf.mxu0
        %1435 = vmatprep.mubr.f32.mxu0 0.0
        %1436 = vmatmul.mubr.f32.gmra.mxu0 %v460
        %v1437 = vpop.f32.mrf.mxu0
        %v1438 = vadd.f32 0.0, %v1437
        %v1439 = vpop.f32.mrf.mxu0
        %1440 = vmatprep.mubr.f32.mxu0 0.0
        %1441 = vmatmul.mubr.f32.gmra.mxu0 %v463
        %v1442 = vpop.f32.mrf.mxu0
        %v1443 = vadd.f32 0.0, %v1442
        %v1444 = vpop.f32.mrf.mxu0
        %1445 = vmatprep.mubr.f32.mxu0 0.0
        %1446 = vmatmul.mubr.f32.gmra.mxu0 %v466
        %v1447 = vpop.f32.mrf.mxu0
        %v1448 = vadd.f32 0.0, %v1447
        %v1449 = vpop.f32.mrf.mxu0
        %1450 = vmatprep.mubr.f32.mxu0 0.0
        %1451 = vmatmul.mubr.f32.gmra.mxu0 %v469
        %v1452 = vpop.f32.mrf.mxu0
        %v1453 = vadd.f32 0.0, %v1452
        %v1454 = vpop.f32.mrf.mxu0
        %1455 = vmatprep.mubr.f32.mxu0 0.0
        %1456 = vmatmul.mubr.f32.gmra.mxu0 %v472
        %v1457 = vpop.f32.mrf.mxu0
        %v1458 = vadd.f32 0.0, %v1457
        %v1459 = vpop.f32.mrf.mxu0
        %1460 = vmatprep.mubr.f32.mxu0 0.0
        %1461 = vmatmul.mubr.f32.gmra.mxu0 %v475
        %v1462 = vpop.f32.mrf.mxu0
        %v1463 = vadd.f32 0.0, %v1462
        %v1464 = vpop.f32.mrf.mxu0
        %1465 = vmatprep.mubr.f32.mxu0 0.0
        %1466 = vmatmul.mubr.f32.gmra.mxu0 %v478
        %v1467 = vpop.f32.mrf.mxu0
        %v1468 = vadd.f32 0.0, %v1467
        %v1469 = vpop.f32.mrf.mxu0
        %1470 = vmatprep.mubr.f32.mxu0 0.0
        %1471 = vmatmul.mubr.f32.gmra.mxu0 %v481
        %v1472 = vpop.f32.mrf.mxu0
        %v1473 = vadd.f32 0.0, %v1472
        %v1474 = vpop.f32.mrf.mxu0
        %1475 = vmatprep.mubr.f32.mxu0 0.0
        %1476 = vmatmul.mubr.f32.gmra.mxu0 %v484
        %v1477 = vpop.f32.mrf.mxu0
        %v1478 = vadd.f32 0.0, %v1477
        %v1479 = vpop.f32.mrf.mxu0
        %1480 = vmatprep.mubr.f32.mxu0 0.0
        %1481 = vmatmul.mubr.f32.gmra.mxu0 %v487
        %v1482 = vpop.f32.mrf.mxu0
        %v1483 = vadd.f32 0.0, %v1482
        %v1484 = vpop.f32.mrf.mxu0
        %1485 = vmatprep.mubr.f32.mxu0 0.0
        %1486 = vmatmul.mubr.f32.gmra.mxu0 %v490
        %v1487 = vpop.f32.mrf.mxu0
        %v1488 = vadd.f32 0.0, %v1487
        %v1489 = vpop.f32.mrf.mxu0
        %1490 = vmatprep.mubr.f32.mxu0 0.0
        %1491 = vmatmul.mubr.f32.gmra.mxu0 %v493
        %v1492 = vpop.f32.mrf.mxu0
        %v1493 = vadd.f32 0.0, %v1492
        %v1494 = vpop.f32.mrf.mxu0
        %1495 = vmatprep.mubr.f32.mxu0 0.0
        %1496 = vmatmul.mubr.f32.gmra.mxu0 %v881
        %v1497 = vpop.f32.mrf.mxu0
        %v1498 = vadd.f32 0.0, %v1497
        %v1499 = vpop.f32.mrf.mxu0
        %1500 = vmatprep.mubr.f32.mxu0 0.0
        %1501 = vmatmul.mubr.f32.gmra.mxu0 %v1101
        %v1502 = vpop.f32.mrf.mxu0
        %v1503 = vadd.f32 0.0, %v1502
        %v1504 = vpop.f32.mrf.mxu0
        %1505 = vmatprep.mubr.f32.mxu0 0.0
        %1506 = vmatmul.mubr.f32.gmra.mxu0 %v1321
        %v1507 = vpop.f32.mrf.mxu0
        %v1508 = vadd.f32 0.0, %v1507
        %v1509 = vpop.f32.mrf.mxu0
        %1510 = vdwg.mxu0
        %v1511 = vadd.f32 %v1291, %v1393
        %v1512 = vadd.f32 %v1292, %v1398
        %v1513 = vadd.f32 %v1293, %v1403
        %v1514 = vadd.f32 %v1294, %v1408
        %v1515 = vadd.f32 %v1295, %v1413
        %v1516 = vadd.f32 %v1296, %v1418
        %v1517 = vadd.f32 %v1297, %v1423
        %v1518 = vadd.f32 %v1298, %v1428
        %v1519 = vadd.f32 %v1299, %v1433
        %v1520 = vadd.f32 %v1300, %v1438
        %v1521 = vadd.f32 %v1301, %v1443
        %v1522 = vadd.f32 %v1302, %v1448
        %v1523 = vadd.f32 %v1303, %v1453
        %v1524 = vadd.f32 %v1304, %v1458
        %v1525 = vadd.f32 %v1305, %v1463
        %v1526 = vadd.f32 %v1306, %v1468
        %v1527 = vadd.f32 %v1307, %v1473
        %v1528 = vadd.f32 %v1308, %v1478
        %v1529 = vadd.f32 %v1309, %v1483
        %v1530 = vadd.f32 %v1310, %v1488
        %v1531 = vadd.f32 %v1311, %v1493
        %v1532 = vadd.f32 %v1312, %v1498
        %v1533 = vadd.f32 %v1313, %v1503
        %v1534 = vadd.f32 %v1314, %v1508
        %v1535 = vld [vmem:[%s2] sm:$0x1]
        %v1537 = vlaneseq
        %v1538 = vshrl.u32 %v1537, 7
        %v1539 = vsub.s32 0, %v1538
        %v1540 = vrot.slane %v1535, %v1539
        %v1542 = vadd.f32 %v1511, %v1540
        %v1543 = vadd.f32 %v1512, %v1540
        %v1544 = vadd.f32 %v1513, %v1540
        %v1545 = vadd.f32 %v1514, %v1540
        %v1546 = vadd.f32 %v1515, %v1540
        %v1547 = vadd.f32 %v1516, %v1540
        %v1548 = vadd.f32 %v1517, %v1540
        %v1549 = vadd.f32 %v1518, %v1540
        %v1550 = vadd.f32 %v1519, %v1540
        %v1551 = vadd.f32 %v1520, %v1540
        %v1552 = vadd.f32 %v1521, %v1540
        %v1553 = vadd.f32 %v1522, %v1540
        %v1554 = vadd.f32 %v1523, %v1540
        %v1555 = vadd.f32 %v1524, %v1540
        %v1556 = vadd.f32 %v1525, %v1540
        %v1557 = vadd.f32 %v1526, %v1540
        %v1558 = vadd.f32 %v1527, %v1540
        %v1559 = vadd.f32 %v1528, %v1540
        %v1560 = vadd.f32 %v1529, %v1540
        %v1561 = vadd.f32 %v1530, %v1540
        %v1562 = vadd.f32 %v1531, %v1540
        %v1563 = vadd.f32 %v1532, %v1540
        %v1564 = vadd.f32 %v1533, %v1540
        %v1565 = vadd.f32 %v1534, %v1540
        %v1566 = vmax.f32 %v1542, 0.0
        %v1567 = vmax.f32 %v1543, 0.0
        %v1568 = vmax.f32 %v1544, 0.0
        %v1569 = vmax.f32 %v1545, 0.0
        %v1570 = vmax.f32 %v1546, 0.0
        %v1571 = vmax.f32 %v1547, 0.0
        %v1572 = vmax.f32 %v1548, 0.0
        %v1573 = vmax.f32 %v1549, 0.0
        %v1574 = vmax.f32 %v1550, 0.0
        %v1575 = vmax.f32 %v1551, 0.0
        %v1576 = vmax.f32 %v1552, 0.0
        %v1577 = vmax.f32 %v1553, 0.0
        %v1578 = vmax.f32 %v1554, 0.0
        %v1579 = vmax.f32 %v1555, 0.0
        %v1580 = vmax.f32 %v1556, 0.0
        %v1581 = vmax.f32 %v1557, 0.0
        %v1582 = vmax.f32 %v1558, 0.0
        %v1583 = vmax.f32 %v1559, 0.0
        %v1584 = vmax.f32 %v1560, 0.0
        %v1585 = vmax.f32 %v1561, 0.0
        %v1586 = vmax.f32 %v1562, 0.0
        %v1587 = vmax.f32 %v1563, 0.0
        %v1588 = vmax.f32 %v1564, 0.0
        %v1589 = vmax.f32 %v1565, 0.0
        %v1590 = vmax.f32 %v1566, %v1567
        %v1591 = vmax.f32 %v1568, %v1569
        %v1592 = vmax.f32 %v1570, %v1571
        %v1593 = vmax.f32 %v1572, %v1573
        %v1594 = vmax.f32 %v1574, %v1575
        %v1595 = vmax.f32 %v1576, %v1577
        %v1596 = vmax.f32 %v1578, %v1579
        %v1597 = vmax.f32 %v1580, %v1581
        %v1598 = vmax.f32 %v1582, %v1583
        %v1599 = vmax.f32 %v1584, %v1585
        %v1600 = vmax.f32 %v1586, %v1587
        %v1601 = vmax.f32 %v1588, %v1589
        %1614 = vrot.lane.b32.xlu0 %v1590, 64
        %v1615 = vpop.permute.xlu0 %1614
        %1616 = vrot.lane.b32.xlu0 %v1591, 64
        %v1617 = vpop.permute.xlu0 %1616
        %1618 = vrot.lane.b32.xlu0 %v1592, 64
        %v1619 = vpop.permute.xlu0 %1618
        %1620 = vrot.lane.b32.xlu0 %v1593, 64
        %v1621 = vpop.permute.xlu0 %1620
        %1622 = vrot.lane.b32.xlu0 %v1594, 64
        %v1623 = vpop.permute.xlu0 %1622
        %1624 = vrot.lane.b32.xlu0 %v1595, 64
        %v1625 = vpop.permute.xlu0 %1624
        %1626 = vrot.lane.b32.xlu0 %v1596, 64
        %v1627 = vpop.permute.xlu0 %1626
        %1628 = vrot.lane.b32.xlu0 %v1597, 64
        %v1629 = vpop.permute.xlu0 %1628
        %1630 = vrot.lane.b32.xlu0 %v1598, 64
        %v1631 = vpop.permute.xlu0 %1630
        %1632 = vrot.lane.b32.xlu0 %v1599, 64
        %v1633 = vpop.permute.xlu0 %1632
        %1634 = vrot.lane.b32.xlu0 %v1600, 64
        %v1635 = vpop.permute.xlu0 %1634
        %1636 = vrot.lane.b32.xlu0 %v1601, 64
        %v1637 = vpop.permute.xlu0 %1636
        %v1650 = vmax.f32 %v1590, %v1615
        %v1651 = vmax.f32 %v1591, %v1617
        %v1652 = vmax.f32 %v1592, %v1619
        %v1653 = vmax.f32 %v1593, %v1621
        %v1654 = vmax.f32 %v1594, %v1623
        %v1655 = vmax.f32 %v1595, %v1625
        %v1656 = vmax.f32 %v1596, %v1627
        %v1657 = vmax.f32 %v1597, %v1629
        %v1658 = vmax.f32 %v1598, %v1631
        %v1659 = vmax.f32 %v1599, %v1633
        %v1660 = vmax.f32 %v1600, %v1635
        %v1661 = vmax.f32 %v1601, %v1637
        %v1662 = vld [vmem:[%s3] sm:$0xff]
        %v1663 = vld [vmem:[%s3 + $0x8] sm:$0xff]
        %v1664 = vld [vmem:[%s3 + $0x10] sm:$0xff]
        %v1665 = vld [vmem:[%s3 + $0x18] sm:$0xff]
        %v1666 = vld [vmem:[%s3 + $0x20] sm:$0xff]
        %v1667 = vld [vmem:[%s3 + $0x28] sm:$0xff]
        %v1668 = vld [vmem:[%s3 + $0x30] sm:$0xff]
        %v1669 = vld [vmem:[%s3 + $0x38] sm:$0xff]
        %s1670 = scalar_lea.vmem %s3, 64
        %v1671 = vld [vmem:[%s1670] sm:$0xff]
        %v1672 = vld [vmem:[%s1670 + $0x8] sm:$0xff]
        %v1673 = vld [vmem:[%s1670 + $0x10] sm:$0xff]
        %v1674 = vld [vmem:[%s1670 + $0x18] sm:$0xff]
        %v1675 = vld [vmem:[%s1670 + $0x20] sm:$0xff]
        %v1676 = vld [vmem:[%s1670 + $0x28] sm:$0xff]
        %v1677 = vld [vmem:[%s1670 + $0x30] sm:$0xff]
        %v1678 = vld [vmem:[%s1670 + $0x38] sm:$0xff]
        %vm1679 = vcmask 523264
        %v1681 = vsel %vm1679, %v1651, 0
        %v1684 = vsel %vm1679, %v1652, 0
        %v1687 = vsel %vm1679, %v1653, 0
        %v1690 = vsel %vm1679, %v1654, 0
        %v1693 = vsel %vm1679, %v1655, 0
        %v1696 = vsel %vm1679, %v1656, 0
        %v1699 = vsel %vm1679, %v1657, 0
        %v1702 = vsel %vm1679, %v1658, 0
        %1704 = vmatprep.subr.mxu0 0.0
        %1705 = vmatpush1.msra.mxu0 0.0
        %1706 = vmatprep.subr.mxu0 0.0
        %1707 = vmatpush1.msra.mxu0 0.0
        %1708 = vmatprep.subr.mxu0 0.0
        %1709 = vmatpush1.msra.mxu0 0.0
        %1710 = vmatprep.subr.mxu0 0.0
        %1711 = vmatpush1.msra.mxu0 0.0
        %1712 = vmatprep.subr.mxu0 0.0
        %1713 = vmatpush1.msra.mxu0 0.0
        %1714 = vmatprep.subr.mxu0 0.0
        %1715 = vmatpush1.msra.mxu0 0.0
        %1716 = vmatprep.subr.mxu0 0.0
        %1717 = vmatpush1.msra.mxu0 0.0
        %1718 = vmatprep.subr.mxu0 0.0
        %1719 = vmatpush1.msra.mxu0 0.0
        %1720 = vmatprep.subr.mxu0 0.0
        %1721 = vmatpush1.msra.mxu0 %v1678
        %1722 = vmatprep.subr.mxu0 0.0
        %1723 = vmatpush1.msra.mxu0 %v1677
        %1724 = vmatprep.subr.mxu0 0.0
        %1725 = vmatpush1.msra.mxu0 %v1676
        %1726 = vmatprep.subr.mxu0 0.0
        %1727 = vmatpush1.msra.mxu0 %v1675
        %1728 = vmatprep.subr.mxu0 0.0
        %1729 = vmatpush1.msra.mxu0 %v1674
        %1730 = vmatprep.subr.mxu0 0.0
        %1731 = vmatpush1.msra.mxu0 %v1673
        %1732 = vmatprep.subr.mxu0 0.0
        %1733 = vmatpush1.msra.mxu0 %v1672
        %1734 = vmatprep.subr.mxu0 0.0
        %1735 = vmatpush1.msra.mxu0 %v1671
        %1736 = vmatprep.subr.mxu0 0.0
        %1737 = vmatpush2.msra.mxu0 0.0
        %1738 = vmatprep.subr.mxu0 0.0
        %1739 = vmatpush2.msra.mxu0 0.0
        %1740 = vmatprep.subr.mxu0 0.0
        %1741 = vmatpush2.msra.mxu0 0.0
        %1742 = vmatprep.subr.mxu0 0.0
        %1743 = vmatpush2.msra.mxu0 0.0
        %1744 = vmatprep.subr.mxu0 0.0
        %1745 = vmatpush2.msra.mxu0 0.0
        %1746 = vmatprep.subr.mxu0 0.0
        %1747 = vmatpush2.msra.mxu0 0.0
        %1748 = vmatprep.subr.mxu0 0.0
        %1749 = vmatpush2.msra.mxu0 0.0
        %1750 = vmatprep.subr.mxu0 0.0
        %1751 = vmatpush2.msra.mxu0 0.0
        %1752 = vmatprep.subr.mxu0 0.0
        %1753 = vmatpush2.msra.mxu0 0.0
        %1754 = vmatprep.subr.mxu0 0.0
        %1755 = vmatpush2.msra.mxu0 0.0
        %1756 = vmatprep.subr.mxu0 0.0
        %1757 = vmatpush2.msra.mxu0 0.0
        %1758 = vmatprep.subr.mxu0 0.0
        %1759 = vmatpush2.msra.mxu0 0.0
        %1760 = vmatprep.subr.mxu0 0.0
        %1761 = vmatpush2.msra.mxu0 0.0
        %1762 = vmatprep.subr.mxu0 0.0
        %1763 = vmatpush2.msra.mxu0 0.0
        %1764 = vmatprep.subr.mxu0 0.0
        %1765 = vmatpush2.msra.mxu0 0.0
        %1766 = vmatprep.subr.mxu0 0.0
        %1767 = vmatpush2.msra.mxu0 0.0
        %1768 = vmatprep.mubr.f32.mxu0 0.0
        %1769 = vmatmul.mubr.f32.gmra.mxu0 %v1681
        %v1770 = vpop.f32.mrf.mxu0
        %v1771 = vadd.f32 0.0, %v1770
        %v1772 = vpop.f32.mrf.mxu0
        %1773 = vmatprep.mubr.f32.mxu0 0.0
        %1774 = vmatmul.mubr.f32.gmra.mxu0 %v1684
        %v1775 = vpop.f32.mrf.mxu0
        %v1776 = vadd.f32 0.0, %v1775
        %v1777 = vpop.f32.mrf.mxu0
        %1778 = vmatprep.mubr.f32.mxu0 0.0
        %1779 = vmatmul.mubr.f32.gmra.mxu0 %v1687
        %v1780 = vpop.f32.mrf.mxu0
        %v1781 = vadd.f32 0.0, %v1780
        %v1782 = vpop.f32.mrf.mxu0
        %1783 = vmatprep.mubr.f32.mxu0 0.0
        %1784 = vmatmul.mubr.f32.gmra.mxu0 %v1690
        %v1785 = vpop.f32.mrf.mxu0
        %v1786 = vadd.f32 0.0, %v1785
        %v1787 = vpop.f32.mrf.mxu0
        %1788 = vmatprep.mubr.f32.mxu0 0.0
        %1789 = vmatmul.mubr.f32.gmra.mxu0 %v1693
        %v1790 = vpop.f32.mrf.mxu0
        %v1791 = vadd.f32 0.0, %v1790
        %v1792 = vpop.f32.mrf.mxu0
        %1793 = vmatprep.mubr.f32.mxu0 0.0
        %1794 = vmatmul.mubr.f32.gmra.mxu0 %v1696
        %v1795 = vpop.f32.mrf.mxu0
        %v1796 = vadd.f32 0.0, %v1795
        %v1797 = vpop.f32.mrf.mxu0
        %1798 = vmatprep.mubr.f32.mxu0 0.0
        %1799 = vmatmul.mubr.f32.gmra.mxu0 %v1699
        %v1800 = vpop.f32.mrf.mxu0
        %v1801 = vadd.f32 0.0, %v1800
        %v1802 = vpop.f32.mrf.mxu0
        %1803 = vmatprep.mubr.f32.mxu0 0.0
        %1804 = vmatmul.mubr.f32.gmra.mxu0 %v1702
        %v1805 = vpop.f32.mrf.mxu0
        %v1806 = vadd.f32 0.0, %v1805
        %v1807 = vpop.f32.mrf.mxu0
        %1808 = vdwg.mxu0
        %v1810 = vsel %vm1679, %v1650, 0
        %1812 = vmatprep.subr.mxu0 0.0
        %1813 = vmatpush1.msra.mxu0 0.0
        %1814 = vmatprep.subr.mxu0 0.0
        %1815 = vmatpush1.msra.mxu0 0.0
        %1816 = vmatprep.subr.mxu0 0.0
        %1817 = vmatpush1.msra.mxu0 0.0
        %1818 = vmatprep.subr.mxu0 0.0
        %1819 = vmatpush1.msra.mxu0 0.0
        %1820 = vmatprep.subr.mxu0 0.0
        %1821 = vmatpush1.msra.mxu0 0.0
        %1822 = vmatprep.subr.mxu0 0.0
        %1823 = vmatpush1.msra.mxu0 0.0
        %1824 = vmatprep.subr.mxu0 0.0
        %1825 = vmatpush1.msra.mxu0 0.0
        %1826 = vmatprep.subr.mxu0 0.0
        %1827 = vmatpush1.msra.mxu0 0.0
        %1828 = vmatprep.subr.mxu0 0.0
        %1829 = vmatpush1.msra.mxu0 %v1669
        %1830 = vmatprep.subr.mxu0 0.0
        %1831 = vmatpush1.msra.mxu0 %v1668
        %1832 = vmatprep.subr.mxu0 0.0
        %1833 = vmatpush1.msra.mxu0 %v1667
        %1834 = vmatprep.subr.mxu0 0.0
        %1835 = vmatpush1.msra.mxu0 %v1666
        %1836 = vmatprep.subr.mxu0 0.0
        %1837 = vmatpush1.msra.mxu0 %v1665
        %1838 = vmatprep.subr.mxu0 0.0
        %1839 = vmatpush1.msra.mxu0 %v1664
        %1840 = vmatprep.subr.mxu0 0.0
        %1841 = vmatpush1.msra.mxu0 %v1663
        %1842 = vmatprep.subr.mxu0 0.0
        %1843 = vmatpush1.msra.mxu0 %v1662
        %1844 = vmatprep.subr.mxu0 0.0
        %1845 = vmatpush2.msra.mxu0 0.0
        %1846 = vmatprep.subr.mxu0 0.0
        %1847 = vmatpush2.msra.mxu0 0.0
        %1848 = vmatprep.subr.mxu0 0.0
        %1849 = vmatpush2.msra.mxu0 0.0
        %1850 = vmatprep.subr.mxu0 0.0
        %1851 = vmatpush2.msra.mxu0 0.0
        %1852 = vmatprep.subr.mxu0 0.0
        %1853 = vmatpush2.msra.mxu0 0.0
        %1854 = vmatprep.subr.mxu0 0.0
        %1855 = vmatpush2.msra.mxu0 0.0
        %1856 = vmatprep.subr.mxu0 0.0
        %1857 = vmatpush2.msra.mxu0 0.0
        %1858 = vmatprep.subr.mxu0 0.0
        %1859 = vmatpush2.msra.mxu0 0.0
        %1860 = vmatprep.subr.mxu0 0.0
        %1861 = vmatpush2.msra.mxu0 0.0
        %1862 = vmatprep.subr.mxu0 0.0
        %1863 = vmatpush2.msra.mxu0 0.0
        %1864 = vmatprep.subr.mxu0 0.0
        %1865 = vmatpush2.msra.mxu0 0.0
        %1866 = vmatprep.subr.mxu0 0.0
        %1867 = vmatpush2.msra.mxu0 0.0
        %1868 = vmatprep.subr.mxu0 0.0
        %1869 = vmatpush2.msra.mxu0 0.0
        %1870 = vmatprep.subr.mxu0 0.0
        %1871 = vmatpush2.msra.mxu0 0.0
        %1872 = vmatprep.subr.mxu0 0.0
        %1873 = vmatpush2.msra.mxu0 0.0
        %1874 = vmatprep.subr.mxu0 0.0
        %1875 = vmatpush2.msra.mxu0 0.0
        %1876 = vmatprep.mubr.f32.mxu0 0.0
        %1877 = vmatmul.mubr.f32.gmra.mxu0 %v1810
        %v1878 = vpop.f32.mrf.mxu0
        %v1879 = vadd.f32 %v1771, %v1878
        %v1880 = vpop.f32.mrf.mxu0
        %1881 = vmatprep.mubr.f32.mxu0 0.0
        %1882 = vmatmul.mubr.f32.gmra.mxu0 %v1681
        %v1883 = vpop.f32.mrf.mxu0
        %v1884 = vadd.f32 %v1776, %v1883
        %v1885 = vpop.f32.mrf.mxu0
        %1886 = vmatprep.mubr.f32.mxu0 0.0
        %1887 = vmatmul.mubr.f32.gmra.mxu0 %v1684
        %v1888 = vpop.f32.mrf.mxu0
        %v1889 = vadd.f32 %v1781, %v1888
        %v1890 = vpop.f32.mrf.mxu0
        %1891 = vmatprep.mubr.f32.mxu0 0.0
        %1892 = vmatmul.mubr.f32.gmra.mxu0 %v1687
        %v1893 = vpop.f32.mrf.mxu0
        %v1894 = vadd.f32 %v1786, %v1893
        %v1895 = vpop.f32.mrf.mxu0
        %1896 = vmatprep.mubr.f32.mxu0 0.0
        %1897 = vmatmul.mubr.f32.gmra.mxu0 %v1690
        %v1898 = vpop.f32.mrf.mxu0
        %v1899 = vadd.f32 %v1791, %v1898
        %v1900 = vpop.f32.mrf.mxu0
        %1901 = vmatprep.mubr.f32.mxu0 0.0
        %1902 = vmatmul.mubr.f32.gmra.mxu0 %v1693
        %v1903 = vpop.f32.mrf.mxu0
        %v1904 = vadd.f32 %v1796, %v1903
        %v1905 = vpop.f32.mrf.mxu0
        %1906 = vmatprep.mubr.f32.mxu0 0.0
        %1907 = vmatmul.mubr.f32.gmra.mxu0 %v1696
        %v1908 = vpop.f32.mrf.mxu0
        %v1909 = vadd.f32 %v1801, %v1908
        %v1910 = vpop.f32.mrf.mxu0
        %1911 = vmatprep.mubr.f32.mxu0 0.0
        %1912 = vmatmul.mubr.f32.gmra.mxu0 %v1699
        %v1913 = vpop.f32.mrf.mxu0
        %v1914 = vadd.f32 %v1806, %v1913
        %v1915 = vpop.f32.mrf.mxu0
        %1916 = vdwg.mxu0
        %s1917 = scalar_lea.vmem %s3, 128
        %v1918 = vld [vmem:[%s1917] sm:$0xff]
        %v1919 = vld [vmem:[%s1917 + $0x8] sm:$0xff]
        %v1920 = vld [vmem:[%s1917 + $0x10] sm:$0xff]
        %v1921 = vld [vmem:[%s1917 + $0x18] sm:$0xff]
        %v1922 = vld [vmem:[%s1917 + $0x20] sm:$0xff]
        %v1923 = vld [vmem:[%s1917 + $0x28] sm:$0xff]
        %v1924 = vld [vmem:[%s1917 + $0x30] sm:$0xff]
        %v1925 = vld [vmem:[%s1917 + $0x38] sm:$0xff]
        %v1927 = vsel %vm1679, %v1659, 0
        %1929 = vmatprep.subr.mxu0 0.0
        %1930 = vmatpush1.msra.mxu0 0.0
        %1931 = vmatprep.subr.mxu0 0.0
        %1932 = vmatpush1.msra.mxu0 0.0
        %1933 = vmatprep.subr.mxu0 0.0
        %1934 = vmatpush1.msra.mxu0 0.0
        %1935 = vmatprep.subr.mxu0 0.0
        %1936 = vmatpush1.msra.mxu0 0.0
        %1937 = vmatprep.subr.mxu0 0.0
        %1938 = vmatpush1.msra.mxu0 0.0
        %1939 = vmatprep.subr.mxu0 0.0
        %1940 = vmatpush1.msra.mxu0 0.0
        %1941 = vmatprep.subr.mxu0 0.0
        %1942 = vmatpush1.msra.mxu0 0.0
        %1943 = vmatprep.subr.mxu0 0.0
        %1944 = vmatpush1.msra.mxu0 0.0
        %1945 = vmatprep.subr.mxu0 0.0
        %1946 = vmatpush1.msra.mxu0 %v1925
        %1947 = vmatprep.subr.mxu0 0.0
        %1948 = vmatpush1.msra.mxu0 %v1924
        %1949 = vmatprep.subr.mxu0 0.0
        %1950 = vmatpush1.msra.mxu0 %v1923
        %1951 = vmatprep.subr.mxu0 0.0
        %1952 = vmatpush1.msra.mxu0 %v1922
        %1953 = vmatprep.subr.mxu0 0.0
        %1954 = vmatpush1.msra.mxu0 %v1921
        %1955 = vmatprep.subr.mxu0 0.0
        %1956 = vmatpush1.msra.mxu0 %v1920
        %1957 = vmatprep.subr.mxu0 0.0
        %1958 = vmatpush1.msra.mxu0 %v1919
        %1959 = vmatprep.subr.mxu0 0.0
        %1960 = vmatpush1.msra.mxu0 %v1918
        %1961 = vmatprep.subr.mxu0 0.0
        %1962 = vmatpush2.msra.mxu0 0.0
        %1963 = vmatprep.subr.mxu0 0.0
        %1964 = vmatpush2.msra.mxu0 0.0
        %1965 = vmatprep.subr.mxu0 0.0
        %1966 = vmatpush2.msra.mxu0 0.0
        %1967 = vmatprep.subr.mxu0 0.0
        %1968 = vmatpush2.msra.mxu0 0.0
        %1969 = vmatprep.subr.mxu0 0.0
        %1970 = vmatpush2.msra.mxu0 0.0
        %1971 = vmatprep.subr.mxu0 0.0
        %1972 = vmatpush2.msra.mxu0 0.0
        %1973 = vmatprep.subr.mxu0 0.0
        %1974 = vmatpush2.msra.mxu0 0.0
        %1975 = vmatprep.subr.mxu0 0.0
        %1976 = vmatpush2.msra.mxu0 0.0
        %1977 = vmatprep.subr.mxu0 0.0
        %1978 = vmatpush2.msra.mxu0 0.0
        %1979 = vmatprep.subr.mxu0 0.0
        %1980 = vmatpush2.msra.mxu0 0.0
        %1981 = vmatprep.subr.mxu0 0.0
        %1982 = vmatpush2.msra.mxu0 0.0
        %1983 = vmatprep.subr.mxu0 0.0
        %1984 = vmatpush2.msra.mxu0 0.0
        %1985 = vmatprep.subr.mxu0 0.0
        %1986 = vmatpush2.msra.mxu0 0.0
        %1987 = vmatprep.subr.mxu0 0.0
        %1988 = vmatpush2.msra.mxu0 0.0
        %1989 = vmatprep.subr.mxu0 0.0
        %1990 = vmatpush2.msra.mxu0 0.0
        %1991 = vmatprep.subr.mxu0 0.0
        %1992 = vmatpush2.msra.mxu0 0.0
        %1993 = vmatprep.mubr.f32.mxu0 0.0
        %1994 = vmatmul.mubr.f32.gmra.mxu0 %v1684
        %v1995 = vpop.f32.mrf.mxu0
        %v1996 = vadd.f32 0.0, %v1995
        %v1997 = vpop.f32.mrf.mxu0
        %1998 = vmatprep.mubr.f32.mxu0 0.0
        %1999 = vmatmul.mubr.f32.gmra.mxu0 %v1687
        %v2000 = vpop.f32.mrf.mxu0
        %v2001 = vadd.f32 0.0, %v2000
        %v2002 = vpop.f32.mrf.mxu0
        %2003 = vmatprep.mubr.f32.mxu0 0.0
        %2004 = vmatmul.mubr.f32.gmra.mxu0 %v1690
        %v2005 = vpop.f32.mrf.mxu0
        %v2006 = vadd.f32 0.0, %v2005
        %v2007 = vpop.f32.mrf.mxu0
        %2008 = vmatprep.mubr.f32.mxu0 0.0
        %2009 = vmatmul.mubr.f32.gmra.mxu0 %v1693
        %v2010 = vpop.f32.mrf.mxu0
        %v2011 = vadd.f32 0.0, %v2010
        %v2012 = vpop.f32.mrf.mxu0
        %2013 = vmatprep.mubr.f32.mxu0 0.0
        %2014 = vmatmul.mubr.f32.gmra.mxu0 %v1696
        %v2015 = vpop.f32.mrf.mxu0
        %v2016 = vadd.f32 0.0, %v2015
        %v2017 = vpop.f32.mrf.mxu0
        %2018 = vmatprep.mubr.f32.mxu0 0.0
        %2019 = vmatmul.mubr.f32.gmra.mxu0 %v1699
        %v2020 = vpop.f32.mrf.mxu0
        %v2021 = vadd.f32 0.0, %v2020
        %v2022 = vpop.f32.mrf.mxu0
        %2023 = vmatprep.mubr.f32.mxu0 0.0
        %2024 = vmatmul.mubr.f32.gmra.mxu0 %v1702
        %v2025 = vpop.f32.mrf.mxu0
        %v2026 = vadd.f32 0.0, %v2025
        %v2027 = vpop.f32.mrf.mxu0
        %2028 = vmatprep.mubr.f32.mxu0 0.0
        %2029 = vmatmul.mubr.f32.gmra.mxu0 %v1927
        %v2030 = vpop.f32.mrf.mxu0
        %v2031 = vadd.f32 0.0, %v2030
        %v2032 = vpop.f32.mrf.mxu0
        %2033 = vdwg.mxu0
        %v2034 = vadd.f32 %v1879, %v1996
        %v2035 = vadd.f32 %v1884, %v2001
        %v2036 = vadd.f32 %v1889, %v2006
        %v2037 = vadd.f32 %v1894, %v2011
        %v2038 = vadd.f32 %v1899, %v2016
        %v2039 = vadd.f32 %v1904, %v2021
        %v2040 = vadd.f32 %v1909, %v2026
        %v2041 = vadd.f32 %v1914, %v2031
        %s2042 = scalar_lea.vmem %s3, 192
        %v2043 = vld [vmem:[%s2042] sm:$0xff]
        %v2044 = vld [vmem:[%s2042 + $0x8] sm:$0xff]
        %v2045 = vld [vmem:[%s2042 + $0x10] sm:$0xff]
        %v2046 = vld [vmem:[%s2042 + $0x18] sm:$0xff]
        %v2047 = vld [vmem:[%s2042 + $0x20] sm:$0xff]
        %v2048 = vld [vmem:[%s2042 + $0x28] sm:$0xff]
        %v2049 = vld [vmem:[%s2042 + $0x30] sm:$0xff]
        %v2050 = vld [vmem:[%s2042 + $0x38] sm:$0xff]
        %v2052 = vsel %vm1679, %v1660, 0
        %2054 = vmatprep.subr.mxu0 0.0
        %2055 = vmatpush1.msra.mxu0 0.0
        %2056 = vmatprep.subr.mxu0 0.0
        %2057 = vmatpush1.msra.mxu0 0.0
        %2058 = vmatprep.subr.mxu0 0.0
        %2059 = vmatpush1.msra.mxu0 0.0
        %2060 = vmatprep.subr.mxu0 0.0
        %2061 = vmatpush1.msra.mxu0 0.0
        %2062 = vmatprep.subr.mxu0 0.0
        %2063 = vmatpush1.msra.mxu0 0.0
        %2064 = vmatprep.subr.mxu0 0.0
        %2065 = vmatpush1.msra.mxu0 0.0
        %2066 = vmatprep.subr.mxu0 0.0
        %2067 = vmatpush1.msra.mxu0 0.0
        %2068 = vmatprep.subr.mxu0 0.0
        %2069 = vmatpush1.msra.mxu0 0.0
        %2070 = vmatprep.subr.mxu0 0.0
        %2071 = vmatpush1.msra.mxu0 %v2050
        %2072 = vmatprep.subr.mxu0 0.0
        %2073 = vmatpush1.msra.mxu0 %v2049
        %2074 = vmatprep.subr.mxu0 0.0
        %2075 = vmatpush1.msra.mxu0 %v2048
        %2076 = vmatprep.subr.mxu0 0.0
        %2077 = vmatpush1.msra.mxu0 %v2047
        %2078 = vmatprep.subr.mxu0 0.0
        %2079 = vmatpush1.msra.mxu0 %v2046
        %2080 = vmatprep.subr.mxu0 0.0
        %2081 = vmatpush1.msra.mxu0 %v2045
        %2082 = vmatprep.subr.mxu0 0.0
        %2083 = vmatpush1.msra.mxu0 %v2044
        %2084 = vmatprep.subr.mxu0 0.0
        %2085 = vmatpush1.msra.mxu0 %v2043
        %2086 = vmatprep.subr.mxu0 0.0
        %2087 = vmatpush2.msra.mxu0 0.0
        %2088 = vmatprep.subr.mxu0 0.0
        %2089 = vmatpush2.msra.mxu0 0.0
        %2090 = vmatprep.subr.mxu0 0.0
        %2091 = vmatpush2.msra.mxu0 0.0
        %2092 = vmatprep.subr.mxu0 0.0
        %2093 = vmatpush2.msra.mxu0 0.0
        %2094 = vmatprep.subr.mxu0 0.0
        %2095 = vmatpush2.msra.mxu0 0.0
        %2096 = vmatprep.subr.mxu0 0.0
        %2097 = vmatpush2.msra.mxu0 0.0
        %2098 = vmatprep.subr.mxu0 0.0
        %2099 = vmatpush2.msra.mxu0 0.0
        %2100 = vmatprep.subr.mxu0 0.0
        %2101 = vmatpush2.msra.mxu0 0.0
        %2102 = vmatprep.subr.mxu0 0.0
        %2103 = vmatpush2.msra.mxu0 0.0
        %2104 = vmatprep.subr.mxu0 0.0
        %2105 = vmatpush2.msra.mxu0 0.0
        %2106 = vmatprep.subr.mxu0 0.0
        %2107 = vmatpush2.msra.mxu0 0.0
        %2108 = vmatprep.subr.mxu0 0.0
        %2109 = vmatpush2.msra.mxu0 0.0
        %2110 = vmatprep.subr.mxu0 0.0
        %2111 = vmatpush2.msra.mxu0 0.0
        %2112 = vmatprep.subr.mxu0 0.0
        %2113 = vmatpush2.msra.mxu0 0.0
        %2114 = vmatprep.subr.mxu0 0.0
        %2115 = vmatpush2.msra.mxu0 0.0
        %2116 = vmatprep.subr.mxu0 0.0
        %2117 = vmatpush2.msra.mxu0 0.0
        %2118 = vmatprep.mubr.f32.mxu0 0.0
        %2119 = vmatmul.mubr.f32.gmra.mxu0 %v1687
        %v2120 = vpop.f32.mrf.mxu0
        %v2121 = vadd.f32 0.0, %v2120
        %v2122 = vpop.f32.mrf.mxu0
        %2123 = vmatprep.mubr.f32.mxu0 0.0
        %2124 = vmatmul.mubr.f32.gmra.mxu0 %v1690
        %v2125 = vpop.f32.mrf.mxu0
        %v2126 = vadd.f32 0.0, %v2125
        %v2127 = vpop.f32.mrf.mxu0
        %2128 = vmatprep.mubr.f32.mxu0 0.0
        %2129 = vmatmul.mubr.f32.gmra.mxu0 %v1693
        %v2130 = vpop.f32.mrf.mxu0
        %v2131 = vadd.f32 0.0, %v2130
        %v2132 = vpop.f32.mrf.mxu0
        %2133 = vmatprep.mubr.f32.mxu0 0.0
        %2134 = vmatmul.mubr.f32.gmra.mxu0 %v1696
        %v2135 = vpop.f32.mrf.mxu0
        %v2136 = vadd.f32 0.0, %v2135
        %v2137 = vpop.f32.mrf.mxu0
        %2138 = vmatprep.mubr.f32.mxu0 0.0
        %2139 = vmatmul.mubr.f32.gmra.mxu0 %v1699
        %v2140 = vpop.f32.mrf.mxu0
        %v2141 = vadd.f32 0.0, %v2140
        %v2142 = vpop.f32.mrf.mxu0
        %2143 = vmatprep.mubr.f32.mxu0 0.0
        %2144 = vmatmul.mubr.f32.gmra.mxu0 %v1702
        %v2145 = vpop.f32.mrf.mxu0
        %v2146 = vadd.f32 0.0, %v2145
        %v2147 = vpop.f32.mrf.mxu0
        %2148 = vmatprep.mubr.f32.mxu0 0.0
        %2149 = vmatmul.mubr.f32.gmra.mxu0 %v1927
        %v2150 = vpop.f32.mrf.mxu0
        %v2151 = vadd.f32 0.0, %v2150
        %v2152 = vpop.f32.mrf.mxu0
        %2153 = vmatprep.mubr.f32.mxu0 0.0
        %2154 = vmatmul.mubr.f32.gmra.mxu0 %v2052
        %v2155 = vpop.f32.mrf.mxu0
        %v2156 = vadd.f32 0.0, %v2155
        %v2157 = vpop.f32.mrf.mxu0
        %2158 = vdwg.mxu0
        %v2159 = vadd.f32 %v2034, %v2121
        %v2160 = vadd.f32 %v2035, %v2126
        %v2161 = vadd.f32 %v2036, %v2131
        %v2162 = vadd.f32 %v2037, %v2136
        %v2163 = vadd.f32 %v2038, %v2141
        %v2164 = vadd.f32 %v2039, %v2146
        %v2165 = vadd.f32 %v2040, %v2151
        %v2166 = vadd.f32 %v2041, %v2156
        %s2167 = scalar_lea.vmem %s3, 256
        %v2168 = vld [vmem:[%s2167] sm:$0xff]
        %v2169 = vld [vmem:[%s2167 + $0x8] sm:$0xff]
        %v2170 = vld [vmem:[%s2167 + $0x10] sm:$0xff]
        %v2171 = vld [vmem:[%s2167 + $0x18] sm:$0xff]
        %v2172 = vld [vmem:[%s2167 + $0x20] sm:$0xff]
        %v2173 = vld [vmem:[%s2167 + $0x28] sm:$0xff]
        %v2174 = vld [vmem:[%s2167 + $0x30] sm:$0xff]
        %v2175 = vld [vmem:[%s2167 + $0x38] sm:$0xff]
        %v2177 = vsel %vm1679, %v1661, 0
        %2179 = vmatprep.subr.mxu0 0.0
        %2180 = vmatpush1.msra.mxu0 0.0
        %2181 = vmatprep.subr.mxu0 0.0
        %2182 = vmatpush1.msra.mxu0 0.0
        %2183 = vmatprep.subr.mxu0 0.0
        %2184 = vmatpush1.msra.mxu0 0.0
        %2185 = vmatprep.subr.mxu0 0.0
        %2186 = vmatpush1.msra.mxu0 0.0
        %2187 = vmatprep.subr.mxu0 0.0
        %2188 = vmatpush1.msra.mxu0 0.0
        %2189 = vmatprep.subr.mxu0 0.0
        %2190 = vmatpush1.msra.mxu0 0.0
        %2191 = vmatprep.subr.mxu0 0.0
        %2192 = vmatpush1.msra.mxu0 0.0
        %2193 = vmatprep.subr.mxu0 0.0
        %2194 = vmatpush1.msra.mxu0 0.0
        %2195 = vmatprep.subr.mxu0 0.0
        %2196 = vmatpush1.msra.mxu0 %v2175
        %2197 = vmatprep.subr.mxu0 0.0
        %2198 = vmatpush1.msra.mxu0 %v2174
        %2199 = vmatprep.subr.mxu0 0.0
        %2200 = vmatpush1.msra.mxu0 %v2173
        %2201 = vmatprep.subr.mxu0 0.0
        %2202 = vmatpush1.msra.mxu0 %v2172
        %2203 = vmatprep.subr.mxu0 0.0
        %2204 = vmatpush1.msra.mxu0 %v2171
        %2205 = vmatprep.subr.mxu0 0.0
        %2206 = vmatpush1.msra.mxu0 %v2170
        %2207 = vmatprep.subr.mxu0 0.0
        %2208 = vmatpush1.msra.mxu0 %v2169
        %2209 = vmatprep.subr.mxu0 0.0
        %2210 = vmatpush1.msra.mxu0 %v2168
        %2211 = vmatprep.subr.mxu0 0.0
        %2212 = vmatpush2.msra.mxu0 0.0
        %2213 = vmatprep.subr.mxu0 0.0
        %2214 = vmatpush2.msra.mxu0 0.0
        %2215 = vmatprep.subr.mxu0 0.0
        %2216 = vmatpush2.msra.mxu0 0.0
        %2217 = vmatprep.subr.mxu0 0.0
        %2218 = vmatpush2.msra.mxu0 0.0
        %2219 = vmatprep.subr.mxu0 0.0
        %2220 = vmatpush2.msra.mxu0 0.0
        %2221 = vmatprep.subr.mxu0 0.0
        %2222 = vmatpush2.msra.mxu0 0.0
        %2223 = vmatprep.subr.mxu0 0.0
        %2224 = vmatpush2.msra.mxu0 0.0
        %2225 = vmatprep.subr.mxu0 0.0
        %2226 = vmatpush2.msra.mxu0 0.0
        %2227 = vmatprep.subr.mxu0 0.0
        %2228 = vmatpush2.msra.mxu0 0.0
        %2229 = vmatprep.subr.mxu0 0.0
        %2230 = vmatpush2.msra.mxu0 0.0
        %2231 = vmatprep.subr.mxu0 0.0
        %2232 = vmatpush2.msra.mxu0 0.0
        %2233 = vmatprep.subr.mxu0 0.0
        %2234 = vmatpush2.msra.mxu0 0.0
        %2235 = vmatprep.subr.mxu0 0.0
        %2236 = vmatpush2.msra.mxu0 0.0
        %2237 = vmatprep.subr.mxu0 0.0
        %2238 = vmatpush2.msra.mxu0 0.0
        %2239 = vmatprep.subr.mxu0 0.0
        %2240 = vmatpush2.msra.mxu0 0.0
        %2241 = vmatprep.subr.mxu0 0.0
        %2242 = vmatpush2.msra.mxu0 0.0
        %2243 = vmatprep.mubr.f32.mxu0 0.0
        %2244 = vmatmul.mubr.f32.gmra.mxu0 %v1690
        %v2245 = vpop.f32.mrf.mxu0
        %v2246 = vadd.f32 0.0, %v2245
        %v2247 = vpop.f32.mrf.mxu0
        %2248 = vmatprep.mubr.f32.mxu0 0.0
        %2249 = vmatmul.mubr.f32.gmra.mxu0 %v1693
        %v2250 = vpop.f32.mrf.mxu0
        %v2251 = vadd.f32 0.0, %v2250
        %v2252 = vpop.f32.mrf.mxu0
        %2253 = vmatprep.mubr.f32.mxu0 0.0
        %2254 = vmatmul.mubr.f32.gmra.mxu0 %v1696
        %v2255 = vpop.f32.mrf.mxu0
        %v2256 = vadd.f32 0.0, %v2255
        %v2257 = vpop.f32.mrf.mxu0
        %2258 = vmatprep.mubr.f32.mxu0 0.0
        %2259 = vmatmul.mubr.f32.gmra.mxu0 %v1699
        %v2260 = vpop.f32.mrf.mxu0
        %v2261 = vadd.f32 0.0, %v2260
        %v2262 = vpop.f32.mrf.mxu0
        %2263 = vmatprep.mubr.f32.mxu0 0.0
        %2264 = vmatmul.mubr.f32.gmra.mxu0 %v1702
        %v2265 = vpop.f32.mrf.mxu0
        %v2266 = vadd.f32 0.0, %v2265
        %v2267 = vpop.f32.mrf.mxu0
        %2268 = vmatprep.mubr.f32.mxu0 0.0
        %2269 = vmatmul.mubr.f32.gmra.mxu0 %v1927
        %v2270 = vpop.f32.mrf.mxu0
        %v2271 = vadd.f32 0.0, %v2270
        %v2272 = vpop.f32.mrf.mxu0
        %2273 = vmatprep.mubr.f32.mxu0 0.0
        %2274 = vmatmul.mubr.f32.gmra.mxu0 %v2052
        %v2275 = vpop.f32.mrf.mxu0
        %v2276 = vadd.f32 0.0, %v2275
        %v2277 = vpop.f32.mrf.mxu0
        %2278 = vmatprep.mubr.f32.mxu0 0.0
        %2279 = vmatmul.mubr.f32.gmra.mxu0 %v2177
        %v2280 = vpop.f32.mrf.mxu0
        %v2281 = vadd.f32 0.0, %v2280
        %v2282 = vpop.f32.mrf.mxu0
        %2283 = vdwg.mxu0
        %v2284 = vadd.f32 %v2159, %v2246
        %v2285 = vadd.f32 %v2160, %v2251
        %v2286 = vadd.f32 %v2161, %v2256
        %v2287 = vadd.f32 %v2162, %v2261
        %v2288 = vadd.f32 %v2163, %v2266
        %v2289 = vadd.f32 %v2164, %v2271
        %v2290 = vadd.f32 %v2165, %v2276
        %v2291 = vadd.f32 %v2166, %v2281
        %v2292 = vld [vmem:[%s4] sm:$0x1]
        %v2294 = vlaneseq
        %v2295 = vshrl.u32 %v2294, 7
        %v2296 = vsub.s32 0, %v2295
        %v2297 = vrot.slane %v2292, %v2296
        %v2299 = vadd.f32 %v2284, %v2297
        %v2300 = vadd.f32 %v2285, %v2297
        %v2301 = vadd.f32 %v2286, %v2297
        %v2302 = vadd.f32 %v2287, %v2297
        %v2303 = vadd.f32 %v2288, %v2297
        %v2304 = vadd.f32 %v2289, %v2297
        %v2305 = vadd.f32 %v2290, %v2297
        %v2306 = vadd.f32 %v2291, %v2297
        %v2307 = vmax.f32 %v2299, 0.0
        %v2308 = vmax.f32 %v2300, 0.0
        %v2309 = vmax.f32 %v2301, 0.0
        %v2310 = vmax.f32 %v2302, 0.0
        %v2311 = vmax.f32 %v2303, 0.0
        %v2312 = vmax.f32 %v2304, 0.0
        %v2313 = vmax.f32 %v2305, 0.0
        %v2314 = vmax.f32 %v2306, 0.0
        %v2315 = vmax.f32 %v2307, %v2308
        %v2316 = vmax.f32 %v2309, %v2310
        %v2317 = vmax.f32 %v2311, %v2312
        %v2318 = vmax.f32 %v2313, %v2314
        %2323 = vrot.lane.b32.xlu0 %v2315, 64
        %v2324 = vpop.permute.xlu0 %2323
        %2325 = vrot.lane.b32.xlu0 %v2316, 64
        %v2326 = vpop.permute.xlu0 %2325
        %2327 = vrot.lane.b32.xlu0 %v2317, 64
        %v2328 = vpop.permute.xlu0 %2327
        %2329 = vrot.lane.b32.xlu0 %v2318, 64
        %v2330 = vpop.permute.xlu0 %2329
        %v2335 = vmax.f32 %v2315, %v2324
        %v2336 = vmax.f32 %v2316, %v2326
        %v2337 = vmax.f32 %v2317, %v2328
        %v2338 = vmax.f32 %v2318, %v2330
        %v2339 = vld [vmem:[%s6] sm:$0x1]
        %v2340 = vld [vmem:[%s5] sm:$0xff]
        %v2341 = vld [vmem:[%s5 + $0x8] sm:$0xff]
        %v2342 = vld [vmem:[%s5 + $0x10] sm:$0xff]
        %v2343 = vld [vmem:[%s5 + $0x18] sm:$0xff]
        %v2344 = vld [vmem:[%s5 + $0x20] sm:$0xff]
        %v2345 = vld [vmem:[%s5 + $0x28] sm:$0xff]
        %v2346 = vld [vmem:[%s5 + $0x30] sm:$0xff]
        %v2347 = vld [vmem:[%s5 + $0x38] sm:$0xff]
        %v2349 = vsel %vm1679, %v2335, 0
        %2351 = vmatprep.subr.mxu0 0.0
        %2352 = vmatpush1.msra.mxu0 0.0
        %2353 = vmatprep.subr.mxu0 0.0
        %2354 = vmatpush1.msra.mxu0 0.0
        %2355 = vmatprep.subr.mxu0 0.0
        %2356 = vmatpush1.msra.mxu0 0.0
        %2357 = vmatprep.subr.mxu0 0.0
        %2358 = vmatpush1.msra.mxu0 0.0
        %2359 = vmatprep.subr.mxu0 0.0
        %2360 = vmatpush1.msra.mxu0 0.0
        %2361 = vmatprep.subr.mxu0 0.0
        %2362 = vmatpush1.msra.mxu0 0.0
        %2363 = vmatprep.subr.mxu0 0.0
        %2364 = vmatpush1.msra.mxu0 0.0
        %2365 = vmatprep.subr.mxu0 0.0
        %2366 = vmatpush1.msra.mxu0 0.0
        %2367 = vmatprep.subr.mxu0 0.0
        %2368 = vmatpush1.msra.mxu0 %v2347
        %2369 = vmatprep.subr.mxu0 0.0
        %2370 = vmatpush1.msra.mxu0 %v2346
        %2371 = vmatprep.subr.mxu0 0.0
        %2372 = vmatpush1.msra.mxu0 %v2345
        %2373 = vmatprep.subr.mxu0 0.0
        %2374 = vmatpush1.msra.mxu0 %v2344
        %2375 = vmatprep.subr.mxu0 0.0
        %2376 = vmatpush1.msra.mxu0 %v2343
        %2377 = vmatprep.subr.mxu0 0.0
        %2378 = vmatpush1.msra.mxu0 %v2342
        %2379 = vmatprep.subr.mxu0 0.0
        %2380 = vmatpush1.msra.mxu0 %v2341
        %2381 = vmatprep.subr.mxu0 0.0
        %2382 = vmatpush1.msra.mxu0 %v2340
        %2383 = vmatprep.subr.mxu0 0.0
        %2384 = vmatpush2.msra.mxu0 0.0
        %2385 = vmatprep.subr.mxu0 0.0
        %2386 = vmatpush2.msra.mxu0 0.0
        %2387 = vmatprep.subr.mxu0 0.0
        %2388 = vmatpush2.msra.mxu0 0.0
        %2389 = vmatprep.subr.mxu0 0.0
        %2390 = vmatpush2.msra.mxu0 0.0
        %2391 = vmatprep.subr.mxu0 0.0
        %2392 = vmatpush2.msra.mxu0 0.0
        %2393 = vmatprep.subr.mxu0 0.0
        %2394 = vmatpush2.msra.mxu0 0.0
        %2395 = vmatprep.subr.mxu0 0.0
        %2396 = vmatpush2.msra.mxu0 0.0
        %2397 = vmatprep.subr.mxu0 0.0
        %2398 = vmatpush2.msra.mxu0 0.0
        %2399 = vmatprep.subr.mxu0 0.0
        %2400 = vmatpush2.msra.mxu0 0.0
        %2401 = vmatprep.subr.mxu0 0.0
        %2402 = vmatpush2.msra.mxu0 0.0
        %2403 = vmatprep.subr.mxu0 0.0
        %2404 = vmatpush2.msra.mxu0 0.0
        %2405 = vmatprep.subr.mxu0 0.0
        %2406 = vmatpush2.msra.mxu0 0.0
        %2407 = vmatprep.subr.mxu0 0.0
        %2408 = vmatpush2.msra.mxu0 0.0
        %2409 = vmatprep.subr.mxu0 0.0
        %2410 = vmatpush2.msra.mxu0 0.0
        %2411 = vmatprep.subr.mxu0 0.0
        %2412 = vmatpush2.msra.mxu0 0.0
        %2413 = vmatprep.subr.mxu0 0.0
        %2414 = vmatpush2.msra.mxu0 0.0
        %2415 = vmatprep.mubr.f32.mxu0 0.0
        %2416 = vmatmul.mubr.f32.gmra.mxu0 %v2349
        %v2417 = vpop.f32.mrf.mxu0
        %v2418 = vadd.f32 0.0, %v2417
        %v2419 = vpop.f32.mrf.mxu0
        %2420 = vdwg.mxu0
        %v2422 = vlaneseq
        %v2423 = vshrl.u32 %v2422, 7
        %v2424 = vsub.s32 0, %v2423
        %v2425 = vrot.slane %v2339, %v2424
        %v2427 = vadd.f32 %v2425, %v2418
        %s2428 = scalar_lea.vmem %s5, 64
        %v2429 = vld [vmem:[%s2428] sm:$0xff]
        %v2430 = vld [vmem:[%s2428 + $0x8] sm:$0xff]
        %v2431 = vld [vmem:[%s2428 + $0x10] sm:$0xff]
        %v2432 = vld [vmem:[%s2428 + $0x18] sm:$0xff]
        %v2433 = vld [vmem:[%s2428 + $0x20] sm:$0xff]
        %v2434 = vld [vmem:[%s2428 + $0x28] sm:$0xff]
        %v2435 = vld [vmem:[%s2428 + $0x30] sm:$0xff]
        %v2436 = vld [vmem:[%s2428 + $0x38] sm:$0xff]
        %v2438 = vsel %vm1679, %v2336, 0
        %2440 = vmatprep.subr.mxu0 0.0
        %2441 = vmatpush1.msra.mxu0 0.0
        %2442 = vmatprep.subr.mxu0 0.0
        %2443 = vmatpush1.msra.mxu0 0.0
        %2444 = vmatprep.subr.mxu0 0.0
        %2445 = vmatpush1.msra.mxu0 0.0
        %2446 = vmatprep.subr.mxu0 0.0
        %2447 = vmatpush1.msra.mxu0 0.0
        %2448 = vmatprep.subr.mxu0 0.0
        %2449 = vmatpush1.msra.mxu0 0.0
        %2450 = vmatprep.subr.mxu0 0.0
        %2451 = vmatpush1.msra.mxu0 0.0
        %2452 = vmatprep.subr.mxu0 0.0
        %2453 = vmatpush1.msra.mxu0 0.0
        %2454 = vmatprep.subr.mxu0 0.0
        %2455 = vmatpush1.msra.mxu0 0.0
        %2456 = vmatprep.subr.mxu0 0.0
        %2457 = vmatpush1.msra.mxu0 %v2436
        %2458 = vmatprep.subr.mxu0 0.0
        %2459 = vmatpush1.msra.mxu0 %v2435
        %2460 = vmatprep.subr.mxu0 0.0
        %2461 = vmatpush1.msra.mxu0 %v2434
        %2462 = vmatprep.subr.mxu0 0.0
        %2463 = vmatpush1.msra.mxu0 %v2433
        %2464 = vmatprep.subr.mxu0 0.0
        %2465 = vmatpush1.msra.mxu0 %v2432
        %2466 = vmatprep.subr.mxu0 0.0
        %2467 = vmatpush1.msra.mxu0 %v2431
        %2468 = vmatprep.subr.mxu0 0.0
        %2469 = vmatpush1.msra.mxu0 %v2430
        %2470 = vmatprep.subr.mxu0 0.0
        %2471 = vmatpush1.msra.mxu0 %v2429
        %2472 = vmatprep.subr.mxu0 0.0
        %2473 = vmatpush2.msra.mxu0 0.0
        %2474 = vmatprep.subr.mxu0 0.0
        %2475 = vmatpush2.msra.mxu0 0.0
        %2476 = vmatprep.subr.mxu0 0.0
        %2477 = vmatpush2.msra.mxu0 0.0
        %2478 = vmatprep.subr.mxu0 0.0
        %2479 = vmatpush2.msra.mxu0 0.0
        %2480 = vmatprep.subr.mxu0 0.0
        %2481 = vmatpush2.msra.mxu0 0.0
        %2482 = vmatprep.subr.mxu0 0.0
        %2483 = vmatpush2.msra.mxu0 0.0
        %2484 = vmatprep.subr.mxu0 0.0
        %2485 = vmatpush2.msra.mxu0 0.0
        %2486 = vmatprep.subr.mxu0 0.0
        %2487 = vmatpush2.msra.mxu0 0.0
        %2488 = vmatprep.subr.mxu0 0.0
        %2489 = vmatpush2.msra.mxu0 0.0
        %2490 = vmatprep.subr.mxu0 0.0
        %2491 = vmatpush2.msra.mxu0 0.0
        %2492 = vmatprep.subr.mxu0 0.0
        %2493 = vmatpush2.msra.mxu0 0.0
        %2494 = vmatprep.subr.mxu0 0.0
        %2495 = vmatpush2.msra.mxu0 0.0
        %2496 = vmatprep.subr.mxu0 0.0
        %2497 = vmatpush2.msra.mxu0 0.0
        %2498 = vmatprep.subr.mxu0 0.0
        %2499 = vmatpush2.msra.mxu0 0.0
        %2500 = vmatprep.subr.mxu0 0.0
        %2501 = vmatpush2.msra.mxu0 0.0
        %2502 = vmatprep.subr.mxu0 0.0
        %2503 = vmatpush2.msra.mxu0 0.0
        %2504 = vmatprep.mubr.f32.mxu0 0.0
        %2505 = vmatmul.mubr.f32.gmra.mxu0 %v2438
        %v2506 = vpop.f32.mrf.mxu0
        %v2507 = vadd.f32 0.0, %v2506
        %v2508 = vpop.f32.mrf.mxu0
        %2509 = vdwg.mxu0
        %v2510 = vadd.f32 %v2427, %v2507
        %s2511 = scalar_lea.vmem %s5, 128
        %v2512 = vld [vmem:[%s2511] sm:$0xff]
        %v2513 = vld [vmem:[%s2511 + $0x8] sm:$0xff]
        %v2514 = vld [vmem:[%s2511 + $0x10] sm:$0xff]
        %v2515 = vld [vmem:[%s2511 + $0x18] sm:$0xff]
        %v2516 = vld [vmem:[%s2511 + $0x20] sm:$0xff]
        %v2517 = vld [vmem:[%s2511 + $0x28] sm:$0xff]
        %v2518 = vld [vmem:[%s2511 + $0x30] sm:$0xff]
        %v2519 = vld [vmem:[%s2511 + $0x38] sm:$0xff]
        %v2521 = vsel %vm1679, %v2337, 0
        %2523 = vmatprep.subr.mxu0 0.0
        %2524 = vmatpush1.msra.mxu0 0.0
        %2525 = vmatprep.subr.mxu0 0.0
        %2526 = vmatpush1.msra.mxu0 0.0
        %2527 = vmatprep.subr.mxu0 0.0
        %2528 = vmatpush1.msra.mxu0 0.0
        %2529 = vmatprep.subr.mxu0 0.0
        %2530 = vmatpush1.msra.mxu0 0.0
        %2531 = vmatprep.subr.mxu0 0.0
        %2532 = vmatpush1.msra.mxu0 0.0
        %2533 = vmatprep.subr.mxu0 0.0
        %2534 = vmatpush1.msra.mxu0 0.0
        %2535 = vmatprep.subr.mxu0 0.0
        %2536 = vmatpush1.msra.mxu0 0.0
        %2537 = vmatprep.subr.mxu0 0.0
        %2538 = vmatpush1.msra.mxu0 0.0
        %2539 = vmatprep.subr.mxu0 0.0
        %2540 = vmatpush1.msra.mxu0 %v2519
        %2541 = vmatprep.subr.mxu0 0.0
        %2542 = vmatpush1.msra.mxu0 %v2518
        %2543 = vmatprep.subr.mxu0 0.0
        %2544 = vmatpush1.msra.mxu0 %v2517
        %2545 = vmatprep.subr.mxu0 0.0
        %2546 = vmatpush1.msra.mxu0 %v2516
        %2547 = vmatprep.subr.mxu0 0.0
        %2548 = vmatpush1.msra.mxu0 %v2515
        %2549 = vmatprep.subr.mxu0 0.0
        %2550 = vmatpush1.msra.mxu0 %v2514
        %2551 = vmatprep.subr.mxu0 0.0
        %2552 = vmatpush1.msra.mxu0 %v2513
        %2553 = vmatprep.subr.mxu0 0.0
        %2554 = vmatpush1.msra.mxu0 %v2512
        %2555 = vmatprep.subr.mxu0 0.0
        %2556 = vmatpush2.msra.mxu0 0.0
        %2557 = vmatprep.subr.mxu0 0.0
        %2558 = vmatpush2.msra.mxu0 0.0
        %2559 = vmatprep.subr.mxu0 0.0
        %2560 = vmatpush2.msra.mxu0 0.0
        %2561 = vmatprep.subr.mxu0 0.0
        %2562 = vmatpush2.msra.mxu0 0.0
        %2563 = vmatprep.subr.mxu0 0.0
        %2564 = vmatpush2.msra.mxu0 0.0
        %2565 = vmatprep.subr.mxu0 0.0
        %2566 = vmatpush2.msra.mxu0 0.0
        %2567 = vmatprep.subr.mxu0 0.0
        %2568 = vmatpush2.msra.mxu0 0.0
        %2569 = vmatprep.subr.mxu0 0.0
        %2570 = vmatpush2.msra.mxu0 0.0
        %2571 = vmatprep.subr.mxu0 0.0
        %2572 = vmatpush2.msra.mxu0 0.0
        %2573 = vmatprep.subr.mxu0 0.0
        %2574 = vmatpush2.msra.mxu0 0.0
        %2575 = vmatprep.subr.mxu0 0.0
        %2576 = vmatpush2.msra.mxu0 0.0
        %2577 = vmatprep.subr.mxu0 0.0
        %2578 = vmatpush2.msra.mxu0 0.0
        %2579 = vmatprep.subr.mxu0 0.0
        %2580 = vmatpush2.msra.mxu0 0.0
        %2581 = vmatprep.subr.mxu0 0.0
        %2582 = vmatpush2.msra.mxu0 0.0
        %2583 = vmatprep.subr.mxu0 0.0
        %2584 = vmatpush2.msra.mxu0 0.0
        %2585 = vmatprep.subr.mxu0 0.0
        %2586 = vmatpush2.msra.mxu0 0.0
        %2587 = vmatprep.mubr.f32.mxu0 0.0
        %2588 = vmatmul.mubr.f32.gmra.mxu0 %v2521
        %v2589 = vpop.f32.mrf.mxu0
        %v2590 = vadd.f32 0.0, %v2589
        %v2591 = vpop.f32.mrf.mxu0
        %2592 = vdwg.mxu0
        %v2593 = vadd.f32 %v2510, %v2590
        %s2594 = scalar_lea.vmem %s5, 192
        %v2595 = vld [vmem:[%s2594] sm:$0xff]
        %v2596 = vld [vmem:[%s2594 + $0x8] sm:$0xff]
        %v2597 = vld [vmem:[%s2594 + $0x10] sm:$0xff]
        %v2598 = vld [vmem:[%s2594 + $0x18] sm:$0xff]
        %v2599 = vld [vmem:[%s2594 + $0x20] sm:$0xff]
        %v2600 = vld [vmem:[%s2594 + $0x28] sm:$0xff]
        %v2601 = vld [vmem:[%s2594 + $0x30] sm:$0xff]
        %v2602 = vld [vmem:[%s2594 + $0x38] sm:$0xff]
        %v2604 = vsel %vm1679, %v2338, 0
        %2606 = vmatprep.subr.mxu0 0.0
        %2607 = vmatpush1.msra.mxu0 0.0
        %2608 = vmatprep.subr.mxu0 0.0
        %2609 = vmatpush1.msra.mxu0 0.0
        %2610 = vmatprep.subr.mxu0 0.0
        %2611 = vmatpush1.msra.mxu0 0.0
        %2612 = vmatprep.subr.mxu0 0.0
        %2613 = vmatpush1.msra.mxu0 0.0
        %2614 = vmatprep.subr.mxu0 0.0
        %2615 = vmatpush1.msra.mxu0 0.0
        %2616 = vmatprep.subr.mxu0 0.0
        %2617 = vmatpush1.msra.mxu0 0.0
        %2618 = vmatprep.subr.mxu0 0.0
        %2619 = vmatpush1.msra.mxu0 0.0
        %2620 = vmatprep.subr.mxu0 0.0
        %2621 = vmatpush1.msra.mxu0 0.0
        %2622 = vmatprep.subr.mxu0 0.0
        %2623 = vmatpush1.msra.mxu0 %v2602
        %2624 = vmatprep.subr.mxu0 0.0
        %2625 = vmatpush1.msra.mxu0 %v2601
        %2626 = vmatprep.subr.mxu0 0.0
        %2627 = vmatpush1.msra.mxu0 %v2600
        %2628 = vmatprep.subr.mxu0 0.0
        %2629 = vmatpush1.msra.mxu0 %v2599
        %2630 = vmatprep.subr.mxu0 0.0
        %2631 = vmatpush1.msra.mxu0 %v2598
        %2632 = vmatprep.subr.mxu0 0.0
        %2633 = vmatpush1.msra.mxu0 %v2597
        %2634 = vmatprep.subr.mxu0 0.0
        %2635 = vmatpush1.msra.mxu0 %v2596
        %2636 = vmatprep.subr.mxu0 0.0
        %2637 = vmatpush1.msra.mxu0 %v2595
        %2638 = vmatprep.subr.mxu0 0.0
        %2639 = vmatpush2.msra.mxu0 0.0
        %2640 = vmatprep.subr.mxu0 0.0
        %2641 = vmatpush2.msra.mxu0 0.0
        %2642 = vmatprep.subr.mxu0 0.0
        %2643 = vmatpush2.msra.mxu0 0.0
        %2644 = vmatprep.subr.mxu0 0.0
        %2645 = vmatpush2.msra.mxu0 0.0
        %2646 = vmatprep.subr.mxu0 0.0
        %2647 = vmatpush2.msra.mxu0 0.0
        %2648 = vmatprep.subr.mxu0 0.0
        %2649 = vmatpush2.msra.mxu0 0.0
        %2650 = vmatprep.subr.mxu0 0.0
        %2651 = vmatpush2.msra.mxu0 0.0
        %2652 = vmatprep.subr.mxu0 0.0
        %2653 = vmatpush2.msra.mxu0 0.0
        %2654 = vmatprep.subr.mxu0 0.0
        %2655 = vmatpush2.msra.mxu0 0.0
        %2656 = vmatprep.subr.mxu0 0.0
        %2657 = vmatpush2.msra.mxu0 0.0
        %2658 = vmatprep.subr.mxu0 0.0
        %2659 = vmatpush2.msra.mxu0 0.0
        %2660 = vmatprep.subr.mxu0 0.0
        %2661 = vmatpush2.msra.mxu0 0.0
        %2662 = vmatprep.subr.mxu0 0.0
        %2663 = vmatpush2.msra.mxu0 0.0
        %2664 = vmatprep.subr.mxu0 0.0
        %2665 = vmatpush2.msra.mxu0 0.0
        %2666 = vmatprep.subr.mxu0 0.0
        %2667 = vmatpush2.msra.mxu0 0.0
        %2668 = vmatprep.subr.mxu0 0.0
        %2669 = vmatpush2.msra.mxu0 0.0
        %2670 = vmatprep.mubr.f32.mxu0 0.0
        %2671 = vmatmul.mubr.f32.gmra.mxu0 %v2604
        %v2672 = vpop.f32.mrf.mxu0
        %v2673 = vadd.f32 0.0, %v2672
        %v2674 = vpop.f32.mrf.mxu0
        %2675 = vdwg.mxu0
        %v2676 = vadd.f32 %v2593, %v2673
        %v2677 = vmax.f32 %v2676, 0.0
        %v2678 = vld [vmem:[%s7] sm:$0xff]
        %v2679 = vld [vmem:[%s7 + $0x8] sm:$0xff]
        %v2680 = vld [vmem:[%s7 + $0x10] sm:$0xff]
        %v2681 = vld [vmem:[%s7 + $0x18] sm:$0xff]
        %v2682 = vld [vmem:[%s7 + $0x20] sm:$0xff]
        %v2683 = vld [vmem:[%s7 + $0x28] sm:$0xff]
        %v2684 = vld [vmem:[%s7 + $0x30] sm:$0xff]
        %v2685 = vld [vmem:[%s7 + $0x38] sm:$0xff]
        %v2686 = vld [vmem:[%s8] sm:$0x1]
        %v2688 = vlaneseq
        %v2689 = vshrl.u32 %v2688, 7
        %v2690 = vsub.s32 0, %v2689
        %v2691 = vrot.slane %v2686, %v2690
        %v2694 = vsel %vm1679, %v2677, 0
        %2696 = vmatprep.subr.mxu0 0.0
        %2697 = vmatpush1.msra.mxu0 0.0
        %2698 = vmatprep.subr.mxu0 0.0
        %2699 = vmatpush1.msra.mxu0 0.0
        %2700 = vmatprep.subr.mxu0 0.0
        %2701 = vmatpush1.msra.mxu0 0.0
        %2702 = vmatprep.subr.mxu0 0.0
        %2703 = vmatpush1.msra.mxu0 0.0
        %2704 = vmatprep.subr.mxu0 0.0
        %2705 = vmatpush1.msra.mxu0 0.0
        %2706 = vmatprep.subr.mxu0 0.0
        %2707 = vmatpush1.msra.mxu0 0.0
        %2708 = vmatprep.subr.mxu0 0.0
        %2709 = vmatpush1.msra.mxu0 0.0
        %2710 = vmatprep.subr.mxu0 0.0
        %2711 = vmatpush1.msra.mxu0 0.0
        %2712 = vmatprep.subr.mxu0 0.0
        %2713 = vmatpush1.msra.mxu0 %v2685
        %2714 = vmatprep.subr.mxu0 0.0
        %2715 = vmatpush1.msra.mxu0 %v2684
        %2716 = vmatprep.subr.mxu0 0.0
        %2717 = vmatpush1.msra.mxu0 %v2683
        %2718 = vmatprep.subr.mxu0 0.0
        %2719 = vmatpush1.msra.mxu0 %v2682
        %2720 = vmatprep.subr.mxu0 0.0
        %2721 = vmatpush1.msra.mxu0 %v2681
        %2722 = vmatprep.subr.mxu0 0.0
        %2723 = vmatpush1.msra.mxu0 %v2680
        %2724 = vmatprep.subr.mxu0 0.0
        %2725 = vmatpush1.msra.mxu0 %v2679
        %2726 = vmatprep.subr.mxu0 0.0
        %2727 = vmatpush1.msra.mxu0 %v2678
        %2728 = vmatprep.subr.mxu0 0.0
        %2729 = vmatpush2.msra.mxu0 0.0
        %2730 = vmatprep.subr.mxu0 0.0
        %2731 = vmatpush2.msra.mxu0 0.0
        %2732 = vmatprep.subr.mxu0 0.0
        %2733 = vmatpush2.msra.mxu0 0.0
        %2734 = vmatprep.subr.mxu0 0.0
        %2735 = vmatpush2.msra.mxu0 0.0
        %2736 = vmatprep.subr.mxu0 0.0
        %2737 = vmatpush2.msra.mxu0 0.0
        %2738 = vmatprep.subr.mxu0 0.0
        %2739 = vmatpush2.msra.mxu0 0.0
        %2740 = vmatprep.subr.mxu0 0.0
        %2741 = vmatpush2.msra.mxu0 0.0
        %2742 = vmatprep.subr.mxu0 0.0
        %2743 = vmatpush2.msra.mxu0 0.0
        %2744 = vmatprep.subr.mxu0 0.0
        %2745 = vmatpush2.msra.mxu0 0.0
        %2746 = vmatprep.subr.mxu0 0.0
        %2747 = vmatpush2.msra.mxu0 0.0
        %2748 = vmatprep.subr.mxu0 0.0
        %2749 = vmatpush2.msra.mxu0 0.0
        %2750 = vmatprep.subr.mxu0 0.0
        %2751 = vmatpush2.msra.mxu0 0.0
        %2752 = vmatprep.subr.mxu0 0.0
        %2753 = vmatpush2.msra.mxu0 0.0
        %2754 = vmatprep.subr.mxu0 0.0
        %2755 = vmatpush2.msra.mxu0 0.0
        %2756 = vmatprep.subr.mxu0 0.0
        %2757 = vmatpush2.msra.mxu0 0.0
        %2758 = vmatprep.subr.mxu0 0.0
        %2759 = vmatpush2.msra.mxu0 0.0
        %2760 = vmatprep.mubr.f32.mxu0 0.0
        %2761 = vmatmul.mubr.f32.gmra.mxu0 %v2694
        %v2762 = vpop.f32.mrf.mxu0
        %v2763 = vadd.f32 %v2691, %v2762
        %v2764 = vpop.f32.mrf.mxu0
        %2765 = vdwg.mxu0
        %v2766 = vmax.f32 %v2763, 0.0
        %v2767 = vld [vmem:[%s9] sm:$0xff]
        %v2768 = vld [vmem:[%s9 + $0x8] sm:$0xff]
        %v2769 = vld [vmem:[%s9 + $0x10] sm:$0xff]
        %v2770 = vld [vmem:[%s9 + $0x18] sm:$0xff]
        %v2771 = vld [vmem:[%s10] sm:$0x1]
        %v2773 = vlaneseq
        %v2774 = vshrl.u32 %v2773, 7
        %v2775 = vsub.s32 0, %v2774
        %v2776 = vrot.slane %v2771, %v2775
        %vm2778 = vcmask 261120
        %v2780 = vsel %vm2778, %v2766, 0
        %2782 = vmatprep.subr.mxu0 0.0
        %2783 = vmatpush1.msra.mxu0 0.0
        %2784 = vmatprep.subr.mxu0 0.0
        %2785 = vmatpush1.msra.mxu0 0.0
        %2786 = vmatprep.subr.mxu0 0.0
        %2787 = vmatpush1.msra.mxu0 0.0
        %2788 = vmatprep.subr.mxu0 0.0
        %2789 = vmatpush1.msra.mxu0 0.0
        %2790 = vmatprep.subr.mxu0 0.0
        %2791 = vmatpush1.msra.mxu0 0.0
        %2792 = vmatprep.subr.mxu0 0.0
        %2793 = vmatpush1.msra.mxu0 0.0
        %2794 = vmatprep.subr.mxu0 0.0
        %2795 = vmatpush1.msra.mxu0 0.0
        %2796 = vmatprep.subr.mxu0 0.0
        %2797 = vmatpush1.msra.mxu0 0.0
        %2798 = vmatprep.subr.mxu0 0.0
        %2799 = vmatpush1.msra.mxu0 0.0
        %2800 = vmatprep.subr.mxu0 0.0
        %2801 = vmatpush1.msra.mxu0 0.0
        %2802 = vmatprep.subr.mxu0 0.0
        %2803 = vmatpush1.msra.mxu0 0.0
        %2804 = vmatprep.subr.mxu0 0.0
        %2805 = vmatpush1.msra.mxu0 0.0
        %2806 = vmatprep.subr.mxu0 0.0
        %2807 = vmatpush1.msra.mxu0 %v2770
        %2808 = vmatprep.subr.mxu0 0.0
        %2809 = vmatpush1.msra.mxu0 %v2769
        %2810 = vmatprep.subr.mxu0 0.0
        %2811 = vmatpush1.msra.mxu0 %v2768
        %2812 = vmatprep.subr.mxu0 0.0
        %2813 = vmatpush1.msra.mxu0 %v2767
        %2814 = vmatprep.subr.mxu0 0.0
        %2815 = vmatpush2.msra.mxu0 0.0
        %2816 = vmatprep.subr.mxu0 0.0
        %2817 = vmatpush2.msra.mxu0 0.0
        %2818 = vmatprep.subr.mxu0 0.0
        %2819 = vmatpush2.msra.mxu0 0.0
        %2820 = vmatprep.subr.mxu0 0.0
        %2821 = vmatpush2.msra.mxu0 0.0
        %2822 = vmatprep.subr.mxu0 0.0
        %2823 = vmatpush2.msra.mxu0 0.0
        %2824 = vmatprep.subr.mxu0 0.0
        %2825 = vmatpush2.msra.mxu0 0.0
        %2826 = vmatprep.subr.mxu0 0.0
        %2827 = vmatpush2.msra.mxu0 0.0
        %2828 = vmatprep.subr.mxu0 0.0
        %2829 = vmatpush2.msra.mxu0 0.0
        %2830 = vmatprep.subr.mxu0 0.0
        %2831 = vmatpush2.msra.mxu0 0.0
        %2832 = vmatprep.subr.mxu0 0.0
        %2833 = vmatpush2.msra.mxu0 0.0
        %2834 = vmatprep.subr.mxu0 0.0
        %2835 = vmatpush2.msra.mxu0 0.0
        %2836 = vmatprep.subr.mxu0 0.0
        %2837 = vmatpush2.msra.mxu0 0.0
        %2838 = vmatprep.subr.mxu0 0.0
        %2839 = vmatpush2.msra.mxu0 0.0
        %2840 = vmatprep.subr.mxu0 0.0
        %2841 = vmatpush2.msra.mxu0 0.0
        %2842 = vmatprep.subr.mxu0 0.0
        %2843 = vmatpush2.msra.mxu0 0.0
        %2844 = vmatprep.subr.mxu0 0.0
        %2845 = vmatpush2.msra.mxu0 0.0
        %2846 = vmatprep.mubr.f32.mxu0 0.0
        %2847 = vmatmul.mubr.f32.gmra.mxu0 %v2780
        %v2848 = vpop.f32.mrf.mxu0
        %v2849 = vadd.f32 %v2776, %v2848
        %v2850 = vpop.f32.mrf.mxu0
        %2851 = vdwg.mxu0
        %vm2852 = vcmask 80896
        %2853 = vst.msk [vmem:[%s379] sm:$0xff] %vm2852, %v2849
        %s2854 = sand.u32 %s269, 1
        %s2855 = scalar_lea.sflag [#allocation3], %s2854
        %s2856 = sand.u32 %s269, 1
        %s2857 = smul.addr %s2856, 8
        %s2858 = scalar_lea.vmem [#allocation2], %s2857
        // Predicated region
        $region65: #{forward.1} parent=63 // pred_check
          %p2859 = pneg %p279
        $region66: #{forward.1} parent=63 // pred_check_branch
          %2861 = sbr.rel (%p2859) target = $region68
        $region67: #{forward.1} parent=63 // pred_region
          %s2863 = ssub.s32 128, 128
          %2864 = vsyncadd %s2855, %s2863
          %s2865 = smul.addr %s25, 128
          %s2866 = scalar_lea.hbm %s11, %s2865
          %s2868 = sshll.u32 %s2858, 4
          %s2869 = int_to_ptr.vmem [resolvable:$true] %s2868
          %2871 = dma.vmem_to_hbm [thread:$0]  %s2869, 128, %s2866, %s2855
        $region68: #{forward.1} parent=63 // pred_fallthru
          _
      $region64: #{forward.1} parent=5 // pred_fallthru
        _
      %p2872 = scmp.le.s32.totalorder 2, %s20
      // Predicated region
      $region69: #{forward.1} parent=5 // pred_check
        %p2873 = pneg %p2872
      $region70: #{forward.1} parent=5 // pred_check_branch
        %2875 = sbr.rel (%p2873) target = $region72
      $region71: #{forward.1} parent=5 // pred_region
        %s2876 = ssub.s32 %s20, 2
        // Predicated region
        $region73: #{forward.1} parent=71 // pred_check
          %p2877 = pneg %p285
        $region74: #{forward.1} parent=71 // pred_check_branch
          %2879 = sbr.rel (%p2877) target = $region76
        $region75: #{forward.1} parent=71 // pred_region
          %s2880 = sand.u32 %s270, 1
          %s2881 = scalar_lea.sflag [#allocation3], %s2880
          %s2882 = sand.u32 %s270, 1
          %s2883 = smul.addr %s2882, 8
          %s2884 = scalar_lea.vmem [#allocation2], %s2883
          %2885 = dma.done %s2881, 128
        $region76: #{forward.1} parent=71 // pred_fallthru
          _
      $region72: #{forward.1} parent=5 // pred_fallthru
        _
    $region6: #{forward.1} parent=1 // loop_footer
      %s24 = sadd.s32 1, %s20
    $region7: #{forward.1} parent=1 // loop_footer_branch
      %19 = sbr.rel target = $region3
    $region8: #{forward.1} parent=1 // loop_exit
      _
    %2886 = vsyncpa [#allocation3], 1
    %s2887 = scalar_lea.sflag [#allocation3], 1
    %2888 = vsyncpa %s2887, 1

</llo_original>
